<compile_context>
chip_gen: v7x
topology: tpu7x:2x2x1
jax: 0.10.0
libtpu: 0.0.40
codegen_flags: <defaults>
</compile_context>

<pallas_src>
import functools

import jax
import jax.numpy as jnp
from jax import lax
from jax.experimental import pallas as pl
from jax.experimental.pallas import tpu as pltpu


def _lstm_kernel(x2d_ref,    # (Bblk*T, Din)  batch-major flattened input block
                 wih0_ref,   # (Din, 4H)
                 b0_ref,     # (1, 4H)        (= b_ih0 + b_hh0)
                 w_rec_ref,  # (2H, 8H)       [[whh0, wih1], [0, whh1]]
                 b1_ref,     # (1, 4H)        (= b_ih1 + b_hh1)
                 wfc_ref,    # (H, E)
                 bfc_ref,    # (1, E)
                 out_ref,    # (Bblk, E)
                 *, B, T):
    H = w_rec_ref.shape[0] // 2
    G = 4 * H

    def gate_step(gates, c):
        # gate order matches torch.nn.LSTM: i, f, g, o
        i = jax.nn.sigmoid(gates[:, 0 * H:1 * H])
        f = jax.nn.sigmoid(gates[:, 1 * H:2 * H])
        g = jnp.tanh(gates[:, 2 * H:3 * H])
        o = jax.nn.sigmoid(gates[:, 3 * H:4 * H])
        c_new = f * c + i * g
        h_new = o * jnp.tanh(c_new)
        return h_new, c_new

    # ---- hoisted layer-0 input projection: one big MXU matmul ----
    gx0 = (jnp.dot(x2d_ref[...], wih0_ref[...],
                   preferred_element_type=jnp.float32)
           + b0_ref[...])                       # (Bblk*T, 4H), bias folded in
    gx0 = gx0.reshape(B, T, G)                  # row (b, t) of layer-0 x-gates

    w_rec = w_rec_ref[...]
    b1 = b1_ref[...]
    zeros = jnp.zeros((B, H), jnp.float32)

    # ---- wavefront recurrence: layer 0 at step t, layer 1 at step t-1 ----
    # Prologue: layer-0 step 0 (initial h/c are zero -> no recurrent term).
    h0, c0 = gate_step(gx0[:, 0, :], zeros)
    h1, c1 = zeros, zeros

    # Fully unrolled: T is small & static, so every slice below is static and
    # there is exactly one MXU push per timestep.
    for t in range(1, T):
        hcat = jnp.concatenate([h0, h1], axis=1)             # (Bblk, 2H)
        big = jnp.dot(hcat, w_rec,
                      preferred_element_type=jnp.float32)    # (Bblk, 8H)
        gates0 = gx0[:, t, :] + big[:, :G]                   # layer 0, step t
        gates1 = big[:, G:] + b1                             # layer 1, step t-1
        h0_new, c0_new = gate_step(gates0, c0)
        h1, c1 = gate_step(gates1, c1)
        h0, c0 = h0_new, c0_new

    # Epilogue: layer-1 step T-1 consumes the final layer-0 hidden state.
    # Only the right 4H columns of the packed weight are needed here.
    hcat = jnp.concatenate([h0, h1], axis=1)
    gates1 = (jnp.dot(hcat, w_rec[:, G:],
                      preferred_element_type=jnp.float32) + b1)
    h1, _ = gate_step(gates1, c1)

    # ---- fc head: out = h1_last @ Wfc + bfc ----
    out_ref[...] = (jnp.dot(h1, wfc_ref[...],
                            preferred_element_type=jnp.float32)
                    + bfc_ref[...])


def _pack_recurrent_weight(whh0_t, wih1_t, whh1_t):
    """Build the (2H, 8H) block weight [[whh0, wih1], [0, whh1]]."""
    H = whh0_t.shape[0]
    top = jnp.concatenate([whh0_t, wih1_t], axis=1)                  # (H, 8H)
    bot = jnp.concatenate(
        [jnp.zeros((H, 4 * H), whh1_t.dtype), whh1_t], axis=1)       # (H, 8H)
    return jnp.concatenate([top, bot], axis=0)                       # (2H, 8H)


def _auto_block_b(B):
    """One resident batch block keeps the serial recurrence's MXU pushes as
    fat as possible; cap it so very large batches still fit VMEM / pipeline."""
    if B <= 512:
        return B
    for cand in (512, 256, 128, 64, 32, 16, 8):
        if B % cand == 0:
            return cand
    return B


@functools.partial(jax.jit, static_argnames=("block_b",))
def lstm_forward(x, params, block_b=None):
    """x: (B, T, D_in) float32, batch_first (same as the PyTorch module).

    `block_b` (static) shards the batch across the grid; on v7x set it to
    B // 2 to split the recurrence across the two TensorCores.
    """
    B, T, Din = x.shape
    H = params["whh0"].shape[0]
    E = params["wfc"].shape[1]

    if block_b is None:
        block_b = _auto_block_b(B)
    assert B % block_b == 0, "block_b must divide the batch size"
    nb = B // block_b

    # Contiguous reshape only -- no host-side transpose / HBM round-trip.
    x2d = x.reshape(B * T, Din)
    w_rec = _pack_recurrent_weight(params["whh0"], params["wih1"],
                                   params["whh1"])

    kernel = functools.partial(_lstm_kernel, B=block_b, T=T)

    in_specs = [
        # x: batch-major rows, so a batch block is a contiguous row block.
        pl.BlockSpec((block_b * T, Din), lambda i: (i, 0)),
        # Weights / biases: constant block index -> stay resident across grid.
        pl.BlockSpec((Din, 4 * H), lambda i: (0, 0)),
        pl.BlockSpec((1, 4 * H), lambda i: (0, 0)),
        pl.BlockSpec((2 * H, 8 * H), lambda i: (0, 0)),
        pl.BlockSpec((1, 4 * H), lambda i: (0, 0)),
        pl.BlockSpec((H, E), lambda i: (0, 0)),
        pl.BlockSpec((1, E), lambda i: (0, 0)),
    ]
    out_spec = pl.BlockSpec((block_b, E), lambda i: (i, 0))

    return pl.pallas_call(
        kernel,
        out_shape=jax.ShapeDtypeStruct((B, E), jnp.float32),
        grid=(nb,),
        in_specs=in_specs,
        out_specs=out_spec,
        compiler_params=pltpu.CompilerParams(
            dimension_semantics=("parallel",),
            vmem_limit_bytes=32 * 1024 * 1024),
    )(x2d, params["wih0"], params["b0"], w_rec, params["b1"],
      params["wfc"], params["bfc"])


def init_params(key, input_dim, embedding_dim, hidden_dim, num_layers=2):
    """Deterministic init mirroring torch.nn.LSTM / nn.Linear parameter shapes."""
    assert num_layers == 2
    H = hidden_dim
    k = 1.0 / jnp.sqrt(jnp.float32(H))
    keys = jax.random.split(key, 12)

    def u(k_, shape):
        return jax.random.uniform(k_, shape, jnp.float32, -k, k)

    # torch shapes: W_ih (4H, in), W_hh (4H, H), b_ih (4H,), b_hh (4H,)
    wih0 = u(keys[0], (4 * H, input_dim))
    whh0 = u(keys[1], (4 * H, H))
    bih0 = u(keys[2], (4 * H,))
    bhh0 = u(keys[3], (4 * H,))
    wih1 = u(keys[4], (4 * H, H))
    whh1 = u(keys[5], (4 * H, H))
    bih1 = u(keys[6], (4 * H,))
    bhh1 = u(keys[7], (4 * H,))
    # fc: weight (E, H), bias (E,)
    kf = 1.0 / jnp.sqrt(jnp.float32(H))
    wfc = jax.random.uniform(keys[8], (embedding_dim, H), jnp.float32, -kf, kf)
    bfc = jax.random.uniform(keys[9], (embedding_dim,), jnp.float32, -kf, kf)

    # Pre-transpose for `x @ W` inside the kernel; fold the two biases together.
    return {
        "wih0": wih0.T, "whh0": whh0.T, "b0": (bih0 + bhh0)[None, :],
        "wih1": wih1.T, "whh1": whh1.T, "b1": (bih1 + bhh1)[None, :],
        "wfc": wfc.T, "bfc": bfc[None, :],
    }


def lstm_forward_ref(x, params):
    """Pure-JAX reference (same math as torch.nn.LSTM + Linear)."""
    B, T, _ = x.shape
    H = params["whh0"].shape[0]

    def cell(xt, h, c, wih, whh, b):
        gates = xt @ wih + h @ whh + b
        i = jax.nn.sigmoid(gates[:, 0 * H:1 * H])
        f = jax.nn.sigmoid(gates[:, 1 * H:2 * H])
        g = jnp.tanh(gates[:, 2 * H:3 * H])
        o = jax.nn.sigmoid(gates[:, 3 * H:4 * H])
        c = f * c + i * g
        h = o * jnp.tanh(c)
        return h, c

    def run_layer(seq, wih, whh, b):
        def step(carry, xt):
            h, c = carry
            h, c = cell(xt, h, c, wih, whh, b)
            return (h, c), h
        z = jnp.zeros((B, H), jnp.float32)
        (_, _), hs = lax.scan(step, (z, z), jnp.transpose(seq, (1, 0, 2)))
        return jnp.transpose(hs, (1, 0, 2))

    out0 = run_layer(x, params["wih0"], params["whh0"], params["b0"])
    out1 = run_layer(out0, params["wih1"], params["whh1"], params["b1"])
    h_last = out1[:, -1, :]
    return h_last @ params["wfc"] + params["bfc"]


if __name__ == "__main__":
    key = jax.random.PRNGKey(0)

    # Primary config: batch=8 (full f32 sublane), seq=8, input_dim=16,
    # hidden_dim=128 (module default -> lane-aligned gates), embedding_dim=32.
    B, T, Din, H, E = 8, 8, 16, 128, 32
    kx, kp, key = jax.random.split(key, 3)
    x = jax.random.normal(kx, (B, T, Din), jnp.float32)
    params = init_params(kp, input_dim=Din, embedding_dim=E, hidden_dim=H)

    out = lstm_forward(x, params)
    jax.block_until_ready(out)
    ref = lstm_forward_ref(x, params)
    assert out.shape == (B, E)
    assert jnp.allclose(out, ref, atol=1e-4, rtol=1e-4), "mismatch (primary)"

    # Secondary small/odd config to exercise generality (B=2, T=3, H=32).
    B2, T2, Din2, H2, E2 = 2, 3, 16, 32, 32
    kx2, kp2, key = jax.random.split(key, 3)
    x2 = jax.random.normal(kx2, (B2, T2, Din2), jnp.float32)
    params2 = init_params(kp2, input_dim=Din2, embedding_dim=E2, hidden_dim=H2)

    out2 = lstm_forward(x2, params2)
    jax.block_until_ready(out2)
    ref2 = lstm_forward_ref(x2, params2)
    assert out2.shape == (B2, E2)
    assert jnp.allclose(out2, ref2, atol=1e-4, rtol=1e-4), "mismatch (secondary)"

    # Third config: B=16 with an explicit batch block of 8 -> grid=(2,),
    # exercising the parallel batch-grid / megacore path.
    B3, T3, Din3, H3, E3 = 16, 8, 16, 128, 32
    kx3, kp3 = jax.random.split(key)
    x3 = jax.random.normal(kx3, (B3, T3, Din3), jnp.float32)
    params3 = init_params(kp3, input_dim=Din3, embedding_dim=E3, hidden_dim=H3)

    out3 = lstm_forward(x3, params3, block_b=8)
    jax.block_until_ready(out3)
    ref3 = lstm_forward_ref(x3, params3)
    assert out3.shape == (B3, E3)
    assert jnp.allclose(out3, ref3, atol=1e-4, rtol=1e-4), "mismatch (gridded)"

    print("KERNEL_OK")
</pallas_src>

<mosaic_0001>
module attributes {stable_mosaic.version = 11 : i64} {
  func.func @_lstm_kernel(%arg0: i32, %arg1: memref<64x16xf32, #tpu.memory_space<vmem>>, %arg2: memref<16x512xf32, #tpu.memory_space<vmem>>, %arg3: memref<1x512xf32, #tpu.memory_space<vmem>>, %arg4: memref<256x1024xf32, #tpu.memory_space<vmem>>, %arg5: memref<1x512xf32, #tpu.memory_space<vmem>>, %arg6: memref<128x32xf32, #tpu.memory_space<vmem>>, %arg7: memref<1x32xf32, #tpu.memory_space<vmem>>, %arg8: memref<8x32xf32, #tpu.memory_space<vmem>>) attributes {dimension_semantics = [#tpu.dimension_semantics<parallel>], iteration_bounds = array<i64: 1>, scalar_prefetch = 0 : i64, scratch_operands = 0 : i64, tpu.core_type = #tpu.core_type<tc>, window_params = [{transform_indices = @transform_0, window_bounds = array<i64: 64, 16>}, {pipeline_mode = #tpu.pipeline_mode<synchronous>, transform_indices = @transform_1, window_bounds = array<i64: 16, 512>}, {pipeline_mode = #tpu.pipeline_mode<synchronous>, transform_indices = @transform_2, window_bounds = array<i64: 1, 512>}, {pipeline_mode = #tpu.pipeline_mode<synchronous>, transform_indices = @transform_3, window_bounds = array<i64: 256, 1024>}, {pipeline_mode = #tpu.pipeline_mode<synchronous>, transform_indices = @transform_4, window_bounds = array<i64: 1, 512>}, {pipeline_mode = #tpu.pipeline_mode<synchronous>, transform_indices = @transform_5, window_bounds = array<i64: 128, 32>}, {pipeline_mode = #tpu.pipeline_mode<synchronous>, transform_indices = @transform_6, window_bounds = array<i64: 1, 32>}, {transform_indices = @transform_7, window_bounds = array<i64: 8, 32>}]} {
    %c0 = arith.constant 0 : index
    %c0_0 = arith.constant 0 : index
    %0 = vector.load %arg1[%c0, %c0_0] : memref<64x16xf32, #tpu.memory_space<vmem>>, vector<64x16xf32>
    %c0_1 = arith.constant 0 : index
    %c0_2 = arith.constant 0 : index
    %1 = vector.load %arg2[%c0_1, %c0_2] : memref<16x512xf32, #tpu.memory_space<vmem>>, vector<16x512xf32>
    %cst = arith.constant dense<0.000000e+00> : vector<64x512xf32>
    %2 = tpu.matmul %0, %1, %cst {dimension_numbers = #tpu.dot_dimension_numbers<[1], [0], [0], [1], [0, 0, 1, 1], [], []>} : vector<64x16xf32>, vector<16x512xf32>, vector<64x512xf32> -> vector<64x512xf32>
    %c0_3 = arith.constant 0 : index
    %c0_4 = arith.constant 0 : index
    %3 = vector.load %arg3[%c0_3, %c0_4] : memref<1x512xf32, #tpu.memory_space<vmem>>, vector<1x512xf32>
    %4 = vector.broadcast %3 : vector<1x512xf32> to vector<64x512xf32>
    %5 = arith.addf %2, %4 : vector<64x512xf32>
    %6 = vector.shape_cast %5 : vector<64x512xf32> to vector<8x8x512xf32>
    %c0_5 = arith.constant 0 : index
    %c0_6 = arith.constant 0 : index
    %7 = vector.load %arg4[%c0_5, %c0_6] : memref<256x1024xf32, #tpu.memory_space<vmem>>, vector<256x1024xf32>
    %c0_7 = arith.constant 0 : index
    %c0_8 = arith.constant 0 : index
    %8 = vector.load %arg5[%c0_7, %c0_8] : memref<1x512xf32, #tpu.memory_space<vmem>>, vector<1x512xf32>
    %cst_9 = arith.constant 0.000000e+00 : f32
    %9 = vector.broadcast %cst_9 : f32 to vector<8x128xf32>
    %10 = vector.extract_strided_slice %6 {offsets = [0, 0, 0], sizes = [8, 1, 512], strides = [1, 1, 1]} : vector<8x8x512xf32> to vector<8x1x512xf32>
    %11 = vector.shape_cast %10 : vector<8x1x512xf32> to vector<8x512xf32>
    %12 = vector.extract_strided_slice %11 {offsets = [0, 0], sizes = [8, 128], strides = [1, 1]} : vector<8x512xf32> to vector<8x128xf32>
    %13 = arith.negf %12 : vector<8x128xf32>
    %14 = math.exp %13 : vector<8x128xf32>
    %cst_10 = arith.constant 1.000000e+00 : f32
    %15 = vector.broadcast %cst_10 : f32 to vector<8x128xf32>
    %16 = arith.addf %15, %14 : vector<8x128xf32>
    %17 = arith.divf %15, %16 : vector<8x128xf32>
    %18 = vector.extract_strided_slice %11 {offsets = [0, 128], sizes = [8, 128], strides = [1, 1]} : vector<8x512xf32> to vector<8x128xf32>
    %19 = arith.negf %18 : vector<8x128xf32>
    %20 = math.exp %19 : vector<8x128xf32>
    %cst_11 = arith.constant 1.000000e+00 : f32
    %21 = vector.broadcast %cst_11 : f32 to vector<8x128xf32>
    %22 = arith.addf %21, %20 : vector<8x128xf32>
    %23 = arith.divf %21, %22 : vector<8x128xf32>
    %24 = vector.extract_strided_slice %11 {offsets = [0, 256], sizes = [8, 128], strides = [1, 1]} : vector<8x512xf32> to vector<8x128xf32>
    %25 = math.tanh %24 : vector<8x128xf32>
    %26 = vector.extract_strided_slice %11 {offsets = [0, 384], sizes = [8, 128], strides = [1, 1]} : vector<8x512xf32> to vector<8x128xf32>
    %27 = arith.negf %26 : vector<8x128xf32>
    %28 = math.exp %27 : vector<8x128xf32>
    %cst_12 = arith.constant 1.000000e+00 : f32
    %29 = vector.broadcast %cst_12 : f32 to vector<8x128xf32>
    %30 = arith.addf %29, %28 : vector<8x128xf32>
    %31 = arith.divf %29, %30 : vector<8x128xf32>
    %32 = arith.mulf %23, %9 : vector<8x128xf32>
    %33 = arith.mulf %17, %25 : vector<8x128xf32>
    %34 = arith.addf %32, %33 : vector<8x128xf32>
    %35 = math.tanh %34 : vector<8x128xf32>
    %36 = arith.mulf %31, %35 : vector<8x128xf32>
    %37 = tpu.concatenate %36, %9 in 1 : vector<8x128xf32>, vector<8x128xf32> -> vector<8x256xf32>
    %cst_13 = arith.constant dense<0.000000e+00> : vector<8x1024xf32>
    %38 = tpu.matmul %37, %7, %cst_13 {dimension_numbers = #tpu.dot_dimension_numbers<[1], [0], [0], [1], [0, 0, 1, 1], [], []>} : vector<8x256xf32>, vector<256x1024xf32>, vector<8x1024xf32> -> vector<8x1024xf32>
    %39 = vector.extract_strided_slice %6 {offsets = [0, 1, 0], sizes = [8, 1, 512], strides = [1, 1, 1]} : vector<8x8x512xf32> to vector<8x1x512xf32>
    %40 = vector.shape_cast %39 : vector<8x1x512xf32> to vector<8x512xf32>
    %41 = vector.extract_strided_slice %38 {offsets = [0, 0], sizes = [8, 512], strides = [1, 1]} : vector<8x1024xf32> to vector<8x512xf32>
    %42 = arith.addf %40, %41 : vector<8x512xf32>
    %43 = vector.extract_strided_slice %38 {offsets = [0, 512], sizes = [8, 512], strides = [1, 1]} : vector<8x1024xf32> to vector<8x512xf32>
    %44 = vector.broadcast %8 : vector<1x512xf32> to vector<8x512xf32>
    %45 = arith.addf %43, %44 : vector<8x512xf32>
    %46 = vector.extract_strided_slice %42 {offsets = [0, 0], sizes = [8, 128], strides = [1, 1]} : vector<8x512xf32> to vector<8x128xf32>
    %47 = arith.negf %46 : vector<8x128xf32>
    %48 = math.exp %47 : vector<8x128xf32>
    %cst_14 = arith.constant 1.000000e+00 : f32
    %49 = vector.broadcast %cst_14 : f32 to vector<8x128xf32>
    %50 = arith.addf %49, %48 : vector<8x128xf32>
    %51 = arith.divf %49, %50 : vector<8x128xf32>
    %52 = vector.extract_strided_slice %42 {offsets = [0, 128], sizes = [8, 128], strides = [1, 1]} : vector<8x512xf32> to vector<8x128xf32>
    %53 = arith.negf %52 : vector<8x128xf32>
    %54 = math.exp %53 : vector<8x128xf32>
    %cst_15 = arith.constant 1.000000e+00 : f32
    %55 = vector.broadcast %cst_15 : f32 to vector<8x128xf32>
    %56 = arith.addf %55, %54 : vector<8x128xf32>
    %57 = arith.divf %55, %56 : vector<8x128xf32>
    %58 = vector.extract_strided_slice %42 {offsets = [0, 256], sizes = [8, 128], strides = [1, 1]} : vector<8x512xf32> to vector<8x128xf32>
    %59 = math.tanh %58 : vector<8x128xf32>
    %60 = vector.extract_strided_slice %42 {offsets = [0, 384], sizes = [8, 128], strides = [1, 1]} : vector<8x512xf32> to vector<8x128xf32>
    %61 = arith.negf %60 : vector<8x128xf32>
    %62 = math.exp %61 : vector<8x128xf32>
    %cst_16 = arith.constant 1.000000e+00 : f32
    %63 = vector.broadcast %cst_16 : f32 to vector<8x128xf32>
    %64 = arith.addf %63, %62 : vector<8x128xf32>
    %65 = arith.divf %63, %64 : vector<8x128xf32>
    %66 = arith.mulf %57, %34 : vector<8x128xf32>
    %67 = arith.mulf %51, %59 : vector<8x128xf32>
    %68 = arith.addf %66, %67 : vector<8x128xf32>
    %69 = math.tanh %68 : vector<8x128xf32>
    %70 = arith.mulf %65, %69 : vector<8x128xf32>
    %71 = vector.extract_strided_slice %45 {offsets = [0, 0], sizes = [8, 128], strides = [1, 1]} : vector<8x512xf32> to vector<8x128xf32>
    %72 = arith.negf %71 : vector<8x128xf32>
    %73 = math.exp %72 : vector<8x128xf32>
    %cst_17 = arith.constant 1.000000e+00 : f32
    %74 = vector.broadcast %cst_17 : f32 to vector<8x128xf32>
    %75 = arith.addf %74, %73 : vector<8x128xf32>
    %76 = arith.divf %74, %75 : vector<8x128xf32>
    %77 = vector.extract_strided_slice %45 {offsets = [0, 128], sizes = [8, 128], strides = [1, 1]} : vector<8x512xf32> to vector<8x128xf32>
    %78 = arith.negf %77 : vector<8x128xf32>
    %79 = math.exp %78 : vector<8x128xf32>
    %cst_18 = arith.constant 1.000000e+00 : f32
    %80 = vector.broadcast %cst_18 : f32 to vector<8x128xf32>
    %81 = arith.addf %80, %79 : vector<8x128xf32>
    %82 = arith.divf %80, %81 : vector<8x128xf32>
    %83 = vector.extract_strided_slice %45 {offsets = [0, 256], sizes = [8, 128], strides = [1, 1]} : vector<8x512xf32> to vector<8x128xf32>
    %84 = math.tanh %83 : vector<8x128xf32>
    %85 = vector.extract_strided_slice %45 {offsets = [0, 384], sizes = [8, 128], strides = [1, 1]} : vector<8x512xf32> to vector<8x128xf32>
    %86 = arith.negf %85 : vector<8x128xf32>
    %87 = math.exp %86 : vector<8x128xf32>
    %cst_19 = arith.constant 1.000000e+00 : f32
    %88 = vector.broadcast %cst_19 : f32 to vector<8x128xf32>
    %89 = arith.addf %88, %87 : vector<8x128xf32>
    %90 = arith.divf %88, %89 : vector<8x128xf32>
    %91 = arith.mulf %82, %9 : vector<8x128xf32>
    %92 = arith.mulf %76, %84 : vector<8x128xf32>
    %93 = arith.addf %91, %92 : vector<8x128xf32>
    %94 = math.tanh %93 : vector<8x128xf32>
    %95 = arith.mulf %90, %94 : vector<8x128xf32>
    %96 = tpu.concatenate %70, %95 in 1 : vector<8x128xf32>, vector<8x128xf32> -> vector<8x256xf32>
    %cst_20 = arith.constant dense<0.000000e+00> : vector<8x1024xf32>
    %97 = tpu.matmul %96, %7, %cst_20 {dimension_numbers = #tpu.dot_dimension_numbers<[1], [0], [0], [1], [0, 0, 1, 1], [], []>} : vector<8x256xf32>, vector<256x1024xf32>, vector<8x1024xf32> -> vector<8x1024xf32>
    %98 = vector.extract_strided_slice %6 {offsets = [0, 2, 0], sizes = [8, 1, 512], strides = [1, 1, 1]} : vector<8x8x512xf32> to vector<8x1x512xf32>
    %99 = vector.shape_cast %98 : vector<8x1x512xf32> to vector<8x512xf32>
    %100 = vector.extract_strided_slice %97 {offsets = [0, 0], sizes = [8, 512], strides = [1, 1]} : vector<8x1024xf32> to vector<8x512xf32>
    %101 = arith.addf %99, %100 : vector<8x512xf32>
    %102 = vector.extract_strided_slice %97 {offsets = [0, 512], sizes = [8, 512], strides = [1, 1]} : vector<8x1024xf32> to vector<8x512xf32>
    %103 = vector.broadcast %8 : vector<1x512xf32> to vector<8x512xf32>
    %104 = arith.addf %102, %103 : vector<8x512xf32>
    %105 = vector.extract_strided_slice %101 {offsets = [0, 0], sizes = [8, 128], strides = [1, 1]} : vector<8x512xf32> to vector<8x128xf32>
    %106 = arith.negf %105 : vector<8x128xf32>
    %107 = math.exp %106 : vector<8x128xf32>
    %cst_21 = arith.constant 1.000000e+00 : f32
    %108 = vector.broadcast %cst_21 : f32 to vector<8x128xf32>
    %109 = arith.addf %108, %107 : vector<8x128xf32>
    %110 = arith.divf %108, %109 : vector<8x128xf32>
    %111 = vector.extract_strided_slice %101 {offsets = [0, 128], sizes = [8, 128], strides = [1, 1]} : vector<8x512xf32> to vector<8x128xf32>
    %112 = arith.negf %111 : vector<8x128xf32>
    %113 = math.exp %112 : vector<8x128xf32>
    %cst_22 = arith.constant 1.000000e+00 : f32
    %114 = vector.broadcast %cst_22 : f32 to vector<8x128xf32>
    %115 = arith.addf %114, %113 : vector<8x128xf32>
    %116 = arith.divf %114, %115 : vector<8x128xf32>
    %117 = vector.extract_strided_slice %101 {offsets = [0, 256], sizes = [8, 128], strides = [1, 1]} : vector<8x512xf32> to vector<8x128xf32>
    %118 = math.tanh %117 : vector<8x128xf32>
    %119 = vector.extract_strided_slice %101 {offsets = [0, 384], sizes = [8, 128], strides = [1, 1]} : vector<8x512xf32> to vector<8x128xf32>
    %120 = arith.negf %119 : vector<8x128xf32>
    %121 = math.exp %120 : vector<8x128xf32>
    %cst_23 = arith.constant 1.000000e+00 : f32
    %122 = vector.broadcast %cst_23 : f32 to vector<8x128xf32>
    %123 = arith.addf %122, %121 : vector<8x128xf32>
    %124 = arith.divf %122, %123 : vector<8x128xf32>
    %125 = arith.mulf %116, %68 : vector<8x128xf32>
    %126 = arith.mulf %110, %118 : vector<8x128xf32>
    %127 = arith.addf %125, %126 : vector<8x128xf32>
    %128 = math.tanh %127 : vector<8x128xf32>
    %129 = arith.mulf %124, %128 : vector<8x128xf32>
    %130 = vector.extract_strided_slice %104 {offsets = [0, 0], sizes = [8, 128], strides = [1, 1]} : vector<8x512xf32> to vector<8x128xf32>
    %131 = arith.negf %130 : vector<8x128xf32>
    %132 = math.exp %131 : vector<8x128xf32>
    %cst_24 = arith.constant 1.000000e+00 : f32
    %133 = vector.broadcast %cst_24 : f32 to vector<8x128xf32>
    %134 = arith.addf %133, %132 : vector<8x128xf32>
    %135 = arith.divf %133, %134 : vector<8x128xf32>
    %136 = vector.extract_strided_slice %104 {offsets = [0, 128], sizes = [8, 128], strides = [1, 1]} : vector<8x512xf32> to vector<8x128xf32>
    %137 = arith.negf %136 : vector<8x128xf32>
    %138 = math.exp %137 : vector<8x128xf32>
    %cst_25 = arith.constant 1.000000e+00 : f32
    %139 = vector.broadcast %cst_25 : f32 to vector<8x128xf32>
    %140 = arith.addf %139, %138 : vector<8x128xf32>
    %141 = arith.divf %139, %140 : vector<8x128xf32>
    %142 = vector.extract_strided_slice %104 {offsets = [0, 256], sizes = [8, 128], strides = [1, 1]} : vector<8x512xf32> to vector<8x128xf32>
    %143 = math.tanh %142 : vector<8x128xf32>
    %144 = vector.extract_strided_slice %104 {offsets = [0, 384], sizes = [8, 128], strides = [1, 1]} : vector<8x512xf32> to vector<8x128xf32>
    %145 = arith.negf %144 : vector<8x128xf32>
    %146 = math.exp %145 : vector<8x128xf32>
    %cst_26 = arith.constant 1.000000e+00 : f32
    %147 = vector.broadcast %cst_26 : f32 to vector<8x128xf32>
    %148 = arith.addf %147, %146 : vector<8x128xf32>
    %149 = arith.divf %147, %148 : vector<8x128xf32>
    %150 = arith.mulf %141, %93 : vector<8x128xf32>
    %151 = arith.mulf %135, %143 : vector<8x128xf32>
    %152 = arith.addf %150, %151 : vector<8x128xf32>
    %153 = math.tanh %152 : vector<8x128xf32>
    %154 = arith.mulf %149, %153 : vector<8x128xf32>
    %155 = tpu.concatenate %129, %154 in 1 : vector<8x128xf32>, vector<8x128xf32> -> vector<8x256xf32>
    %cst_27 = arith.constant dense<0.000000e+00> : vector<8x1024xf32>
    %156 = tpu.matmul %155, %7, %cst_27 {dimension_numbers = #tpu.dot_dimension_numbers<[1], [0], [0], [1], [0, 0, 1, 1], [], []>} : vector<8x256xf32>, vector<256x1024xf32>, vector<8x1024xf32> -> vector<8x1024xf32>
    %157 = vector.extract_strided_slice %6 {offsets = [0, 3, 0], sizes = [8, 1, 512], strides = [1, 1, 1]} : vector<8x8x512xf32> to vector<8x1x512xf32>
    %158 = vector.shape_cast %157 : vector<8x1x512xf32> to vector<8x512xf32>
    %159 = vector.extract_strided_slice %156 {offsets = [0, 0], sizes = [8, 512], strides = [1, 1]} : vector<8x1024xf32> to vector<8x512xf32>
    %160 = arith.addf %158, %159 : vector<8x512xf32>
    %161 = vector.extract_strided_slice %156 {offsets = [0, 512], sizes = [8, 512], strides = [1, 1]} : vector<8x1024xf32> to vector<8x512xf32>
    %162 = vector.broadcast %8 : vector<1x512xf32> to vector<8x512xf32>
    %163 = arith.addf %161, %162 : vector<8x512xf32>
    %164 = vector.extract_strided_slice %160 {offsets = [0, 0], sizes = [8, 128], strides = [1, 1]} : vector<8x512xf32> to vector<8x128xf32>
    %165 = arith.negf %164 : vector<8x128xf32>
    %166 = math.exp %165 : vector<8x128xf32>
    %cst_28 = arith.constant 1.000000e+00 : f32
    %167 = vector.broadcast %cst_28 : f32 to vector<8x128xf32>
    %168 = arith.addf %167, %166 : vector<8x128xf32>
    %169 = arith.divf %167, %168 : vector<8x128xf32>
    %170 = vector.extract_strided_slice %160 {offsets = [0, 128], sizes = [8, 128], strides = [1, 1]} : vector<8x512xf32> to vector<8x128xf32>
    %171 = arith.negf %170 : vector<8x128xf32>
    %172 = math.exp %171 : vector<8x128xf32>
    %cst_29 = arith.constant 1.000000e+00 : f32
    %173 = vector.broadcast %cst_29 : f32 to vector<8x128xf32>
    %174 = arith.addf %173, %172 : vector<8x128xf32>
    %175 = arith.divf %173, %174 : vector<8x128xf32>
    %176 = vector.extract_strided_slice %160 {offsets = [0, 256], sizes = [8, 128], strides = [1, 1]} : vector<8x512xf32> to vector<8x128xf32>
    %177 = math.tanh %176 : vector<8x128xf32>
    %178 = vector.extract_strided_slice %160 {offsets = [0, 384], sizes = [8, 128], strides = [1, 1]} : vector<8x512xf32> to vector<8x128xf32>
    %179 = arith.negf %178 : vector<8x128xf32>
    %180 = math.exp %179 : vector<8x128xf32>
    %cst_30 = arith.constant 1.000000e+00 : f32
    %181 = vector.broadcast %cst_30 : f32 to vector<8x128xf32>
    %182 = arith.addf %181, %180 : vector<8x128xf32>
    %183 = arith.divf %181, %182 : vector<8x128xf32>
    %184 = arith.mulf %175, %127 : vector<8x128xf32>
    %185 = arith.mulf %169, %177 : vector<8x128xf32>
    %186 = arith.addf %184, %185 : vector<8x128xf32>
    %187 = math.tanh %186 : vector<8x128xf32>
    %188 = arith.mulf %183, %187 : vector<8x128xf32>
    %189 = vector.extract_strided_slice %163 {offsets = [0, 0], sizes = [8, 128], strides = [1, 1]} : vector<8x512xf32> to vector<8x128xf32>
    %190 = arith.negf %189 : vector<8x128xf32>
    %191 = math.exp %190 : vector<8x128xf32>
    %cst_31 = arith.constant 1.000000e+00 : f32
    %192 = vector.broadcast %cst_31 : f32 to vector<8x128xf32>
    %193 = arith.addf %192, %191 : vector<8x128xf32>
    %194 = arith.divf %192, %193 : vector<8x128xf32>
    %195 = vector.extract_strided_slice %163 {offsets = [0, 128], sizes = [8, 128], strides = [1, 1]} : vector<8x512xf32> to vector<8x128xf32>
    %196 = arith.negf %195 : vector<8x128xf32>
    %197 = math.exp %196 : vector<8x128xf32>
    %cst_32 = arith.constant 1.000000e+00 : f32
    %198 = vector.broadcast %cst_32 : f32 to vector<8x128xf32>
    %199 = arith.addf %198, %197 : vector<8x128xf32>
    %200 = arith.divf %198, %199 : vector<8x128xf32>
    %201 = vector.extract_strided_slice %163 {offsets = [0, 256], sizes = [8, 128], strides = [1, 1]} : vector<8x512xf32> to vector<8x128xf32>
    %202 = math.tanh %201 : vector<8x128xf32>
    %203 = vector.extract_strided_slice %163 {offsets = [0, 384], sizes = [8, 128], strides = [1, 1]} : vector<8x512xf32> to vector<8x128xf32>
    %204 = arith.negf %203 : vector<8x128xf32>
    %205 = math.exp %204 : vector<8x128xf32>
    %cst_33 = arith.constant 1.000000e+00 : f32
    %206 = vector.broadcast %cst_33 : f32 to vector<8x128xf32>
    %207 = arith.addf %206, %205 : vector<8x128xf32>
    %208 = arith.divf %206, %207 : vector<8x128xf32>
    %209 = arith.mulf %200, %152 : vector<8x128xf32>
    %210 = arith.mulf %194, %202 : vector<8x128xf32>
    %211 = arith.addf %209, %210 : vector<8x128xf32>
    %212 = math.tanh %211 : vector<8x128xf32>
    %213 = arith.mulf %208, %212 : vector<8x128xf32>
    %214 = tpu.concatenate %188, %213 in 1 : vector<8x128xf32>, vector<8x128xf32> -> vector<8x256xf32>
    %cst_34 = arith.constant dense<0.000000e+00> : vector<8x1024xf32>
    %215 = tpu.matmul %214, %7, %cst_34 {dimension_numbers = #tpu.dot_dimension_numbers<[1], [0], [0], [1], [0, 0, 1, 1], [], []>} : vector<8x256xf32>, vector<256x1024xf32>, vector<8x1024xf32> -> vector<8x1024xf32>
    %216 = vector.extract_strided_slice %6 {offsets = [0, 4, 0], sizes = [8, 1, 512], strides = [1, 1, 1]} : vector<8x8x512xf32> to vector<8x1x512xf32>
    %217 = vector.shape_cast %216 : vector<8x1x512xf32> to vector<8x512xf32>
    %218 = vector.extract_strided_slice %215 {offsets = [0, 0], sizes = [8, 512], strides = [1, 1]} : vector<8x1024xf32> to vector<8x512xf32>
    %219 = arith.addf %217, %218 : vector<8x512xf32>
    %220 = vector.extract_strided_slice %215 {offsets = [0, 512], sizes = [8, 512], strides = [1, 1]} : vector<8x1024xf32> to vector<8x512xf32>
    %221 = vector.broadcast %8 : vector<1x512xf32> to vector<8x512xf32>
    %222 = arith.addf %220, %221 : vector<8x512xf32>
    %223 = vector.extract_strided_slice %219 {offsets = [0, 0], sizes = [8, 128], strides = [1, 1]} : vector<8x512xf32> to vector<8x128xf32>
    %224 = arith.negf %223 : vector<8x128xf32>
    %225 = math.exp %224 : vector<8x128xf32>
    %cst_35 = arith.constant 1.000000e+00 : f32
    %226 = vector.broadcast %cst_35 : f32 to vector<8x128xf32>
    %227 = arith.addf %226, %225 : vector<8x128xf32>
    %228 = arith.divf %226, %227 : vector<8x128xf32>
    %229 = vector.extract_strided_slice %219 {offsets = [0, 128], sizes = [8, 128], strides = [1, 1]} : vector<8x512xf32> to vector<8x128xf32>
    %230 = arith.negf %229 : vector<8x128xf32>
    %231 = math.exp %230 : vector<8x128xf32>
    %cst_36 = arith.constant 1.000000e+00 : f32
    %232 = vector.broadcast %cst_36 : f32 to vector<8x128xf32>
    %233 = arith.addf %232, %231 : vector<8x128xf32>
    %234 = arith.divf %232, %233 : vector<8x128xf32>
    %235 = vector.extract_strided_slice %219 {offsets = [0, 256], sizes = [8, 128], strides = [1, 1]} : vector<8x512xf32> to vector<8x128xf32>
    %236 = math.tanh %235 : vector<8x128xf32>
    %237 = vector.extract_strided_slice %219 {offsets = [0, 384], sizes = [8, 128], strides = [1, 1]} : vector<8x512xf32> to vector<8x128xf32>
    %238 = arith.negf %237 : vector<8x128xf32>
    %239 = math.exp %238 : vector<8x128xf32>
    %cst_37 = arith.constant 1.000000e+00 : f32
    %240 = vector.broadcast %cst_37 : f32 to vector<8x128xf32>
    %241 = arith.addf %240, %239 : vector<8x128xf32>
    %242 = arith.divf %240, %241 : vector<8x128xf32>
    %243 = arith.mulf %234, %186 : vector<8x128xf32>
    %244 = arith.mulf %228, %236 : vector<8x128xf32>
    %245 = arith.addf %243, %244 : vector<8x128xf32>
    %246 = math.tanh %245 : vector<8x128xf32>
    %247 = arith.mulf %242, %246 : vector<8x128xf32>
    %248 = vector.extract_strided_slice %222 {offsets = [0, 0], sizes = [8, 128], strides = [1, 1]} : vector<8x512xf32> to vector<8x128xf32>
    %249 = arith.negf %248 : vector<8x128xf32>
    %250 = math.exp %249 : vector<8x128xf32>
    %cst_38 = arith.constant 1.000000e+00 : f32
    %251 = vector.broadcast %cst_38 : f32 to vector<8x128xf32>
    %252 = arith.addf %251, %250 : vector<8x128xf32>
    %253 = arith.divf %251, %252 : vector<8x128xf32>
    %254 = vector.extract_strided_slice %222 {offsets = [0, 128], sizes = [8, 128], strides = [1, 1]} : vector<8x512xf32> to vector<8x128xf32>
    %255 = arith.negf %254 : vector<8x128xf32>
    %256 = math.exp %255 : vector<8x128xf32>
    %cst_39 = arith.constant 1.000000e+00 : f32
    %257 = vector.broadcast %cst_39 : f32 to vector<8x128xf32>
    %258 = arith.addf %257, %256 : vector<8x128xf32>
    %259 = arith.divf %257, %258 : vector<8x128xf32>
    %260 = vector.extract_strided_slice %222 {offsets = [0, 256], sizes = [8, 128], strides = [1, 1]} : vector<8x512xf32> to vector<8x128xf32>
    %261 = math.tanh %260 : vector<8x128xf32>
    %262 = vector.extract_strided_slice %222 {offsets = [0, 384], sizes = [8, 128], strides = [1, 1]} : vector<8x512xf32> to vector<8x128xf32>
    %263 = arith.negf %262 : vector<8x128xf32>
    %264 = math.exp %263 : vector<8x128xf32>
    %cst_40 = arith.constant 1.000000e+00 : f32
    %265 = vector.broadcast %cst_40 : f32 to vector<8x128xf32>
    %266 = arith.addf %265, %264 : vector<8x128xf32>
    %267 = arith.divf %265, %266 : vector<8x128xf32>
    %268 = arith.mulf %259, %211 : vector<8x128xf32>
    %269 = arith.mulf %253, %261 : vector<8x128xf32>
    %270 = arith.addf %268, %269 : vector<8x128xf32>
    %271 = math.tanh %270 : vector<8x128xf32>
    %272 = arith.mulf %267, %271 : vector<8x128xf32>
    %273 = tpu.concatenate %247, %272 in 1 : vector<8x128xf32>, vector<8x128xf32> -> vector<8x256xf32>
    %cst_41 = arith.constant dense<0.000000e+00> : vector<8x1024xf32>
    %274 = tpu.matmul %273, %7, %cst_41 {dimension_numbers = #tpu.dot_dimension_numbers<[1], [0], [0], [1], [0, 0, 1, 1], [], []>} : vector<8x256xf32>, vector<256x1024xf32>, vector<8x1024xf32> -> vector<8x1024xf32>
    %275 = vector.extract_strided_slice %6 {offsets = [0, 5, 0], sizes = [8, 1, 512], strides = [1, 1, 1]} : vector<8x8x512xf32> to vector<8x1x512xf32>
    %276 = vector.shape_cast %275 : vector<8x1x512xf32> to vector<8x512xf32>
    %277 = vector.extract_strided_slice %274 {offsets = [0, 0], sizes = [8, 512], strides = [1, 1]} : vector<8x1024xf32> to vector<8x512xf32>
    %278 = arith.addf %276, %277 : vector<8x512xf32>
    %279 = vector.extract_strided_slice %274 {offsets = [0, 512], sizes = [8, 512], strides = [1, 1]} : vector<8x1024xf32> to vector<8x512xf32>
    %280 = vector.broadcast %8 : vector<1x512xf32> to vector<8x512xf32>
    %281 = arith.addf %279, %280 : vector<8x512xf32>
    %282 = vector.extract_strided_slice %278 {offsets = [0, 0], sizes = [8, 128], strides = [1, 1]} : vector<8x512xf32> to vector<8x128xf32>
    %283 = arith.negf %282 : vector<8x128xf32>
    %284 = math.exp %283 : vector<8x128xf32>
    %cst_42 = arith.constant 1.000000e+00 : f32
    %285 = vector.broadcast %cst_42 : f32 to vector<8x128xf32>
    %286 = arith.addf %285, %284 : vector<8x128xf32>
    %287 = arith.divf %285, %286 : vector<8x128xf32>
    %288 = vector.extract_strided_slice %278 {offsets = [0, 128], sizes = [8, 128], strides = [1, 1]} : vector<8x512xf32> to vector<8x128xf32>
    %289 = arith.negf %288 : vector<8x128xf32>
    %290 = math.exp %289 : vector<8x128xf32>
    %cst_43 = arith.constant 1.000000e+00 : f32
    %291 = vector.broadcast %cst_43 : f32 to vector<8x128xf32>
    %292 = arith.addf %291, %290 : vector<8x128xf32>
    %293 = arith.divf %291, %292 : vector<8x128xf32>
    %294 = vector.extract_strided_slice %278 {offsets = [0, 256], sizes = [8, 128], strides = [1, 1]} : vector<8x512xf32> to vector<8x128xf32>
    %295 = math.tanh %294 : vector<8x128xf32>
    %296 = vector.extract_strided_slice %278 {offsets = [0, 384], sizes = [8, 128], strides = [1, 1]} : vector<8x512xf32> to vector<8x128xf32>
    %297 = arith.negf %296 : vector<8x128xf32>
    %298 = math.exp %297 : vector<8x128xf32>
    %cst_44 = arith.constant 1.000000e+00 : f32
    %299 = vector.broadcast %cst_44 : f32 to vector<8x128xf32>
    %300 = arith.addf %299, %298 : vector<8x128xf32>
    %301 = arith.divf %299, %300 : vector<8x128xf32>
    %302 = arith.mulf %293, %245 : vector<8x128xf32>
    %303 = arith.mulf %287, %295 : vector<8x128xf32>
    %304 = arith.addf %302, %303 : vector<8x128xf32>
    %305 = math.tanh %304 : vector<8x128xf32>
    %306 = arith.mulf %301, %305 : vector<8x128xf32>
    %307 = vector.extract_strided_slice %281 {offsets = [0, 0], sizes = [8, 128], strides = [1, 1]} : vector<8x512xf32> to vector<8x128xf32>
    %308 = arith.negf %307 : vector<8x128xf32>
    %309 = math.exp %308 : vector<8x128xf32>
    %cst_45 = arith.constant 1.000000e+00 : f32
    %310 = vector.broadcast %cst_45 : f32 to vector<8x128xf32>
    %311 = arith.addf %310, %309 : vector<8x128xf32>
    %312 = arith.divf %310, %311 : vector<8x128xf32>
    %313 = vector.extract_strided_slice %281 {offsets = [0, 128], sizes = [8, 128], strides = [1, 1]} : vector<8x512xf32> to vector<8x128xf32>
    %314 = arith.negf %313 : vector<8x128xf32>
    %315 = math.exp %314 : vector<8x128xf32>
    %cst_46 = arith.constant 1.000000e+00 : f32
    %316 = vector.broadcast %cst_46 : f32 to vector<8x128xf32>
    %317 = arith.addf %316, %315 : vector<8x128xf32>
    %318 = arith.divf %316, %317 : vector<8x128xf32>
    %319 = vector.extract_strided_slice %281 {offsets = [0, 256], sizes = [8, 128], strides = [1, 1]} : vector<8x512xf32> to vector<8x128xf32>
    %320 = math.tanh %319 : vector<8x128xf32>
    %321 = vector.extract_strided_slice %281 {offsets = [0, 384], sizes = [8, 128], strides = [1, 1]} : vector<8x512xf32> to vector<8x128xf32>
    %322 = arith.negf %321 : vector<8x128xf32>
    %323 = math.exp %322 : vector<8x128xf32>
    %cst_47 = arith.constant 1.000000e+00 : f32
    %324 = vector.broadcast %cst_47 : f32 to vector<8x128xf32>
    %325 = arith.addf %324, %323 : vector<8x128xf32>
    %326 = arith.divf %324, %325 : vector<8x128xf32>
    %327 = arith.mulf %318, %270 : vector<8x128xf32>
    %328 = arith.mulf %312, %320 : vector<8x128xf32>
    %329 = arith.addf %327, %328 : vector<8x128xf32>
    %330 = math.tanh %329 : vector<8x128xf32>
    %331 = arith.mulf %326, %330 : vector<8x128xf32>
    %332 = tpu.concatenate %306, %331 in 1 : vector<8x128xf32>, vector<8x128xf32> -> vector<8x256xf32>
    %cst_48 = arith.constant dense<0.000000e+00> : vector<8x1024xf32>
    %333 = tpu.matmul %332, %7, %cst_48 {dimension_numbers = #tpu.dot_dimension_numbers<[1], [0], [0], [1], [0, 0, 1, 1], [], []>} : vector<8x256xf32>, vector<256x1024xf32>, vector<8x1024xf32> -> vector<8x1024xf32>
    %334 = vector.extract_strided_slice %6 {offsets = [0, 6, 0], sizes = [8, 1, 512], strides = [1, 1, 1]} : vector<8x8x512xf32> to vector<8x1x512xf32>
    %335 = vector.shape_cast %334 : vector<8x1x512xf32> to vector<8x512xf32>
    %336 = vector.extract_strided_slice %333 {offsets = [0, 0], sizes = [8, 512], strides = [1, 1]} : vector<8x1024xf32> to vector<8x512xf32>
    %337 = arith.addf %335, %336 : vector<8x512xf32>
    %338 = vector.extract_strided_slice %333 {offsets = [0, 512], sizes = [8, 512], strides = [1, 1]} : vector<8x1024xf32> to vector<8x512xf32>
    %339 = vector.broadcast %8 : vector<1x512xf32> to vector<8x512xf32>
    %340 = arith.addf %338, %339 : vector<8x512xf32>
    %341 = vector.extract_strided_slice %337 {offsets = [0, 0], sizes = [8, 128], strides = [1, 1]} : vector<8x512xf32> to vector<8x128xf32>
    %342 = arith.negf %341 : vector<8x128xf32>
    %343 = math.exp %342 : vector<8x128xf32>
    %cst_49 = arith.constant 1.000000e+00 : f32
    %344 = vector.broadcast %cst_49 : f32 to vector<8x128xf32>
    %345 = arith.addf %344, %343 : vector<8x128xf32>
    %346 = arith.divf %344, %345 : vector<8x128xf32>
    %347 = vector.extract_strided_slice %337 {offsets = [0, 128], sizes = [8, 128], strides = [1, 1]} : vector<8x512xf32> to vector<8x128xf32>
    %348 = arith.negf %347 : vector<8x128xf32>
    %349 = math.exp %348 : vector<8x128xf32>
    %cst_50 = arith.constant 1.000000e+00 : f32
    %350 = vector.broadcast %cst_50 : f32 to vector<8x128xf32>
    %351 = arith.addf %350, %349 : vector<8x128xf32>
    %352 = arith.divf %350, %351 : vector<8x128xf32>
    %353 = vector.extract_strided_slice %337 {offsets = [0, 256], sizes = [8, 128], strides = [1, 1]} : vector<8x512xf32> to vector<8x128xf32>
    %354 = math.tanh %353 : vector<8x128xf32>
    %355 = vector.extract_strided_slice %337 {offsets = [0, 384], sizes = [8, 128], strides = [1, 1]} : vector<8x512xf32> to vector<8x128xf32>
    %356 = arith.negf %355 : vector<8x128xf32>
    %357 = math.exp %356 : vector<8x128xf32>
    %cst_51 = arith.constant 1.000000e+00 : f32
    %358 = vector.broadcast %cst_51 : f32 to vector<8x128xf32>
    %359 = arith.addf %358, %357 : vector<8x128xf32>
    %360 = arith.divf %358, %359 : vector<8x128xf32>
    %361 = arith.mulf %352, %304 : vector<8x128xf32>
    %362 = arith.mulf %346, %354 : vector<8x128xf32>
    %363 = arith.addf %361, %362 : vector<8x128xf32>
    %364 = math.tanh %363 : vector<8x128xf32>
    %365 = arith.mulf %360, %364 : vector<8x128xf32>
    %366 = vector.extract_strided_slice %340 {offsets = [0, 0], sizes = [8, 128], strides = [1, 1]} : vector<8x512xf32> to vector<8x128xf32>
    %367 = arith.negf %366 : vector<8x128xf32>
    %368 = math.exp %367 : vector<8x128xf32>
    %cst_52 = arith.constant 1.000000e+00 : f32
    %369 = vector.broadcast %cst_52 : f32 to vector<8x128xf32>
    %370 = arith.addf %369, %368 : vector<8x128xf32>
    %371 = arith.divf %369, %370 : vector<8x128xf32>
    %372 = vector.extract_strided_slice %340 {offsets = [0, 128], sizes = [8, 128], strides = [1, 1]} : vector<8x512xf32> to vector<8x128xf32>
    %373 = arith.negf %372 : vector<8x128xf32>
    %374 = math.exp %373 : vector<8x128xf32>
    %cst_53 = arith.constant 1.000000e+00 : f32
    %375 = vector.broadcast %cst_53 : f32 to vector<8x128xf32>
    %376 = arith.addf %375, %374 : vector<8x128xf32>
    %377 = arith.divf %375, %376 : vector<8x128xf32>
    %378 = vector.extract_strided_slice %340 {offsets = [0, 256], sizes = [8, 128], strides = [1, 1]} : vector<8x512xf32> to vector<8x128xf32>
    %379 = math.tanh %378 : vector<8x128xf32>
    %380 = vector.extract_strided_slice %340 {offsets = [0, 384], sizes = [8, 128], strides = [1, 1]} : vector<8x512xf32> to vector<8x128xf32>
    %381 = arith.negf %380 : vector<8x128xf32>
    %382 = math.exp %381 : vector<8x128xf32>
    %cst_54 = arith.constant 1.000000e+00 : f32
    %383 = vector.broadcast %cst_54 : f32 to vector<8x128xf32>
    %384 = arith.addf %383, %382 : vector<8x128xf32>
    %385 = arith.divf %383, %384 : vector<8x128xf32>
    %386 = arith.mulf %377, %329 : vector<8x128xf32>
    %387 = arith.mulf %371, %379 : vector<8x128xf32>
    %388 = arith.addf %386, %387 : vector<8x128xf32>
    %389 = math.tanh %388 : vector<8x128xf32>
    %390 = arith.mulf %385, %389 : vector<8x128xf32>
    %391 = tpu.concatenate %365, %390 in 1 : vector<8x128xf32>, vector<8x128xf32> -> vector<8x256xf32>
    %cst_55 = arith.constant dense<0.000000e+00> : vector<8x1024xf32>
    %392 = tpu.matmul %391, %7, %cst_55 {dimension_numbers = #tpu.dot_dimension_numbers<[1], [0], [0], [1], [0, 0, 1, 1], [], []>} : vector<8x256xf32>, vector<256x1024xf32>, vector<8x1024xf32> -> vector<8x1024xf32>
    %393 = vector.extract_strided_slice %6 {offsets = [0, 7, 0], sizes = [8, 1, 512], strides = [1, 1, 1]} : vector<8x8x512xf32> to vector<8x1x512xf32>
    %394 = vector.shape_cast %393 : vector<8x1x512xf32> to vector<8x512xf32>
    %395 = vector.extract_strided_slice %392 {offsets = [0, 0], sizes = [8, 512], strides = [1, 1]} : vector<8x1024xf32> to vector<8x512xf32>
    %396 = arith.addf %394, %395 : vector<8x512xf32>
    %397 = vector.extract_strided_slice %392 {offsets = [0, 512], sizes = [8, 512], strides = [1, 1]} : vector<8x1024xf32> to vector<8x512xf32>
    %398 = vector.broadcast %8 : vector<1x512xf32> to vector<8x512xf32>
    %399 = arith.addf %397, %398 : vector<8x512xf32>
    %400 = vector.extract_strided_slice %396 {offsets = [0, 0], sizes = [8, 128], strides = [1, 1]} : vector<8x512xf32> to vector<8x128xf32>
    %401 = arith.negf %400 : vector<8x128xf32>
    %402 = math.exp %401 : vector<8x128xf32>
    %cst_56 = arith.constant 1.000000e+00 : f32
    %403 = vector.broadcast %cst_56 : f32 to vector<8x128xf32>
    %404 = arith.addf %403, %402 : vector<8x128xf32>
    %405 = arith.divf %403, %404 : vector<8x128xf32>
    %406 = vector.extract_strided_slice %396 {offsets = [0, 128], sizes = [8, 128], strides = [1, 1]} : vector<8x512xf32> to vector<8x128xf32>
    %407 = arith.negf %406 : vector<8x128xf32>
    %408 = math.exp %407 : vector<8x128xf32>
    %cst_57 = arith.constant 1.000000e+00 : f32
    %409 = vector.broadcast %cst_57 : f32 to vector<8x128xf32>
    %410 = arith.addf %409, %408 : vector<8x128xf32>
    %411 = arith.divf %409, %410 : vector<8x128xf32>
    %412 = vector.extract_strided_slice %396 {offsets = [0, 256], sizes = [8, 128], strides = [1, 1]} : vector<8x512xf32> to vector<8x128xf32>
    %413 = math.tanh %412 : vector<8x128xf32>
    %414 = vector.extract_strided_slice %396 {offsets = [0, 384], sizes = [8, 128], strides = [1, 1]} : vector<8x512xf32> to vector<8x128xf32>
    %415 = arith.negf %414 : vector<8x128xf32>
    %416 = math.exp %415 : vector<8x128xf32>
    %cst_58 = arith.constant 1.000000e+00 : f32
    %417 = vector.broadcast %cst_58 : f32 to vector<8x128xf32>
    %418 = arith.addf %417, %416 : vector<8x128xf32>
    %419 = arith.divf %417, %418 : vector<8x128xf32>
    %420 = arith.mulf %411, %363 : vector<8x128xf32>
    %421 = arith.mulf %405, %413 : vector<8x128xf32>
    %422 = arith.addf %420, %421 : vector<8x128xf32>
    %423 = math.tanh %422 : vector<8x128xf32>
    %424 = arith.mulf %419, %423 : vector<8x128xf32>
    %425 = vector.extract_strided_slice %399 {offsets = [0, 0], sizes = [8, 128], strides = [1, 1]} : vector<8x512xf32> to vector<8x128xf32>
    %426 = arith.negf %425 : vector<8x128xf32>
    %427 = math.exp %426 : vector<8x128xf32>
    %cst_59 = arith.constant 1.000000e+00 : f32
    %428 = vector.broadcast %cst_59 : f32 to vector<8x128xf32>
    %429 = arith.addf %428, %427 : vector<8x128xf32>
    %430 = arith.divf %428, %429 : vector<8x128xf32>
    %431 = vector.extract_strided_slice %399 {offsets = [0, 128], sizes = [8, 128], strides = [1, 1]} : vector<8x512xf32> to vector<8x128xf32>
    %432 = arith.negf %431 : vector<8x128xf32>
    %433 = math.exp %432 : vector<8x128xf32>
    %cst_60 = arith.constant 1.000000e+00 : f32
    %434 = vector.broadcast %cst_60 : f32 to vector<8x128xf32>
    %435 = arith.addf %434, %433 : vector<8x128xf32>
    %436 = arith.divf %434, %435 : vector<8x128xf32>
    %437 = vector.extract_strided_slice %399 {offsets = [0, 256], sizes = [8, 128], strides = [1, 1]} : vector<8x512xf32> to vector<8x128xf32>
    %438 = math.tanh %437 : vector<8x128xf32>
    %439 = vector.extract_strided_slice %399 {offsets = [0, 384], sizes = [8, 128], strides = [1, 1]} : vector<8x512xf32> to vector<8x128xf32>
    %440 = arith.negf %439 : vector<8x128xf32>
    %441 = math.exp %440 : vector<8x128xf32>
    %cst_61 = arith.constant 1.000000e+00 : f32
    %442 = vector.broadcast %cst_61 : f32 to vector<8x128xf32>
    %443 = arith.addf %442, %441 : vector<8x128xf32>
    %444 = arith.divf %442, %443 : vector<8x128xf32>
    %445 = arith.mulf %436, %388 : vector<8x128xf32>
    %446 = arith.mulf %430, %438 : vector<8x128xf32>
    %447 = arith.addf %445, %446 : vector<8x128xf32>
    %448 = math.tanh %447 : vector<8x128xf32>
    %449 = arith.mulf %444, %448 : vector<8x128xf32>
    %450 = tpu.concatenate %424, %449 in 1 : vector<8x128xf32>, vector<8x128xf32> -> vector<8x256xf32>
    %451 = vector.extract_strided_slice %7 {offsets = [0, 512], sizes = [256, 512], strides = [1, 1]} : vector<256x1024xf32> to vector<256x512xf32>
    %cst_62 = arith.constant dense<0.000000e+00> : vector<8x512xf32>
    %452 = tpu.matmul %450, %451, %cst_62 {dimension_numbers = #tpu.dot_dimension_numbers<[1], [0], [0], [1], [0, 0, 1, 1], [], []>} : vector<8x256xf32>, vector<256x512xf32>, vector<8x512xf32> -> vector<8x512xf32>
    %453 = vector.broadcast %8 : vector<1x512xf32> to vector<8x512xf32>
    %454 = arith.addf %452, %453 : vector<8x512xf32>
    %455 = vector.extract_strided_slice %454 {offsets = [0, 0], sizes = [8, 128], strides = [1, 1]} : vector<8x512xf32> to vector<8x128xf32>
    %456 = arith.negf %455 : vector<8x128xf32>
    %457 = math.exp %456 : vector<8x128xf32>
    %cst_63 = arith.constant 1.000000e+00 : f32
    %458 = vector.broadcast %cst_63 : f32 to vector<8x128xf32>
    %459 = arith.addf %458, %457 : vector<8x128xf32>
    %460 = arith.divf %458, %459 : vector<8x128xf32>
    %461 = vector.extract_strided_slice %454 {offsets = [0, 128], sizes = [8, 128], strides = [1, 1]} : vector<8x512xf32> to vector<8x128xf32>
    %462 = arith.negf %461 : vector<8x128xf32>
    %463 = math.exp %462 : vector<8x128xf32>
    %cst_64 = arith.constant 1.000000e+00 : f32
    %464 = vector.broadcast %cst_64 : f32 to vector<8x128xf32>
    %465 = arith.addf %464, %463 : vector<8x128xf32>
    %466 = arith.divf %464, %465 : vector<8x128xf32>
    %467 = vector.extract_strided_slice %454 {offsets = [0, 256], sizes = [8, 128], strides = [1, 1]} : vector<8x512xf32> to vector<8x128xf32>
    %468 = math.tanh %467 : vector<8x128xf32>
    %469 = vector.extract_strided_slice %454 {offsets = [0, 384], sizes = [8, 128], strides = [1, 1]} : vector<8x512xf32> to vector<8x128xf32>
    %470 = arith.negf %469 : vector<8x128xf32>
    %471 = math.exp %470 : vector<8x128xf32>
    %cst_65 = arith.constant 1.000000e+00 : f32
    %472 = vector.broadcast %cst_65 : f32 to vector<8x128xf32>
    %473 = arith.addf %472, %471 : vector<8x128xf32>
    %474 = arith.divf %472, %473 : vector<8x128xf32>
    %475 = arith.mulf %466, %447 : vector<8x128xf32>
    %476 = arith.mulf %460, %468 : vector<8x128xf32>
    %477 = arith.addf %475, %476 : vector<8x128xf32>
    %478 = math.tanh %477 : vector<8x128xf32>
    %479 = arith.mulf %474, %478 : vector<8x128xf32>
    %c0_66 = arith.constant 0 : index
    %c0_67 = arith.constant 0 : index
    %480 = vector.load %arg6[%c0_66, %c0_67] : memref<128x32xf32, #tpu.memory_space<vmem>>, vector<128x32xf32>
    %cst_68 = arith.constant dense<0.000000e+00> : vector<8x32xf32>
    %481 = tpu.matmul %479, %480, %cst_68 {dimension_numbers = #tpu.dot_dimension_numbers<[1], [0], [0], [1], [0, 0, 1, 1], [], []>} : vector<8x128xf32>, vector<128x32xf32>, vector<8x32xf32> -> vector<8x32xf32>
    %c0_69 = arith.constant 0 : index
    %c0_70 = arith.constant 0 : index
    %482 = vector.load %arg7[%c0_69, %c0_70] : memref<1x32xf32, #tpu.memory_space<vmem>>, vector<1x32xf32>
    %483 = vector.broadcast %482 : vector<1x32xf32> to vector<8x32xf32>
    %484 = arith.addf %481, %483 : vector<8x32xf32>
    %c0_71 = arith.constant 0 : index
    %c0_72 = arith.constant 0 : index
    %485 = vector.load %arg8[%c0_71, %c0_72] : memref<8x32xf32, #tpu.memory_space<vmem>>, vector<8x32xf32>
    tpu.vector_store %arg8[%c0_71, %c0_72], %484 {strides = array<i32>} : memref<8x32xf32, #tpu.memory_space<vmem>>, vector<8x32xf32>,
    return
  }
  func.func @transform_0(%arg0: i32) -> (i32, i32) {
    %c0_i32 = arith.constant 0 : i32
    %c0_i32_0 = arith.constant 0 : i32
    return %arg0, %c0_i32 : i32, i32
  }
  func.func @transform_1(%arg0: i32) -> (i32, i32) {
    %c0_i32 = arith.constant 0 : i32
    %c0_i32_0 = arith.constant 0 : i32
    %c0_i32_1 = arith.constant 0 : i32
    return %c0_i32, %c0_i32_0 : i32, i32
  }
  func.func @transform_2(%arg0: i32) -> (i32, i32) {
    %c0_i32 = arith.constant 0 : i32
    %c0_i32_0 = arith.constant 0 : i32
    %c0_i32_1 = arith.constant 0 : i32
    return %c0_i32, %c0_i32_0 : i32, i32
  }
  func.func @transform_3(%arg0: i32) -> (i32, i32) {
    %c0_i32 = arith.constant 0 : i32
    %c0_i32_0 = arith.constant 0 : i32
    %c0_i32_1 = arith.constant 0 : i32
    return %c0_i32, %c0_i32_0 : i32, i32
  }
  func.func @transform_4(%arg0: i32) -> (i32, i32) {
    %c0_i32 = arith.constant 0 : i32
    %c0_i32_0 = arith.constant 0 : i32
    %c0_i32_1 = arith.constant 0 : i32
    return %c0_i32, %c0_i32_0 : i32, i32
  }
  func.func @transform_5(%arg0: i32) -> (i32, i32) {
    %c0_i32 = arith.constant 0 : i32
    %c0_i32_0 = arith.constant 0 : i32
    %c0_i32_1 = arith.constant 0 : i32
    return %c0_i32, %c0_i32_0 : i32, i32
  }
  func.func @transform_6(%arg0: i32) -> (i32, i32) {
    %c0_i32 = arith.constant 0 : i32
    %c0_i32_0 = arith.constant 0 : i32
    %c0_i32_1 = arith.constant 0 : i32
    return %c0_i32, %c0_i32_0 : i32, i32
  }
  func.func @transform_7(%arg0: i32) -> (i32, i32) {
    %c0_i32 = arith.constant 0 : i32
    %c0_i32_0 = arith.constant 0 : i32
    return %arg0, %c0_i32 : i32, i32
  }
}

</mosaic_0001>

<llo_original>
// kernel: lstm_forward.1
$region0: #{lstm_forward.1}
  #allocation0 [shape = 'u32[]', space=smem, size = 0x4, offset = 0x4, fixed_abs, tag = 'smem constant byte address 0x4 - core index']
  #allocation1 [shape = 'u32[144,128]{1,0:T(1,128)}', space=vmem, size = 0x12000, scoped, tag = 'internal scratch']
  %s0 = inlined_call_operand.vmem [shape: f32[64,16], index: 0, kind: input, shape index: {}]
  %s1 = inlined_call_operand.vmem [shape: f32[16,512], index: 1, kind: input, shape index: {}]
  %s2 = inlined_call_operand.vmem [shape: f32[1,512], index: 2, kind: input, shape index: {}]
  %s3 = inlined_call_operand.vmem [shape: f32[256,1024], index: 3, kind: input, shape index: {}]
  %s4 = inlined_call_operand.vmem [shape: f32[1,512], index: 4, kind: input, shape index: {}]
  %s5 = inlined_call_operand.vmem [shape: f32[128,32], index: 5, kind: input, shape index: {}]
  %s6 = inlined_call_operand.vmem [shape: f32[1,32], index: 6, kind: input, shape index: {}]
  %s7 = inlined_call_operand.hbm [shape: f32[8,32], index: 7, kind: output, shape index: {}]
  %s8 = sld [smem:[#allocation0]]
  $region38: #{lstm_forward.1} parent=0
    _
  %s10 = ssub.s32 1, %s8
  %s11 = scalar_select 0, %s10, %s8
  $region1: #{lstm_forward.1} parent=0
    #allocation2 [shape = 'u8[4096]{0}', space=vmem, size = 0x1000, scoped, tag = 'output window, operand 0, single buffered']
    #allocation3 [shape = 's32[1]{0}', space=sflag, size = 0x4, scoped, tag = 'scoped memory for lstm_forward.1']
    %12 = vsyncpa [#allocation3], 0
    // Predicated region
    $region2: #{lstm_forward.1} parent=1 // pred_check
      _
    $region3: #{lstm_forward.1} parent=1 // pred_check_branch
      %14 = sbr.rel (0) target = $region5
    $region4: #{lstm_forward.1} parent=1 // pred_region
      _
    $region5: #{lstm_forward.1} parent=1 // pred_fallthru
      _
    // Predicated region
    $region6: #{lstm_forward.1} parent=1 // pred_check
      _
    $region7: #{lstm_forward.1} parent=1 // pred_check_branch
      %16 = sbr.rel (0) target = $region9
    $region8: #{lstm_forward.1} parent=1 // pred_region
      _
    $region9: #{lstm_forward.1} parent=1 // pred_fallthru
      _
    // Predicated region
    $region10: #{lstm_forward.1} parent=1 // pred_check
      _
    $region11: #{lstm_forward.1} parent=1 // pred_check_branch
      %18 = sbr.rel (0) target = $region13
    $region12: #{lstm_forward.1} parent=1 // pred_region
      _
    $region13: #{lstm_forward.1} parent=1 // pred_fallthru
      _
    // Predicated region
    $region14: #{lstm_forward.1} parent=1 // pred_check
      _
    $region15: #{lstm_forward.1} parent=1 // pred_check_branch
      %20 = sbr.rel (0) target = $region17
    $region16: #{lstm_forward.1} parent=1 // pred_region
      _
    $region17: #{lstm_forward.1} parent=1 // pred_fallthru
      _
    // Predicated region
    $region18: #{lstm_forward.1} parent=1 // pred_check
      _
    $region19: #{lstm_forward.1} parent=1 // pred_check_branch
      %22 = sbr.rel (0) target = $region21
    $region20: #{lstm_forward.1} parent=1 // pred_region
      _
    $region21: #{lstm_forward.1} parent=1 // pred_fallthru
      _
    // Predicated region
    $region22: #{lstm_forward.1} parent=1 // pred_check
      _
    $region23: #{lstm_forward.1} parent=1 // pred_check_branch
      %24 = sbr.rel (0) target = $region25
    $region24: #{lstm_forward.1} parent=1 // pred_region
      _
    $region25: #{lstm_forward.1} parent=1 // pred_fallthru
      _
    // Predicated region
    $region26: #{lstm_forward.1} parent=1 // pred_check
      _
    $region27: #{lstm_forward.1} parent=1 // pred_check_branch
      %26 = sbr.rel (0) target = $region29
    $region28: #{lstm_forward.1} parent=1 // pred_region
      _
    $region29: #{lstm_forward.1} parent=1 // pred_fallthru
      _
    %v27 = vld [vmem:[%s0] sm:$0xff]
    %v28 = vld [vmem:[%s0 + $0x8] sm:$0xff]
    %v29 = vld [vmem:[%s0 + $0x10] sm:$0xff]
    %v30 = vld [vmem:[%s0 + $0x18] sm:$0xff]
    %v31 = vld [vmem:[%s0 + $0x20] sm:$0xff]
    %v32 = vld [vmem:[%s0 + $0x28] sm:$0xff]
    %v33 = vld [vmem:[%s0 + $0x30] sm:$0xff]
    %v34 = vld [vmem:[%s0 + $0x38] sm:$0xff]
    %v35 = vld [vmem:[%s1] sm:$0xff]
    %v36 = vld [vmem:[%s1 + $0x8] sm:$0xff]
    %v37 = vld [vmem:[%s1 + $0x10] sm:$0xff]
    %v38 = vld [vmem:[%s1 + $0x18] sm:$0xff]
    %v39 = vld [vmem:[%s1 + $0x20] sm:$0xff]
    %v40 = vld [vmem:[%s1 + $0x28] sm:$0xff]
    %v41 = vld [vmem:[%s1 + $0x30] sm:$0xff]
    %v42 = vld [vmem:[%s1 + $0x38] sm:$0xff]
    %v43 = vld [vmem:[%s2] sm:$0xf]
    %v45 = vlaneseq
    %v46 = vshrl.u32 %v45, 7
    %v47 = vsub.s32 0, %v46
    %v48 = vrot.slane %v43, %v47
    %v49 = vlaneseq
    %v50 = vshrl.u32 %v49, 7
    %v51 = vsub.s32 1, %v50
    %v52 = vrot.slane %v43, %v51
    %v53 = vlaneseq
    %v54 = vshrl.u32 %v53, 7
    %v55 = vsub.s32 2, %v54
    %v56 = vrot.slane %v43, %v55
    %v57 = vlaneseq
    %v58 = vshrl.u32 %v57, 7
    %v59 = vsub.s32 3, %v58
    %v60 = vrot.slane %v43, %v59
    %vm65 = vcmask 130048
    %v67 = vsel %vm65, %v27, 0
    %v70 = vsel %vm65, %v28, 0
    %v73 = vsel %vm65, %v29, 0
    %v76 = vsel %vm65, %v30, 0
    %v79 = vsel %vm65, %v31, 0
    %v82 = vsel %vm65, %v32, 0
    %v85 = vsel %vm65, %v33, 0
    %v88 = vsel %vm65, %v34, 0
    %90 = vmatprep.subr.mxu0 %v36
    %91 = vmatpush1.msra.mxu0 %v35
    %92 = vmatprep.subr.mxu0 %v40
    %93 = vmatpush1.msra.mxu0 %v39
    %94 = vmatprep.subr.mxu0 0.0
    %95 = vmatpush1.msra.mxu0 0.0
    %96 = vmatprep.subr.mxu0 0.0
    %97 = vmatpush1.msra.mxu0 0.0
    %98 = vmatprep.subr.mxu0 0.0
    %99 = vmatpush1.msra.mxu0 0.0
    %100 = vmatprep.subr.mxu0 0.0
    %101 = vmatpush1.msra.mxu0 0.0
    %102 = vmatprep.subr.mxu0 0.0
    %103 = vmatpush1.msra.mxu0 0.0
    %104 = vmatprep.subr.mxu0 0.0
    %105 = vmatpush1.msra.mxu0 0.0
    %106 = vmatprep.subr.mxu0 0.0
    %107 = vmatpush1.msra.mxu0 0.0
    %108 = vmatprep.subr.mxu0 0.0
    %109 = vmatpush1.msra.mxu0 0.0
    %110 = vmatprep.subr.mxu0 0.0
    %111 = vmatpush1.msra.mxu0 0.0
    %112 = vmatprep.subr.mxu0 0.0
    %113 = vmatpush1.msra.mxu0 0.0
    %114 = vmatprep.subr.mxu0 0.0
    %115 = vmatpush1.msra.mxu0 0.0
    %116 = vmatprep.subr.mxu0 0.0
    %117 = vmatpush1.msra.mxu0 0.0
    %118 = vmatprep.subr.mxu0 0.0
    %119 = vmatpush1.msra.mxu0 0.0
    %120 = vmatprep.subr.mxu0 0.0
    %121 = vmatpush1.msra.mxu0 0.0
    %122 = vmatprep.subr.mxu0 0.0
    %123 = vmatpush1.msra.mxu0 0.0
    %124 = vmatprep.subr.mxu0 0.0
    %125 = vmatpush1.msra.mxu0 0.0
    %126 = vmatprep.subr.mxu0 0.0
    %127 = vmatpush1.msra.mxu0 0.0
    %128 = vmatprep.subr.mxu0 0.0
    %129 = vmatpush1.msra.mxu0 0.0
    %130 = vmatprep.subr.mxu0 0.0
    %131 = vmatpush1.msra.mxu0 0.0
    %132 = vmatprep.subr.mxu0 0.0
    %133 = vmatpush1.msra.mxu0 0.0
    %134 = vmatprep.subr.mxu0 0.0
    %135 = vmatpush1.msra.mxu0 0.0
    %136 = vmatprep.subr.mxu0 0.0
    %137 = vmatpush1.msra.mxu0 0.0
    %138 = vmatprep.subr.mxu0 0.0
    %139 = vmatpush1.msra.mxu0 0.0
    %140 = vmatprep.subr.mxu0 0.0
    %141 = vmatpush1.msra.mxu0 0.0
    %142 = vmatprep.subr.mxu0 0.0
    %143 = vmatpush1.msra.mxu0 0.0
    %144 = vmatprep.subr.mxu0 0.0
    %145 = vmatpush1.msra.mxu0 0.0
    %146 = vmatprep.subr.mxu0 0.0
    %147 = vmatpush1.msra.mxu0 0.0
    %148 = vmatprep.subr.mxu0 0.0
    %149 = vmatpush1.msra.mxu0 0.0
    %150 = vmatprep.subr.mxu0 0.0
    %151 = vmatpush1.msra.mxu0 0.0
    %152 = vmatprep.subr.mxu0 0.0
    %153 = vmatpush1.msra.mxu0 0.0
    %154 = vmatprep.mubr.f32.mxu0 0.0
    %155 = vmatmul.mubr.f32.gmra.mrb[0].mxu0 %v67
    %v156 = vpop.f32.mrb[0].mxu0
    %v157 = vadd.f32 %v48, %v156
    %v158 = vpop.f32.mrb[0].mxu0
    %v159 = vadd.f32 %v52, %v158
    %160 = vmatprep.mubr.f32.mxu0 0.0
    %161 = vmatmul.mubr.f32.gmra.mrb[0].mxu0 %v70
    %v162 = vpop.f32.mrb[0].mxu0
    %v163 = vadd.f32 %v48, %v162
    %v164 = vpop.f32.mrb[0].mxu0
    %v165 = vadd.f32 %v52, %v164
    %166 = vmatprep.mubr.f32.mxu0 0.0
    %167 = vmatmul.mubr.f32.gmra.mrb[0].mxu0 %v73
    %v168 = vpop.f32.mrb[0].mxu0
    %v169 = vadd.f32 %v48, %v168
    %v170 = vpop.f32.mrb[0].mxu0
    %v171 = vadd.f32 %v52, %v170
    %172 = vmatprep.mubr.f32.mxu0 0.0
    %173 = vmatmul.mubr.f32.gmra.mrb[0].mxu0 %v76
    %v174 = vpop.f32.mrb[0].mxu0
    %v175 = vadd.f32 %v48, %v174
    %v176 = vpop.f32.mrb[0].mxu0
    %v177 = vadd.f32 %v52, %v176
    %178 = vmatprep.mubr.f32.mxu0 0.0
    %179 = vmatmul.mubr.f32.gmra.mrb[0].mxu0 %v79
    %v180 = vpop.f32.mrb[0].mxu0
    %v181 = vadd.f32 %v48, %v180
    %v182 = vpop.f32.mrb[0].mxu0
    %v183 = vadd.f32 %v52, %v182
    %184 = vmatprep.mubr.f32.mxu0 0.0
    %185 = vmatmul.mubr.f32.gmra.mrb[0].mxu0 %v82
    %v186 = vpop.f32.mrb[0].mxu0
    %v187 = vadd.f32 %v48, %v186
    %v188 = vpop.f32.mrb[0].mxu0
    %v189 = vadd.f32 %v52, %v188
    %190 = vmatprep.mubr.f32.mxu0 0.0
    %191 = vmatmul.mubr.f32.gmra.mrb[0].mxu0 %v85
    %v192 = vpop.f32.mrb[0].mxu0
    %v193 = vadd.f32 %v48, %v192
    %v194 = vpop.f32.mrb[0].mxu0
    %v195 = vadd.f32 %v52, %v194
    %196 = vmatprep.mubr.f32.mxu0 0.0
    %197 = vmatmul.mubr.f32.gmra.mrb[0].mxu0 %v88
    %v198 = vpop.f32.mrb[0].mxu0
    %v199 = vadd.f32 %v48, %v198
    %v200 = vpop.f32.mrb[0].mxu0
    %v201 = vadd.f32 %v52, %v200
    %202 = vdwg.mxu0
    %203 = vmatprep.subr.mxu0 %v38
    %204 = vmatpush1.msra.mxu0 %v37
    %205 = vmatprep.subr.mxu0 %v42
    %206 = vmatpush1.msra.mxu0 %v41
    %207 = vmatprep.subr.mxu0 0.0
    %208 = vmatpush1.msra.mxu0 0.0
    %209 = vmatprep.subr.mxu0 0.0
    %210 = vmatpush1.msra.mxu0 0.0
    %211 = vmatprep.subr.mxu0 0.0
    %212 = vmatpush1.msra.mxu0 0.0
    %213 = vmatprep.subr.mxu0 0.0
    %214 = vmatpush1.msra.mxu0 0.0
    %215 = vmatprep.subr.mxu0 0.0
    %216 = vmatpush1.msra.mxu0 0.0
    %217 = vmatprep.subr.mxu0 0.0
    %218 = vmatpush1.msra.mxu0 0.0
    %219 = vmatprep.subr.mxu0 0.0
    %220 = vmatpush1.msra.mxu0 0.0
    %221 = vmatprep.subr.mxu0 0.0
    %222 = vmatpush1.msra.mxu0 0.0
    %223 = vmatprep.subr.mxu0 0.0
    %224 = vmatpush1.msra.mxu0 0.0
    %225 = vmatprep.subr.mxu0 0.0
    %226 = vmatpush1.msra.mxu0 0.0
    %227 = vmatprep.subr.mxu0 0.0
    %228 = vmatpush1.msra.mxu0 0.0
    %229 = vmatprep.subr.mxu0 0.0
    %230 = vmatpush1.msra.mxu0 0.0
    %231 = vmatprep.subr.mxu0 0.0
    %232 = vmatpush1.msra.mxu0 0.0
    %233 = vmatprep.subr.mxu0 0.0
    %234 = vmatpush1.msra.mxu0 0.0
    %235 = vmatprep.subr.mxu0 0.0
    %236 = vmatpush1.msra.mxu0 0.0
    %237 = vmatprep.subr.mxu0 0.0
    %238 = vmatpush1.msra.mxu0 0.0
    %239 = vmatprep.subr.mxu0 0.0
    %240 = vmatpush1.msra.mxu0 0.0
    %241 = vmatprep.subr.mxu0 0.0
    %242 = vmatpush1.msra.mxu0 0.0
    %243 = vmatprep.subr.mxu0 0.0
    %244 = vmatpush1.msra.mxu0 0.0
    %245 = vmatprep.subr.mxu0 0.0
    %246 = vmatpush1.msra.mxu0 0.0
    %247 = vmatprep.subr.mxu0 0.0
    %248 = vmatpush1.msra.mxu0 0.0
    %249 = vmatprep.subr.mxu0 0.0
    %250 = vmatpush1.msra.mxu0 0.0
    %251 = vmatprep.subr.mxu0 0.0
    %252 = vmatpush1.msra.mxu0 0.0
    %253 = vmatprep.subr.mxu0 0.0
    %254 = vmatpush1.msra.mxu0 0.0
    %255 = vmatprep.subr.mxu0 0.0
    %256 = vmatpush1.msra.mxu0 0.0
    %257 = vmatprep.subr.mxu0 0.0
    %258 = vmatpush1.msra.mxu0 0.0
    %259 = vmatprep.subr.mxu0 0.0
    %260 = vmatpush1.msra.mxu0 0.0
    %261 = vmatprep.subr.mxu0 0.0
    %262 = vmatpush1.msra.mxu0 0.0
    %263 = vmatprep.subr.mxu0 0.0
    %264 = vmatpush1.msra.mxu0 0.0
    %265 = vmatprep.subr.mxu0 0.0
    %266 = vmatpush1.msra.mxu0 0.0
    %267 = vmatprep.mubr.f32.mxu0 0.0
    %268 = vmatmul.mubr.f32.gmra.mrb[0].mxu0 %v67
    %v269 = vpop.f32.mrb[0].mxu0
    %v270 = vadd.f32 %v56, %v269
    %v271 = vpop.f32.mrb[0].mxu0
    %v272 = vadd.f32 %v60, %v271
    %273 = vmatprep.mubr.f32.mxu0 0.0
    %274 = vmatmul.mubr.f32.gmra.mrb[0].mxu0 %v70
    %v275 = vpop.f32.mrb[0].mxu0
    %v276 = vadd.f32 %v56, %v275
    %v277 = vpop.f32.mrb[0].mxu0
    %v278 = vadd.f32 %v60, %v277
    %279 = vmatprep.mubr.f32.mxu0 0.0
    %280 = vmatmul.mubr.f32.gmra.mrb[0].mxu0 %v73
    %v281 = vpop.f32.mrb[0].mxu0
    %v282 = vadd.f32 %v56, %v281
    %v283 = vpop.f32.mrb[0].mxu0
    %v284 = vadd.f32 %v60, %v283
    %285 = vmatprep.mubr.f32.mxu0 0.0
    %286 = vmatmul.mubr.f32.gmra.mrb[0].mxu0 %v76
    %v287 = vpop.f32.mrb[0].mxu0
    %v288 = vadd.f32 %v56, %v287
    %v289 = vpop.f32.mrb[0].mxu0
    %v290 = vadd.f32 %v60, %v289
    %291 = vmatprep.mubr.f32.mxu0 0.0
    %292 = vmatmul.mubr.f32.gmra.mrb[0].mxu0 %v79
    %v293 = vpop.f32.mrb[0].mxu0
    %v294 = vadd.f32 %v56, %v293
    %v295 = vpop.f32.mrb[0].mxu0
    %v296 = vadd.f32 %v60, %v295
    %297 = vmatprep.mubr.f32.mxu0 0.0
    %298 = vmatmul.mubr.f32.gmra.mrb[0].mxu0 %v82
    %v299 = vpop.f32.mrb[0].mxu0
    %v300 = vadd.f32 %v56, %v299
    %v301 = vpop.f32.mrb[0].mxu0
    %v302 = vadd.f32 %v60, %v301
    %303 = vmatprep.mubr.f32.mxu0 0.0
    %304 = vmatmul.mubr.f32.gmra.mrb[0].mxu0 %v85
    %v305 = vpop.f32.mrb[0].mxu0
    %v306 = vadd.f32 %v56, %v305
    %v307 = vpop.f32.mrb[0].mxu0
    %v308 = vadd.f32 %v60, %v307
    %309 = vmatprep.mubr.f32.mxu0 0.0
    %310 = vmatmul.mubr.f32.gmra.mrb[0].mxu0 %v88
    %v311 = vpop.f32.mrb[0].mxu0
    %v312 = vadd.f32 %v56, %v311
    %v313 = vpop.f32.mrb[0].mxu0
    %v314 = vadd.f32 %v60, %v313
    %315 = vdwg.mxu0
    %v316 = vld [vmem:[%s3] sm:$0xff]
    %v317 = vld [vmem:[%s3 + $0x8] sm:$0xff]
    %v318 = vld [vmem:[%s3 + $0x10] sm:$0xff]
    %v319 = vld [vmem:[%s3 + $0x18] sm:$0xff]
    %v320 = vld [vmem:[%s3 + $0x20] sm:$0xff]
    %v321 = vld [vmem:[%s3 + $0x28] sm:$0xff]
    %v322 = vld [vmem:[%s3 + $0x30] sm:$0xff]
    %v323 = vld [vmem:[%s3 + $0x38] sm:$0xff]
    %v324 = vld [vmem:[%s3 + $0x40] sm:$0xff]
    %v325 = vld [vmem:[%s3 + $0x48] sm:$0xff]
    %v326 = vld [vmem:[%s3 + $0x50] sm:$0xff]
    %v327 = vld [vmem:[%s3 + $0x58] sm:$0xff]
    %v328 = vld [vmem:[%s3 + $0x60] sm:$0xff]
    %v329 = vld [vmem:[%s3 + $0x68] sm:$0xff]
    %v330 = vld [vmem:[%s3 + $0x70] sm:$0xff]
    %v331 = vld [vmem:[%s3 + $0x78] sm:$0xff]
    %v332 = vld [vmem:[%s3 + $0x80] sm:$0xff]
    %v333 = vld [vmem:[%s3 + $0x88] sm:$0xff]
    %v334 = vld [vmem:[%s3 + $0x90] sm:$0xff]
    %v335 = vld [vmem:[%s3 + $0x98] sm:$0xff]
    %v336 = vld [vmem:[%s3 + $0xa0] sm:$0xff]
    %v337 = vld [vmem:[%s3 + $0xa8] sm:$0xff]
    %v338 = vld [vmem:[%s3 + $0xb0] sm:$0xff]
    %v339 = vld [vmem:[%s3 + $0xb8] sm:$0xff]
    %v340 = vld [vmem:[%s3 + $0xc0] sm:$0xff]
    %v341 = vld [vmem:[%s3 + $0xc8] sm:$0xff]
    %v342 = vld [vmem:[%s3 + $0xd0] sm:$0xff]
    %v343 = vld [vmem:[%s3 + $0xd8] sm:$0xff]
    %v344 = vld [vmem:[%s3 + $0xe0] sm:$0xff]
    %v345 = vld [vmem:[%s3 + $0xe8] sm:$0xff]
    %v346 = vld [vmem:[%s3 + $0xf0] sm:$0xff]
    %v347 = vld [vmem:[%s3 + $0xf8] sm:$0xff]
    %v348 = vld [vmem:[%s3 + $0x100] sm:$0xff]
    %v349 = vld [vmem:[%s3 + $0x108] sm:$0xff]
    %v350 = vld [vmem:[%s3 + $0x110] sm:$0xff]
    %v351 = vld [vmem:[%s3 + $0x118] sm:$0xff]
    %v352 = vld [vmem:[%s3 + $0x120] sm:$0xff]
    %v353 = vld [vmem:[%s3 + $0x128] sm:$0xff]
    %v354 = vld [vmem:[%s3 + $0x130] sm:$0xff]
    %v355 = vld [vmem:[%s3 + $0x138] sm:$0xff]
    %v356 = vld [vmem:[%s3 + $0x140] sm:$0xff]
    %v357 = vld [vmem:[%s3 + $0x148] sm:$0xff]
    %v358 = vld [vmem:[%s3 + $0x150] sm:$0xff]
    %v359 = vld [vmem:[%s3 + $0x158] sm:$0xff]
    %v360 = vld [vmem:[%s3 + $0x160] sm:$0xff]
    %v361 = vld [vmem:[%s3 + $0x168] sm:$0xff]
    %v362 = vld [vmem:[%s3 + $0x170] sm:$0xff]
    %v363 = vld [vmem:[%s3 + $0x178] sm:$0xff]
    %v364 = vld [vmem:[%s3 + $0x180] sm:$0xff]
    %v365 = vld [vmem:[%s3 + $0x188] sm:$0xff]
    %v366 = vld [vmem:[%s3 + $0x190] sm:$0xff]
    %v367 = vld [vmem:[%s3 + $0x198] sm:$0xff]
    %v368 = vld [vmem:[%s3 + $0x1a0] sm:$0xff]
    %v369 = vld [vmem:[%s3 + $0x1a8] sm:$0xff]
    %v370 = vld [vmem:[%s3 + $0x1b0] sm:$0xff]
    %v371 = vld [vmem:[%s3 + $0x1b8] sm:$0xff]
    %v372 = vld [vmem:[%s3 + $0x1c0] sm:$0xff]
    %v373 = vld [vmem:[%s3 + $0x1c8] sm:$0xff]
    %v374 = vld [vmem:[%s3 + $0x1d0] sm:$0xff]
    %v375 = vld [vmem:[%s3 + $0x1d8] sm:$0xff]
    %v376 = vld [vmem:[%s3 + $0x1e0] sm:$0xff]
    %v377 = vld [vmem:[%s3 + $0x1e8] sm:$0xff]
    %v378 = vld [vmem:[%s3 + $0x1f0] sm:$0xff]
    %v379 = vld [vmem:[%s3 + $0x1f8] sm:$0xff]
    %v380 = vld [vmem:[%s3 + $0x200] sm:$0xff]
    %v381 = vld [vmem:[%s3 + $0x208] sm:$0xff]
    %v382 = vld [vmem:[%s3 + $0x210] sm:$0xff]
    %v383 = vld [vmem:[%s3 + $0x218] sm:$0xff]
    %v384 = vld [vmem:[%s3 + $0x220] sm:$0xff]
    %v385 = vld [vmem:[%s3 + $0x228] sm:$0xff]
    %v386 = vld [vmem:[%s3 + $0x230] sm:$0xff]
    %v387 = vld [vmem:[%s3 + $0x238] sm:$0xff]
    %v388 = vld [vmem:[%s3 + $0x240] sm:$0xff]
    %v389 = vld [vmem:[%s3 + $0x248] sm:$0xff]
    %v390 = vld [vmem:[%s3 + $0x250] sm:$0xff]
    %v391 = vld [vmem:[%s3 + $0x258] sm:$0xff]
    %v392 = vld [vmem:[%s3 + $0x260] sm:$0xff]
    %v393 = vld [vmem:[%s3 + $0x268] sm:$0xff]
    %v394 = vld [vmem:[%s3 + $0x270] sm:$0xff]
    %v395 = vld [vmem:[%s3 + $0x278] sm:$0xff]
    %v396 = vld [vmem:[%s3 + $0x280] sm:$0xff]
    %v397 = vld [vmem:[%s3 + $0x288] sm:$0xff]
    %v398 = vld [vmem:[%s3 + $0x290] sm:$0xff]
    %v399 = vld [vmem:[%s3 + $0x298] sm:$0xff]
    %v400 = vld [vmem:[%s3 + $0x2a0] sm:$0xff]
    %v401 = vld [vmem:[%s3 + $0x2a8] sm:$0xff]
    %v402 = vld [vmem:[%s3 + $0x2b0] sm:$0xff]
    %v403 = vld [vmem:[%s3 + $0x2b8] sm:$0xff]
    %v404 = vld [vmem:[%s3 + $0x2c0] sm:$0xff]
    %v405 = vld [vmem:[%s3 + $0x2c8] sm:$0xff]
    %v406 = vld [vmem:[%s3 + $0x2d0] sm:$0xff]
    %v407 = vld [vmem:[%s3 + $0x2d8] sm:$0xff]
    %v408 = vld [vmem:[%s3 + $0x2e0] sm:$0xff]
    %v409 = vld [vmem:[%s3 + $0x2e8] sm:$0xff]
    %v410 = vld [vmem:[%s3 + $0x2f0] sm:$0xff]
    %v411 = vld [vmem:[%s3 + $0x2f8] sm:$0xff]
    %v412 = vld [vmem:[%s3 + $0x300] sm:$0xff]
    %v413 = vld [vmem:[%s3 + $0x308] sm:$0xff]
    %v414 = vld [vmem:[%s3 + $0x310] sm:$0xff]
    %v415 = vld [vmem:[%s3 + $0x318] sm:$0xff]
    %v416 = vld [vmem:[%s3 + $0x320] sm:$0xff]
    %v417 = vld [vmem:[%s3 + $0x328] sm:$0xff]
    %v418 = vld [vmem:[%s3 + $0x330] sm:$0xff]
    %v419 = vld [vmem:[%s3 + $0x338] sm:$0xff]
    %v420 = vld [vmem:[%s3 + $0x340] sm:$0xff]
    %v421 = vld [vmem:[%s3 + $0x348] sm:$0xff]
    %v422 = vld [vmem:[%s3 + $0x350] sm:$0xff]
    %v423 = vld [vmem:[%s3 + $0x358] sm:$0xff]
    %v424 = vld [vmem:[%s3 + $0x360] sm:$0xff]
    %v425 = vld [vmem:[%s3 + $0x368] sm:$0xff]
    %v426 = vld [vmem:[%s3 + $0x370] sm:$0xff]
    %v427 = vld [vmem:[%s3 + $0x378] sm:$0xff]
    %v428 = vld [vmem:[%s3 + $0x380] sm:$0xff]
    %v429 = vld [vmem:[%s3 + $0x388] sm:$0xff]
    %v430 = vld [vmem:[%s3 + $0x390] sm:$0xff]
    %v431 = vld [vmem:[%s3 + $0x398] sm:$0xff]
    %v432 = vld [vmem:[%s3 + $0x3a0] sm:$0xff]
    %v433 = vld [vmem:[%s3 + $0x3a8] sm:$0xff]
    %v434 = vld [vmem:[%s3 + $0x3b0] sm:$0xff]
    %v435 = vld [vmem:[%s3 + $0x3b8] sm:$0xff]
    %v436 = vld [vmem:[%s3 + $0x3c0] sm:$0xff]
    %v437 = vld [vmem:[%s3 + $0x3c8] sm:$0xff]
    %v438 = vld [vmem:[%s3 + $0x3d0] sm:$0xff]
    %v439 = vld [vmem:[%s3 + $0x3d8] sm:$0xff]
    %v440 = vld [vmem:[%s3 + $0x3e0] sm:$0xff]
    %v441 = vld [vmem:[%s3 + $0x3e8] sm:$0xff]
    %v442 = vld [vmem:[%s3 + $0x3f0] sm:$0xff]
    %v443 = vld [vmem:[%s3 + $0x3f8] sm:$0xff]
    %v444 = vld [vmem:[%s3 + $0x400] sm:$0xff]
    %v445 = vld [vmem:[%s3 + $0x408] sm:$0xff]
    %v446 = vld [vmem:[%s3 + $0x410] sm:$0xff]
    %v447 = vld [vmem:[%s3 + $0x418] sm:$0xff]
    %v448 = vld [vmem:[%s3 + $0x420] sm:$0xff]
    %v449 = vld [vmem:[%s3 + $0x428] sm:$0xff]
    %v450 = vld [vmem:[%s3 + $0x430] sm:$0xff]
    %v451 = vld [vmem:[%s3 + $0x438] sm:$0xff]
    %v452 = vld [vmem:[%s3 + $0x440] sm:$0xff]
    %v453 = vld [vmem:[%s3 + $0x448] sm:$0xff]
    %v454 = vld [vmem:[%s3 + $0x450] sm:$0xff]
    %v455 = vld [vmem:[%s3 + $0x458] sm:$0xff]
    %v456 = vld [vmem:[%s3 + $0x460] sm:$0xff]
    %v457 = vld [vmem:[%s3 + $0x468] sm:$0xff]
    %v458 = vld [vmem:[%s3 + $0x470] sm:$0xff]
    %v459 = vld [vmem:[%s3 + $0x478] sm:$0xff]
    %v460 = vld [vmem:[%s3 + $0x480] sm:$0xff]
    %v461 = vld [vmem:[%s3 + $0x488] sm:$0xff]
    %v462 = vld [vmem:[%s3 + $0x490] sm:$0xff]
    %v463 = vld [vmem:[%s3 + $0x498] sm:$0xff]
    %v464 = vld [vmem:[%s3 + $0x4a0] sm:$0xff]
    %v465 = vld [vmem:[%s3 + $0x4a8] sm:$0xff]
    %v466 = vld [vmem:[%s3 + $0x4b0] sm:$0xff]
    %v467 = vld [vmem:[%s3 + $0x4b8] sm:$0xff]
    %v468 = vld [vmem:[%s3 + $0x4c0] sm:$0xff]
    %v469 = vld [vmem:[%s3 + $0x4c8] sm:$0xff]
    %v470 = vld [vmem:[%s3 + $0x4d0] sm:$0xff]
    %v471 = vld [vmem:[%s3 + $0x4d8] sm:$0xff]
    %v472 = vld [vmem:[%s3 + $0x4e0] sm:$0xff]
    %v473 = vld [vmem:[%s3 + $0x4e8] sm:$0xff]
    %v474 = vld [vmem:[%s3 + $0x4f0] sm:$0xff]
    %v475 = vld [vmem:[%s3 + $0x4f8] sm:$0xff]
    %v476 = vld [vmem:[%s3 + $0x500] sm:$0xff]
    %v477 = vld [vmem:[%s3 + $0x508] sm:$0xff]
    %v478 = vld [vmem:[%s3 + $0x510] sm:$0xff]
    %v479 = vld [vmem:[%s3 + $0x518] sm:$0xff]
    %v480 = vld [vmem:[%s3 + $0x520] sm:$0xff]
    %v481 = vld [vmem:[%s3 + $0x528] sm:$0xff]
    %v482 = vld [vmem:[%s3 + $0x530] sm:$0xff]
    %v483 = vld [vmem:[%s3 + $0x538] sm:$0xff]
    %v484 = vld [vmem:[%s3 + $0x540] sm:$0xff]
    %v485 = vld [vmem:[%s3 + $0x548] sm:$0xff]
    %v486 = vld [vmem:[%s3 + $0x550] sm:$0xff]
    %v487 = vld [vmem:[%s3 + $0x558] sm:$0xff]
    %v488 = vld [vmem:[%s3 + $0x560] sm:$0xff]
    %v489 = vld [vmem:[%s3 + $0x568] sm:$0xff]
    %v490 = vld [vmem:[%s3 + $0x570] sm:$0xff]
    %v491 = vld [vmem:[%s3 + $0x578] sm:$0xff]
    %v492 = vld [vmem:[%s3 + $0x580] sm:$0xff]
    %v493 = vld [vmem:[%s3 + $0x588] sm:$0xff]
    %v494 = vld [vmem:[%s3 + $0x590] sm:$0xff]
    %v495 = vld [vmem:[%s3 + $0x598] sm:$0xff]
    %v496 = vld [vmem:[%s3 + $0x5a0] sm:$0xff]
    %v497 = vld [vmem:[%s3 + $0x5a8] sm:$0xff]
    %v498 = vld [vmem:[%s3 + $0x5b0] sm:$0xff]
    %v499 = vld [vmem:[%s3 + $0x5b8] sm:$0xff]
    %v500 = vld [vmem:[%s3 + $0x5c0] sm:$0xff]
    %v501 = vld [vmem:[%s3 + $0x5c8] sm:$0xff]
    %v502 = vld [vmem:[%s3 + $0x5d0] sm:$0xff]
    %v503 = vld [vmem:[%s3 + $0x5d8] sm:$0xff]
    %v504 = vld [vmem:[%s3 + $0x5e0] sm:$0xff]
    %v505 = vld [vmem:[%s3 + $0x5e8] sm:$0xff]
    %v506 = vld [vmem:[%s3 + $0x5f0] sm:$0xff]
    %v507 = vld [vmem:[%s3 + $0x5f8] sm:$0xff]
    %v508 = vld [vmem:[%s3 + $0x600] sm:$0xff]
    %v509 = vld [vmem:[%s3 + $0x608] sm:$0xff]
    %v510 = vld [vmem:[%s3 + $0x610] sm:$0xff]
    %v511 = vld [vmem:[%s3 + $0x618] sm:$0xff]
    %v512 = vld [vmem:[%s3 + $0x620] sm:$0xff]
    %v513 = vld [vmem:[%s3 + $0x628] sm:$0xff]
    %v514 = vld [vmem:[%s3 + $0x630] sm:$0xff]
    %v515 = vld [vmem:[%s3 + $0x638] sm:$0xff]
    %v516 = vld [vmem:[%s3 + $0x640] sm:$0xff]
    %v517 = vld [vmem:[%s3 + $0x648] sm:$0xff]
    %v518 = vld [vmem:[%s3 + $0x650] sm:$0xff]
    %v519 = vld [vmem:[%s3 + $0x658] sm:$0xff]
    %v520 = vld [vmem:[%s3 + $0x660] sm:$0xff]
    %v521 = vld [vmem:[%s3 + $0x668] sm:$0xff]
    %v522 = vld [vmem:[%s3 + $0x670] sm:$0xff]
    %v523 = vld [vmem:[%s3 + $0x678] sm:$0xff]
    %v524 = vld [vmem:[%s3 + $0x680] sm:$0xff]
    %v525 = vld [vmem:[%s3 + $0x688] sm:$0xff]
    %v526 = vld [vmem:[%s3 + $0x690] sm:$0xff]
    %v527 = vld [vmem:[%s3 + $0x698] sm:$0xff]
    %v528 = vld [vmem:[%s3 + $0x6a0] sm:$0xff]
    %v529 = vld [vmem:[%s3 + $0x6a8] sm:$0xff]
    %v530 = vld [vmem:[%s3 + $0x6b0] sm:$0xff]
    %v531 = vld [vmem:[%s3 + $0x6b8] sm:$0xff]
    %v532 = vld [vmem:[%s3 + $0x6c0] sm:$0xff]
    %v533 = vld [vmem:[%s3 + $0x6c8] sm:$0xff]
    %v534 = vld [vmem:[%s3 + $0x6d0] sm:$0xff]
    %v535 = vld [vmem:[%s3 + $0x6d8] sm:$0xff]
    %v536 = vld [vmem:[%s3 + $0x6e0] sm:$0xff]
    %v537 = vld [vmem:[%s3 + $0x6e8] sm:$0xff]
    %v538 = vld [vmem:[%s3 + $0x6f0] sm:$0xff]
    %v539 = vld [vmem:[%s3 + $0x6f8] sm:$0xff]
    %v540 = vld [vmem:[%s3 + $0x700] sm:$0xff]
    %v541 = vld [vmem:[%s3 + $0x708] sm:$0xff]
    %v542 = vld [vmem:[%s3 + $0x710] sm:$0xff]
    %v543 = vld [vmem:[%s3 + $0x718] sm:$0xff]
    %v544 = vld [vmem:[%s3 + $0x720] sm:$0xff]
    %v545 = vld [vmem:[%s3 + $0x728] sm:$0xff]
    %v546 = vld [vmem:[%s3 + $0x730] sm:$0xff]
    %v547 = vld [vmem:[%s3 + $0x738] sm:$0xff]
    %v548 = vld [vmem:[%s3 + $0x740] sm:$0xff]
    %v549 = vld [vmem:[%s3 + $0x748] sm:$0xff]
    %v550 = vld [vmem:[%s3 + $0x750] sm:$0xff]
    %v551 = vld [vmem:[%s3 + $0x758] sm:$0xff]
    %v552 = vld [vmem:[%s3 + $0x760] sm:$0xff]
    %v553 = vld [vmem:[%s3 + $0x768] sm:$0xff]
    %v554 = vld [vmem:[%s3 + $0x770] sm:$0xff]
    %v555 = vld [vmem:[%s3 + $0x778] sm:$0xff]
    %v556 = vld [vmem:[%s3 + $0x780] sm:$0xff]
    %v557 = vld [vmem:[%s3 + $0x788] sm:$0xff]
    %v558 = vld [vmem:[%s3 + $0x790] sm:$0xff]
    %v559 = vld [vmem:[%s3 + $0x798] sm:$0xff]
    %v560 = vld [vmem:[%s3 + $0x7a0] sm:$0xff]
    %v561 = vld [vmem:[%s3 + $0x7a8] sm:$0xff]
    %v562 = vld [vmem:[%s3 + $0x7b0] sm:$0xff]
    %v563 = vld [vmem:[%s3 + $0x7b8] sm:$0xff]
    %v564 = vld [vmem:[%s3 + $0x7c0] sm:$0xff]
    %v565 = vld [vmem:[%s3 + $0x7c8] sm:$0xff]
    %v566 = vld [vmem:[%s3 + $0x7d0] sm:$0xff]
    %v567 = vld [vmem:[%s3 + $0x7d8] sm:$0xff]
    %v568 = vld [vmem:[%s3 + $0x7e0] sm:$0xff]
    %v569 = vld [vmem:[%s3 + $0x7e8] sm:$0xff]
    %v570 = vld [vmem:[%s3 + $0x7f0] sm:$0xff]
    %v571 = vld [vmem:[%s3 + $0x7f8] sm:$0xff]
    %v572 = vld [vmem:[%s4] sm:$0xf]
    %v573 = vxor.u32 %v157, 2147483648
    %v574 = vxor.u32 %v163, 2147483648
    %v575 = vxor.u32 %v169, 2147483648
    %v576 = vxor.u32 %v175, 2147483648
    %v577 = vxor.u32 %v181, 2147483648
    %v578 = vxor.u32 %v187, 2147483648
    %v579 = vxor.u32 %v193, 2147483648
    %v580 = vxor.u32 %v199, 2147483648
    %v581 = vmul.f32 %v573, 1.442695
    %v582 = vpow.pop %v581
    %v583 = vmul.f32 %v574, 1.442695
    %v584 = vpow.pop %v583
    %v585 = vmul.f32 %v575, 1.442695
    %v586 = vpow.pop %v585
    %v587 = vmul.f32 %v576, 1.442695
    %v588 = vpow.pop %v587
    %v589 = vmul.f32 %v577, 1.442695
    %v590 = vpow.pop %v589
    %v591 = vmul.f32 %v578, 1.442695
    %v592 = vpow.pop %v591
    %v593 = vmul.f32 %v579, 1.442695
    %v594 = vpow.pop %v593
    %v595 = vmul.f32 %v580, 1.442695
    %v596 = vpow.pop %v595
    %v597 = vadd.f32 %v582, 1.0
    %v598 = vadd.f32 %v584, 1.0
    %v599 = vadd.f32 %v586, 1.0
    %v600 = vadd.f32 %v588, 1.0
    %v601 = vadd.f32 %v590, 1.0
    %v602 = vadd.f32 %v592, 1.0
    %v603 = vadd.f32 %v594, 1.0
    %v604 = vadd.f32 %v596, 1.0
    %v605 = vrcp.pop %v597
    %v606 = vmul.f32 1.0, %v605
    %v607 = vrcp.pop %v598
    %v608 = vmul.f32 1.0, %v607
    %v609 = vrcp.pop %v599
    %v610 = vmul.f32 1.0, %v609
    %v611 = vrcp.pop %v600
    %v612 = vmul.f32 1.0, %v611
    %v613 = vrcp.pop %v601
    %v614 = vmul.f32 1.0, %v613
    %v615 = vrcp.pop %v602
    %v616 = vmul.f32 1.0, %v615
    %v617 = vrcp.pop %v603
    %v618 = vmul.f32 1.0, %v617
    %v619 = vrcp.pop %v604
    %v620 = vmul.f32 1.0, %v619
    %v621 = vxor.u32 %v159, 2147483648
    %v622 = vxor.u32 %v165, 2147483648
    %v623 = vxor.u32 %v171, 2147483648
    %v624 = vxor.u32 %v177, 2147483648
    %v625 = vxor.u32 %v183, 2147483648
    %v626 = vxor.u32 %v189, 2147483648
    %v627 = vxor.u32 %v195, 2147483648
    %v628 = vxor.u32 %v201, 2147483648
    %v629 = vmul.f32 %v621, 1.442695
    %v630 = vpow.pop %v629
    %v631 = vmul.f32 %v622, 1.442695
    %v632 = vpow.pop %v631
    %v633 = vmul.f32 %v623, 1.442695
    %v634 = vpow.pop %v633
    %v635 = vmul.f32 %v624, 1.442695
    %v636 = vpow.pop %v635
    %v637 = vmul.f32 %v625, 1.442695
    %v638 = vpow.pop %v637
    %v639 = vmul.f32 %v626, 1.442695
    %v640 = vpow.pop %v639
    %v641 = vmul.f32 %v627, 1.442695
    %v642 = vpow.pop %v641
    %v643 = vmul.f32 %v628, 1.442695
    %v644 = vpow.pop %v643
    %v645 = vadd.f32 %v630, 1.0
    %v646 = vadd.f32 %v632, 1.0
    %v647 = vadd.f32 %v634, 1.0
    %v648 = vadd.f32 %v636, 1.0
    %v649 = vadd.f32 %v638, 1.0
    %v650 = vadd.f32 %v640, 1.0
    %v651 = vadd.f32 %v642, 1.0
    %v652 = vadd.f32 %v644, 1.0
    %v653 = vrcp.pop %v645
    %v654 = vmul.f32 1.0, %v653
    %v655 = vrcp.pop %v646
    %v656 = vmul.f32 1.0, %v655
    %v657 = vrcp.pop %v647
    %v658 = vmul.f32 1.0, %v657
    %v659 = vrcp.pop %v648
    %v660 = vmul.f32 1.0, %v659
    %v661 = vrcp.pop %v649
    %v662 = vmul.f32 1.0, %v661
    %v663 = vrcp.pop %v650
    %v664 = vmul.f32 1.0, %v663
    %v665 = vrcp.pop %v651
    %v666 = vmul.f32 1.0, %v665
    %v667 = vrcp.pop %v652
    %v668 = vmul.f32 1.0, %v667
    %v669 = vtanh.pop %v270
    %v670 = vtanh.pop %v276
    %v671 = vtanh.pop %v282
    %v672 = vtanh.pop %v288
    %v673 = vtanh.pop %v294
    %v674 = vtanh.pop %v300
    %v675 = vtanh.pop %v306
    %v676 = vtanh.pop %v312
    %v677 = vxor.u32 %v272, 2147483648
    %v678 = vxor.u32 %v278, 2147483648
    %v679 = vxor.u32 %v284, 2147483648
    %v680 = vxor.u32 %v290, 2147483648
    %v681 = vxor.u32 %v296, 2147483648
    %v682 = vxor.u32 %v302, 2147483648
    %v683 = vxor.u32 %v308, 2147483648
    %v684 = vxor.u32 %v314, 2147483648
    %v685 = vmul.f32 %v677, 1.442695
    %v686 = vpow.pop %v685
    %v687 = vmul.f32 %v678, 1.442695
    %v688 = vpow.pop %v687
    %v689 = vmul.f32 %v679, 1.442695
    %v690 = vpow.pop %v689
    %v691 = vmul.f32 %v680, 1.442695
    %v692 = vpow.pop %v691
    %v693 = vmul.f32 %v681, 1.442695
    %v694 = vpow.pop %v693
    %v695 = vmul.f32 %v682, 1.442695
    %v696 = vpow.pop %v695
    %v697 = vmul.f32 %v683, 1.442695
    %v698 = vpow.pop %v697
    %v699 = vmul.f32 %v684, 1.442695
    %v700 = vpow.pop %v699
    %v701 = vadd.f32 %v686, 1.0
    %v702 = vadd.f32 %v688, 1.0
    %v703 = vadd.f32 %v690, 1.0
    %v704 = vadd.f32 %v692, 1.0
    %v705 = vadd.f32 %v694, 1.0
    %v706 = vadd.f32 %v696, 1.0
    %v707 = vadd.f32 %v698, 1.0
    %v708 = vadd.f32 %v700, 1.0
    %v709 = vrcp.pop %v701
    %v710 = vmul.f32 1.0, %v709
    %v711 = vrcp.pop %v702
    %v712 = vmul.f32 1.0, %v711
    %v713 = vrcp.pop %v703
    %v714 = vmul.f32 1.0, %v713
    %v715 = vrcp.pop %v704
    %v716 = vmul.f32 1.0, %v715
    %v717 = vrcp.pop %v705
    %v718 = vmul.f32 1.0, %v717
    %v719 = vrcp.pop %v706
    %v720 = vmul.f32 1.0, %v719
    %v721 = vrcp.pop %v707
    %v722 = vmul.f32 1.0, %v721
    %v723 = vrcp.pop %v708
    %v724 = vmul.f32 1.0, %v723
    %v725 = vmul.f32 %v654, 0.0
    %v726 = vmul.f32 %v656, 0.0
    %v727 = vmul.f32 %v658, 0.0
    %v728 = vmul.f32 %v660, 0.0
    %v729 = vmul.f32 %v662, 0.0
    %v730 = vmul.f32 %v664, 0.0
    %v731 = vmul.f32 %v666, 0.0
    %v732 = vmul.f32 %v668, 0.0
    %v733 = vmul.f32 %v606, %v669
    %v734 = vmul.f32 %v608, %v670
    %v735 = vmul.f32 %v610, %v671
    %v736 = vmul.f32 %v612, %v672
    %v737 = vmul.f32 %v614, %v673
    %v738 = vmul.f32 %v616, %v674
    %v739 = vmul.f32 %v618, %v675
    %v740 = vmul.f32 %v620, %v676
    %v741 = vadd.f32 %v725, %v733
    %v742 = vadd.f32 %v726, %v734
    %v743 = vadd.f32 %v727, %v735
    %v744 = vadd.f32 %v728, %v736
    %v745 = vadd.f32 %v729, %v737
    %v746 = vadd.f32 %v730, %v738
    %v747 = vadd.f32 %v731, %v739
    %v748 = vadd.f32 %v732, %v740
    %v749 = vtanh.pop %v741
    %v750 = vtanh.pop %v742
    %v751 = vtanh.pop %v743
    %v752 = vtanh.pop %v744
    %v753 = vtanh.pop %v745
    %v754 = vtanh.pop %v746
    %v755 = vtanh.pop %v747
    %v756 = vtanh.pop %v748
    %v757 = vmul.f32 %v710, %v749
    %v758 = vmul.f32 %v712, %v750
    %v759 = vmul.f32 %v714, %v751
    %v760 = vmul.f32 %v716, %v752
    %v761 = vmul.f32 %v718, %v753
    %v762 = vmul.f32 %v720, %v754
    %v763 = vmul.f32 %v722, %v755
    %v764 = vmul.f32 %v724, %v756
    %v773 = vrot.slane %v758, 7
    %vm774 = vcmask 1041409
    %v775 = vsel %vm774, %v773, %v757
    %v776 = vrot.slane %v759, 6
    %vm777 = vcmask 1042434
    %v778 = vsel %vm777, %v776, %v775
    %v779 = vrot.slane %v760, 5
    %vm780 = vcmask 1043459
    %v781 = vsel %vm780, %v779, %v778
    %v782 = vrot.slane %v761, 4
    %vm783 = vcmask 1044484
    %v784 = vsel %vm783, %v782, %v781
    %v785 = vrot.slane %v762, 3
    %vm786 = vcmask 1045509
    %v787 = vsel %vm786, %v785, %v784
    %v788 = vrot.slane %v763, 2
    %vm789 = vcmask 1046534
    %v790 = vsel %vm789, %v788, %v787
    %v791 = vrot.slane %v764, 1
    %vm792 = vcmask 1047559
    %v793 = vsel %vm792, %v791, %v790
    %795 = vmatprep.subr.mxu0 %v317
    %796 = vmatpush1.msra.mxu0 %v316
    %797 = vmatprep.subr.mxu0 %v325
    %798 = vmatpush1.msra.mxu0 %v324
    %799 = vmatprep.subr.mxu0 %v333
    %800 = vmatpush1.msra.mxu0 %v332
    %801 = vmatprep.subr.mxu0 %v341
    %802 = vmatpush1.msra.mxu0 %v340
    %803 = vmatprep.subr.mxu0 %v349
    %804 = vmatpush1.msra.mxu0 %v348
    %805 = vmatprep.subr.mxu0 %v357
    %806 = vmatpush1.msra.mxu0 %v356
    %807 = vmatprep.subr.mxu0 %v365
    %808 = vmatpush1.msra.mxu0 %v364
    %809 = vmatprep.subr.mxu0 %v373
    %810 = vmatpush1.msra.mxu0 %v372
    %811 = vmatprep.subr.mxu0 %v381
    %812 = vmatpush1.msra.mxu0 %v380
    %813 = vmatprep.subr.mxu0 %v389
    %814 = vmatpush1.msra.mxu0 %v388
    %815 = vmatprep.subr.mxu0 %v397
    %816 = vmatpush1.msra.mxu0 %v396
    %817 = vmatprep.subr.mxu0 %v405
    %818 = vmatpush1.msra.mxu0 %v404
    %819 = vmatprep.subr.mxu0 %v413
    %820 = vmatpush1.msra.mxu0 %v412
    %821 = vmatprep.subr.mxu0 %v421
    %822 = vmatpush1.msra.mxu0 %v420
    %823 = vmatprep.subr.mxu0 %v429
    %824 = vmatpush1.msra.mxu0 %v428
    %825 = vmatprep.subr.mxu0 %v437
    %826 = vmatpush1.msra.mxu0 %v436
    %827 = vmatprep.subr.mxu0 %v445
    %828 = vmatpush1.msra.mxu0 %v444
    %829 = vmatprep.subr.mxu0 %v453
    %830 = vmatpush1.msra.mxu0 %v452
    %831 = vmatprep.subr.mxu0 %v461
    %832 = vmatpush1.msra.mxu0 %v460
    %833 = vmatprep.subr.mxu0 %v469
    %834 = vmatpush1.msra.mxu0 %v468
    %835 = vmatprep.subr.mxu0 %v477
    %836 = vmatpush1.msra.mxu0 %v476
    %837 = vmatprep.subr.mxu0 %v485
    %838 = vmatpush1.msra.mxu0 %v484
    %839 = vmatprep.subr.mxu0 %v493
    %840 = vmatpush1.msra.mxu0 %v492
    %841 = vmatprep.subr.mxu0 %v501
    %842 = vmatpush1.msra.mxu0 %v500
    %843 = vmatprep.subr.mxu0 %v509
    %844 = vmatpush1.msra.mxu0 %v508
    %845 = vmatprep.subr.mxu0 %v517
    %846 = vmatpush1.msra.mxu0 %v516
    %847 = vmatprep.subr.mxu0 %v525
    %848 = vmatpush1.msra.mxu0 %v524
    %849 = vmatprep.subr.mxu0 %v533
    %850 = vmatpush1.msra.mxu0 %v532
    %851 = vmatprep.subr.mxu0 %v541
    %852 = vmatpush1.msra.mxu0 %v540
    %853 = vmatprep.subr.mxu0 %v549
    %854 = vmatpush1.msra.mxu0 %v548
    %855 = vmatprep.subr.mxu0 %v557
    %856 = vmatpush1.msra.mxu0 %v556
    %857 = vmatprep.subr.mxu0 %v565
    %858 = vmatpush1.msra.mxu0 %v564
    %859 = vmatprep.mubr.f32.mxu0 0.0
    %860 = vmatmul.mubr.f32.gmra.mrb[0].mxu0 %v793
    %v861 = vpop.f32.mrb[0].mxu0
    %v862 = vadd.f32 0.0, %v861
    %v863 = vpop.f32.mrb[0].mxu0
    %v864 = vadd.f32 0.0, %v863
    %865 = vdwg.mxu0
    %866 = vmatprep.subr.mxu0 %v319
    %867 = vmatpush1.msra.mxu0 %v318
    %868 = vmatprep.subr.mxu0 %v327
    %869 = vmatpush1.msra.mxu0 %v326
    %870 = vmatprep.subr.mxu0 %v335
    %871 = vmatpush1.msra.mxu0 %v334
    %872 = vmatprep.subr.mxu0 %v343
    %873 = vmatpush1.msra.mxu0 %v342
    %874 = vmatprep.subr.mxu0 %v351
    %875 = vmatpush1.msra.mxu0 %v350
    %876 = vmatprep.subr.mxu0 %v359
    %877 = vmatpush1.msra.mxu0 %v358
    %878 = vmatprep.subr.mxu0 %v367
    %879 = vmatpush1.msra.mxu0 %v366
    %880 = vmatprep.subr.mxu0 %v375
    %881 = vmatpush1.msra.mxu0 %v374
    %882 = vmatprep.subr.mxu0 %v383
    %883 = vmatpush1.msra.mxu0 %v382
    %884 = vmatprep.subr.mxu0 %v391
    %885 = vmatpush1.msra.mxu0 %v390
    %886 = vmatprep.subr.mxu0 %v399
    %887 = vmatpush1.msra.mxu0 %v398
    %888 = vmatprep.subr.mxu0 %v407
    %889 = vmatpush1.msra.mxu0 %v406
    %890 = vmatprep.subr.mxu0 %v415
    %891 = vmatpush1.msra.mxu0 %v414
    %892 = vmatprep.subr.mxu0 %v423
    %893 = vmatpush1.msra.mxu0 %v422
    %894 = vmatprep.subr.mxu0 %v431
    %895 = vmatpush1.msra.mxu0 %v430
    %896 = vmatprep.subr.mxu0 %v439
    %897 = vmatpush1.msra.mxu0 %v438
    %898 = vmatprep.subr.mxu0 %v447
    %899 = vmatpush1.msra.mxu0 %v446
    %900 = vmatprep.subr.mxu0 %v455
    %901 = vmatpush1.msra.mxu0 %v454
    %902 = vmatprep.subr.mxu0 %v463
    %903 = vmatpush1.msra.mxu0 %v462
    %904 = vmatprep.subr.mxu0 %v471
    %905 = vmatpush1.msra.mxu0 %v470
    %906 = vmatprep.subr.mxu0 %v479
    %907 = vmatpush1.msra.mxu0 %v478
    %908 = vmatprep.subr.mxu0 %v487
    %909 = vmatpush1.msra.mxu0 %v486
    %910 = vmatprep.subr.mxu0 %v495
    %911 = vmatpush1.msra.mxu0 %v494
    %912 = vmatprep.subr.mxu0 %v503
    %913 = vmatpush1.msra.mxu0 %v502
    %914 = vmatprep.subr.mxu0 %v511
    %915 = vmatpush1.msra.mxu0 %v510
    %916 = vmatprep.subr.mxu0 %v519
    %917 = vmatpush1.msra.mxu0 %v518
    %918 = vmatprep.subr.mxu0 %v527
    %919 = vmatpush1.msra.mxu0 %v526
    %920 = vmatprep.subr.mxu0 %v535
    %921 = vmatpush1.msra.mxu0 %v534
    %922 = vmatprep.subr.mxu0 %v543
    %923 = vmatpush1.msra.mxu0 %v542
    %924 = vmatprep.subr.mxu0 %v551
    %925 = vmatpush1.msra.mxu0 %v550
    %926 = vmatprep.subr.mxu0 %v559
    %927 = vmatpush1.msra.mxu0 %v558
    %928 = vmatprep.subr.mxu0 %v567
    %929 = vmatpush1.msra.mxu0 %v566
    %930 = vmatprep.mubr.f32.mxu0 0.0
    %931 = vmatmul.mubr.f32.gmra.mrb[0].mxu0 %v793
    %v932 = vpop.f32.mrb[0].mxu0
    %v933 = vadd.f32 0.0, %v932
    %v934 = vpop.f32.mrb[0].mxu0
    %v935 = vadd.f32 0.0, %v934
    %936 = vdwg.mxu0
    %937 = vmatprep.subr.mxu0 %v321
    %938 = vmatpush1.msra.mxu0 %v320
    %939 = vmatprep.subr.mxu0 %v329
    %940 = vmatpush1.msra.mxu0 %v328
    %941 = vmatprep.subr.mxu0 %v337
    %942 = vmatpush1.msra.mxu0 %v336
    %943 = vmatprep.subr.mxu0 %v345
    %944 = vmatpush1.msra.mxu0 %v344
    %945 = vmatprep.subr.mxu0 %v353
    %946 = vmatpush1.msra.mxu0 %v352
    %947 = vmatprep.subr.mxu0 %v361
    %948 = vmatpush1.msra.mxu0 %v360
    %949 = vmatprep.subr.mxu0 %v369
    %950 = vmatpush1.msra.mxu0 %v368
    %951 = vmatprep.subr.mxu0 %v377
    %952 = vmatpush1.msra.mxu0 %v376
    %953 = vmatprep.subr.mxu0 %v385
    %954 = vmatpush1.msra.mxu0 %v384
    %955 = vmatprep.subr.mxu0 %v393
    %956 = vmatpush1.msra.mxu0 %v392
    %957 = vmatprep.subr.mxu0 %v401
    %958 = vmatpush1.msra.mxu0 %v400
    %959 = vmatprep.subr.mxu0 %v409
    %960 = vmatpush1.msra.mxu0 %v408
    %961 = vmatprep.subr.mxu0 %v417
    %962 = vmatpush1.msra.mxu0 %v416
    %963 = vmatprep.subr.mxu0 %v425
    %964 = vmatpush1.msra.mxu0 %v424
    %965 = vmatprep.subr.mxu0 %v433
    %966 = vmatpush1.msra.mxu0 %v432
    %967 = vmatprep.subr.mxu0 %v441
    %968 = vmatpush1.msra.mxu0 %v440
    %969 = vmatprep.subr.mxu0 %v449
    %970 = vmatpush1.msra.mxu0 %v448
    %971 = vmatprep.subr.mxu0 %v457
    %972 = vmatpush1.msra.mxu0 %v456
    %973 = vmatprep.subr.mxu0 %v465
    %974 = vmatpush1.msra.mxu0 %v464
    %975 = vmatprep.subr.mxu0 %v473
    %976 = vmatpush1.msra.mxu0 %v472
    %977 = vmatprep.subr.mxu0 %v481
    %978 = vmatpush1.msra.mxu0 %v480
    %979 = vmatprep.subr.mxu0 %v489
    %980 = vmatpush1.msra.mxu0 %v488
    %981 = vmatprep.subr.mxu0 %v497
    %982 = vmatpush1.msra.mxu0 %v496
    %983 = vmatprep.subr.mxu0 %v505
    %984 = vmatpush1.msra.mxu0 %v504
    %985 = vmatprep.subr.mxu0 %v513
    %986 = vmatpush1.msra.mxu0 %v512
    %987 = vmatprep.subr.mxu0 %v521
    %988 = vmatpush1.msra.mxu0 %v520
    %989 = vmatprep.subr.mxu0 %v529
    %990 = vmatpush1.msra.mxu0 %v528
    %991 = vmatprep.subr.mxu0 %v537
    %992 = vmatpush1.msra.mxu0 %v536
    %993 = vmatprep.subr.mxu0 %v545
    %994 = vmatpush1.msra.mxu0 %v544
    %995 = vmatprep.subr.mxu0 %v553
    %996 = vmatpush1.msra.mxu0 %v552
    %997 = vmatprep.subr.mxu0 %v561
    %998 = vmatpush1.msra.mxu0 %v560
    %999 = vmatprep.subr.mxu0 %v569
    %1000 = vmatpush1.msra.mxu0 %v568
    %1001 = vmatprep.mubr.f32.mxu0 0.0
    %1002 = vmatmul.mubr.f32.gmra.mrb[0].mxu0 %v793
    %v1003 = vpop.f32.mrb[0].mxu0
    %v1004 = vadd.f32 0.0, %v1003
    %v1005 = vpop.f32.mrb[0].mxu0
    %v1006 = vadd.f32 0.0, %v1005
    %1007 = vdwg.mxu0
    %1008 = vmatprep.subr.mxu0 %v323
    %1009 = vmatpush1.msra.mxu0 %v322
    %1010 = vmatprep.subr.mxu0 %v331
    %1011 = vmatpush1.msra.mxu0 %v330
    %1012 = vmatprep.subr.mxu0 %v339
    %1013 = vmatpush1.msra.mxu0 %v338
    %1014 = vmatprep.subr.mxu0 %v347
    %1015 = vmatpush1.msra.mxu0 %v346
    %1016 = vmatprep.subr.mxu0 %v355
    %1017 = vmatpush1.msra.mxu0 %v354
    %1018 = vmatprep.subr.mxu0 %v363
    %1019 = vmatpush1.msra.mxu0 %v362
    %1020 = vmatprep.subr.mxu0 %v371
    %1021 = vmatpush1.msra.mxu0 %v370
    %1022 = vmatprep.subr.mxu0 %v379
    %1023 = vmatpush1.msra.mxu0 %v378
    %1024 = vmatprep.subr.mxu0 %v387
    %1025 = vmatpush1.msra.mxu0 %v386
    %1026 = vmatprep.subr.mxu0 %v395
    %1027 = vmatpush1.msra.mxu0 %v394
    %1028 = vmatprep.subr.mxu0 %v403
    %1029 = vmatpush1.msra.mxu0 %v402
    %1030 = vmatprep.subr.mxu0 %v411
    %1031 = vmatpush1.msra.mxu0 %v410
    %1032 = vmatprep.subr.mxu0 %v419
    %1033 = vmatpush1.msra.mxu0 %v418
    %1034 = vmatprep.subr.mxu0 %v427
    %1035 = vmatpush1.msra.mxu0 %v426
    %1036 = vmatprep.subr.mxu0 %v435
    %1037 = vmatpush1.msra.mxu0 %v434
    %1038 = vmatprep.subr.mxu0 %v443
    %1039 = vmatpush1.msra.mxu0 %v442
    %1040 = vmatprep.subr.mxu0 %v451
    %1041 = vmatpush1.msra.mxu0 %v450
    %1042 = vmatprep.subr.mxu0 %v459
    %1043 = vmatpush1.msra.mxu0 %v458
    %1044 = vmatprep.subr.mxu0 %v467
    %1045 = vmatpush1.msra.mxu0 %v466
    %1046 = vmatprep.subr.mxu0 %v475
    %1047 = vmatpush1.msra.mxu0 %v474
    %1048 = vmatprep.subr.mxu0 %v483
    %1049 = vmatpush1.msra.mxu0 %v482
    %1050 = vmatprep.subr.mxu0 %v491
    %1051 = vmatpush1.msra.mxu0 %v490
    %1052 = vmatprep.subr.mxu0 %v499
    %1053 = vmatpush1.msra.mxu0 %v498
    %1054 = vmatprep.subr.mxu0 %v507
    %1055 = vmatpush1.msra.mxu0 %v506
    %1056 = vmatprep.subr.mxu0 %v515
    %1057 = vmatpush1.msra.mxu0 %v514
    %1058 = vmatprep.subr.mxu0 %v523
    %1059 = vmatpush1.msra.mxu0 %v522
    %1060 = vmatprep.subr.mxu0 %v531
    %1061 = vmatpush1.msra.mxu0 %v530
    %1062 = vmatprep.subr.mxu0 %v539
    %1063 = vmatpush1.msra.mxu0 %v538
    %1064 = vmatprep.subr.mxu0 %v547
    %1065 = vmatpush1.msra.mxu0 %v546
    %1066 = vmatprep.subr.mxu0 %v555
    %1067 = vmatpush1.msra.mxu0 %v554
    %1068 = vmatprep.subr.mxu0 %v563
    %1069 = vmatpush1.msra.mxu0 %v562
    %1070 = vmatprep.subr.mxu0 %v571
    %1071 = vmatpush1.msra.mxu0 %v570
    %1072 = vmatprep.mubr.f32.mxu0 0.0
    %1073 = vmatmul.mubr.f32.gmra.mrb[0].mxu0 %v793
    %v1074 = vpop.f32.mrb[0].mxu0
    %v1075 = vadd.f32 0.0, %v1074
    %v1076 = vpop.f32.mrb[0].mxu0
    %v1077 = vadd.f32 0.0, %v1076
    %1078 = vdwg.mxu0
    %v1083 = vrot.slane %v862, 7
    %v1084 = vrot.slane %v864, 7
    %v1085 = vrot.slane %v933, 7
    %v1086 = vrot.slane %v935, 7
    %v1087 = vrot.slane %v862, 1
    %v1088 = vrot.slane %v864, 1
    %v1089 = vrot.slane %v933, 1
    %v1090 = vrot.slane %v935, 1
    %v1091 = vrot.slane %v862, 2
    %v1092 = vrot.slane %v864, 2
    %v1093 = vrot.slane %v933, 2
    %v1094 = vrot.slane %v935, 2
    %v1095 = vrot.slane %v862, 3
    %v1096 = vrot.slane %v864, 3
    %v1097 = vrot.slane %v933, 3
    %v1098 = vrot.slane %v935, 3
    %v1099 = vrot.slane %v862, 4
    %v1100 = vrot.slane %v864, 4
    %v1101 = vrot.slane %v933, 4
    %v1102 = vrot.slane %v935, 4
    %v1103 = vrot.slane %v862, 5
    %v1104 = vrot.slane %v864, 5
    %v1105 = vrot.slane %v933, 5
    %v1106 = vrot.slane %v935, 5
    %v1107 = vrot.slane %v862, 6
    %v1108 = vrot.slane %v864, 6
    %v1109 = vrot.slane %v933, 6
    %v1110 = vrot.slane %v935, 6
    %v1143 = vadd.f32 %v157, %v1083
    %v1144 = vadd.f32 %v159, %v1084
    %v1145 = vadd.f32 %v270, %v1085
    %v1146 = vadd.f32 %v272, %v1086
    %v1147 = vadd.f32 %v163, %v862
    %v1148 = vadd.f32 %v165, %v864
    %v1149 = vadd.f32 %v276, %v933
    %v1150 = vadd.f32 %v278, %v935
    %v1151 = vadd.f32 %v169, %v1087
    %v1152 = vadd.f32 %v171, %v1088
    %v1153 = vadd.f32 %v282, %v1089
    %v1154 = vadd.f32 %v284, %v1090
    %v1155 = vadd.f32 %v175, %v1091
    %v1156 = vadd.f32 %v177, %v1092
    %v1157 = vadd.f32 %v288, %v1093
    %v1158 = vadd.f32 %v290, %v1094
    %v1159 = vadd.f32 %v181, %v1095
    %v1160 = vadd.f32 %v183, %v1096
    %v1161 = vadd.f32 %v294, %v1097
    %v1162 = vadd.f32 %v296, %v1098
    %v1163 = vadd.f32 %v187, %v1099
    %v1164 = vadd.f32 %v189, %v1100
    %v1165 = vadd.f32 %v300, %v1101
    %v1166 = vadd.f32 %v302, %v1102
    %v1167 = vadd.f32 %v193, %v1103
    %v1168 = vadd.f32 %v195, %v1104
    %v1169 = vadd.f32 %v306, %v1105
    %v1170 = vadd.f32 %v308, %v1106
    %v1171 = vadd.f32 %v199, %v1107
    %v1172 = vadd.f32 %v201, %v1108
    %v1173 = vadd.f32 %v312, %v1109
    %v1174 = vadd.f32 %v314, %v1110
    %v1176 = vlaneseq
    %v1177 = vshrl.u32 %v1176, 7
    %v1178 = vsub.s32 0, %v1177
    %v1179 = vrot.slane %v572, %v1178
    %v1180 = vlaneseq
    %v1181 = vshrl.u32 %v1180, 7
    %v1182 = vsub.s32 1, %v1181
    %v1183 = vrot.slane %v572, %v1182
    %v1184 = vlaneseq
    %v1185 = vshrl.u32 %v1184, 7
    %v1186 = vsub.s32 2, %v1185
    %v1187 = vrot.slane %v572, %v1186
    %v1188 = vlaneseq
    %v1189 = vshrl.u32 %v1188, 7
    %v1190 = vsub.s32 3, %v1189
    %v1191 = vrot.slane %v572, %v1190
    %v1196 = vadd.f32 %v1004, %v1179
    %v1197 = vadd.f32 %v1006, %v1183
    %v1198 = vadd.f32 %v1075, %v1187
    %v1199 = vadd.f32 %v1077, %v1191
    %v1200 = vxor.u32 %v1143, 2147483648
    %v1201 = vxor.u32 %v1147, 2147483648
    %v1202 = vxor.u32 %v1151, 2147483648
    %v1203 = vxor.u32 %v1155, 2147483648
    %v1204 = vxor.u32 %v1159, 2147483648
    %v1205 = vxor.u32 %v1163, 2147483648
    %v1206 = vxor.u32 %v1167, 2147483648
    %v1207 = vxor.u32 %v1171, 2147483648
    %v1208 = vmul.f32 %v1200, 1.442695
    %v1209 = vpow.pop %v1208
    %v1210 = vmul.f32 %v1201, 1.442695
    %v1211 = vpow.pop %v1210
    %v1212 = vmul.f32 %v1202, 1.442695
    %v1213 = vpow.pop %v1212
    %v1214 = vmul.f32 %v1203, 1.442695
    %v1215 = vpow.pop %v1214
    %v1216 = vmul.f32 %v1204, 1.442695
    %v1217 = vpow.pop %v1216
    %v1218 = vmul.f32 %v1205, 1.442695
    %v1219 = vpow.pop %v1218
    %v1220 = vmul.f32 %v1206, 1.442695
    %v1221 = vpow.pop %v1220
    %v1222 = vmul.f32 %v1207, 1.442695
    %v1223 = vpow.pop %v1222
    %v1224 = vadd.f32 %v1209, 1.0
    %v1225 = vadd.f32 %v1211, 1.0
    %v1226 = vadd.f32 %v1213, 1.0
    %v1227 = vadd.f32 %v1215, 1.0
    %v1228 = vadd.f32 %v1217, 1.0
    %v1229 = vadd.f32 %v1219, 1.0
    %v1230 = vadd.f32 %v1221, 1.0
    %v1231 = vadd.f32 %v1223, 1.0
    %v1232 = vrcp.pop %v1224
    %v1233 = vmul.f32 1.0, %v1232
    %v1234 = vrcp.pop %v1225
    %v1235 = vmul.f32 1.0, %v1234
    %v1236 = vrcp.pop %v1226
    %v1237 = vmul.f32 1.0, %v1236
    %v1238 = vrcp.pop %v1227
    %v1239 = vmul.f32 1.0, %v1238
    %v1240 = vrcp.pop %v1228
    %v1241 = vmul.f32 1.0, %v1240
    %v1242 = vrcp.pop %v1229
    %v1243 = vmul.f32 1.0, %v1242
    %v1244 = vrcp.pop %v1230
    %v1245 = vmul.f32 1.0, %v1244
    %v1246 = vrcp.pop %v1231
    %v1247 = vmul.f32 1.0, %v1246
    %v1248 = vxor.u32 %v1144, 2147483648
    %v1249 = vxor.u32 %v1148, 2147483648
    %v1250 = vxor.u32 %v1152, 2147483648
    %v1251 = vxor.u32 %v1156, 2147483648
    %v1252 = vxor.u32 %v1160, 2147483648
    %v1253 = vxor.u32 %v1164, 2147483648
    %v1254 = vxor.u32 %v1168, 2147483648
    %v1255 = vxor.u32 %v1172, 2147483648
    %v1256 = vmul.f32 %v1248, 1.442695
    %v1257 = vpow.pop %v1256
    %v1258 = vmul.f32 %v1249, 1.442695
    %v1259 = vpow.pop %v1258
    %v1260 = vmul.f32 %v1250, 1.442695
    %v1261 = vpow.pop %v1260
    %v1262 = vmul.f32 %v1251, 1.442695
    %v1263 = vpow.pop %v1262
    %v1264 = vmul.f32 %v1252, 1.442695
    %v1265 = vpow.pop %v1264
    %v1266 = vmul.f32 %v1253, 1.442695
    %v1267 = vpow.pop %v1266
    %v1268 = vmul.f32 %v1254, 1.442695
    %v1269 = vpow.pop %v1268
    %v1270 = vmul.f32 %v1255, 1.442695
    %v1271 = vpow.pop %v1270
    %v1272 = vadd.f32 %v1257, 1.0
    %v1273 = vadd.f32 %v1259, 1.0
    %v1274 = vadd.f32 %v1261, 1.0
    %v1275 = vadd.f32 %v1263, 1.0
    %v1276 = vadd.f32 %v1265, 1.0
    %v1277 = vadd.f32 %v1267, 1.0
    %v1278 = vadd.f32 %v1269, 1.0
    %v1279 = vadd.f32 %v1271, 1.0
    %v1280 = vrcp.pop %v1272
    %v1281 = vmul.f32 1.0, %v1280
    %v1282 = vrcp.pop %v1273
    %v1283 = vmul.f32 1.0, %v1282
    %v1284 = vrcp.pop %v1274
    %v1285 = vmul.f32 1.0, %v1284
    %v1286 = vrcp.pop %v1275
    %v1287 = vmul.f32 1.0, %v1286
    %v1288 = vrcp.pop %v1276
    %v1289 = vmul.f32 1.0, %v1288
    %v1290 = vrcp.pop %v1277
    %v1291 = vmul.f32 1.0, %v1290
    %v1292 = vrcp.pop %v1278
    %v1293 = vmul.f32 1.0, %v1292
    %v1294 = vrcp.pop %v1279
    %v1295 = vmul.f32 1.0, %v1294
    %v1296 = vtanh.pop %v1145
    %v1297 = vtanh.pop %v1149
    %v1298 = vtanh.pop %v1153
    %v1299 = vtanh.pop %v1157
    %v1300 = vtanh.pop %v1161
    %v1301 = vtanh.pop %v1165
    %v1302 = vtanh.pop %v1169
    %v1303 = vtanh.pop %v1173
    %v1304 = vxor.u32 %v1146, 2147483648
    %v1305 = vxor.u32 %v1150, 2147483648
    %v1306 = vxor.u32 %v1154, 2147483648
    %v1307 = vxor.u32 %v1158, 2147483648
    %v1308 = vxor.u32 %v1162, 2147483648
    %v1309 = vxor.u32 %v1166, 2147483648
    %v1310 = vxor.u32 %v1170, 2147483648
    %v1311 = vxor.u32 %v1174, 2147483648
    %v1312 = vmul.f32 %v1304, 1.442695
    %v1313 = vpow.pop %v1312
    %v1314 = vmul.f32 %v1305, 1.442695
    %v1315 = vpow.pop %v1314
    %v1316 = vmul.f32 %v1306, 1.442695
    %v1317 = vpow.pop %v1316
    %v1318 = vmul.f32 %v1307, 1.442695
    %v1319 = vpow.pop %v1318
    %v1320 = vmul.f32 %v1308, 1.442695
    %v1321 = vpow.pop %v1320
    %v1322 = vmul.f32 %v1309, 1.442695
    %v1323 = vpow.pop %v1322
    %v1324 = vmul.f32 %v1310, 1.442695
    %v1325 = vpow.pop %v1324
    %v1326 = vmul.f32 %v1311, 1.442695
    %v1327 = vpow.pop %v1326
    %v1328 = vadd.f32 %v1313, 1.0
    %v1329 = vadd.f32 %v1315, 1.0
    %v1330 = vadd.f32 %v1317, 1.0
    %v1331 = vadd.f32 %v1319, 1.0
    %v1332 = vadd.f32 %v1321, 1.0
    %v1333 = vadd.f32 %v1323, 1.0
    %v1334 = vadd.f32 %v1325, 1.0
    %v1335 = vadd.f32 %v1327, 1.0
    %v1336 = vrcp.pop %v1328
    %v1337 = vmul.f32 1.0, %v1336
    %v1338 = vrcp.pop %v1329
    %v1339 = vmul.f32 1.0, %v1338
    %v1340 = vrcp.pop %v1330
    %v1341 = vmul.f32 1.0, %v1340
    %v1342 = vrcp.pop %v1331
    %v1343 = vmul.f32 1.0, %v1342
    %v1344 = vrcp.pop %v1332
    %v1345 = vmul.f32 1.0, %v1344
    %v1346 = vrcp.pop %v1333
    %v1347 = vmul.f32 1.0, %v1346
    %v1348 = vrcp.pop %v1334
    %v1349 = vmul.f32 1.0, %v1348
    %v1350 = vrcp.pop %v1335
    %v1351 = vmul.f32 1.0, %v1350
    %v1360 = vrot.slane %v741, 7
    %v1361 = vrot.slane %v742, 7
    %v1362 = vrot.slane %v743, 7
    %v1363 = vrot.slane %v744, 7
    %v1364 = vrot.slane %v745, 7
    %v1365 = vrot.slane %v746, 7
    %v1366 = vrot.slane %v747, 7
    %v1367 = vrot.slane %v748, 7
    %v1376 = vmul.f32 %v1281, %v1360
    %v1377 = vmul.f32 %v1283, %v1361
    %v1378 = vmul.f32 %v1285, %v1362
    %v1379 = vmul.f32 %v1287, %v1363
    %v1380 = vmul.f32 %v1289, %v1364
    %v1381 = vmul.f32 %v1291, %v1365
    %v1382 = vmul.f32 %v1293, %v1366
    %v1383 = vmul.f32 %v1295, %v1367
    %v1384 = vmul.f32 %v1233, %v1296
    %v1385 = vmul.f32 %v1235, %v1297
    %v1386 = vmul.f32 %v1237, %v1298
    %v1387 = vmul.f32 %v1239, %v1299
    %v1388 = vmul.f32 %v1241, %v1300
    %v1389 = vmul.f32 %v1243, %v1301
    %v1390 = vmul.f32 %v1245, %v1302
    %v1391 = vmul.f32 %v1247, %v1303
    %v1392 = vadd.f32 %v1376, %v1384
    %v1393 = vadd.f32 %v1377, %v1385
    %v1394 = vadd.f32 %v1378, %v1386
    %v1395 = vadd.f32 %v1379, %v1387
    %v1396 = vadd.f32 %v1380, %v1388
    %v1397 = vadd.f32 %v1381, %v1389
    %v1398 = vadd.f32 %v1382, %v1390
    %v1399 = vadd.f32 %v1383, %v1391
    %v1400 = vtanh.pop %v1392
    %v1401 = vtanh.pop %v1393
    %v1402 = vtanh.pop %v1394
    %v1403 = vtanh.pop %v1395
    %v1404 = vtanh.pop %v1396
    %v1405 = vtanh.pop %v1397
    %v1406 = vtanh.pop %v1398
    %v1407 = vtanh.pop %v1399
    %v1408 = vmul.f32 %v1337, %v1400
    %v1409 = vmul.f32 %v1339, %v1401
    %v1410 = vmul.f32 %v1341, %v1402
    %v1411 = vmul.f32 %v1343, %v1403
    %v1412 = vmul.f32 %v1345, %v1404
    %v1413 = vmul.f32 %v1347, %v1405
    %v1414 = vmul.f32 %v1349, %v1406
    %v1415 = vmul.f32 %v1351, %v1407
    %v1416 = vxor.u32 %v1196, 2147483648
    %v1417 = vmul.f32 %v1416, 1.442695
    %v1418 = vpow.pop %v1417
    %v1419 = vadd.f32 %v1418, 1.0
    %v1420 = vrcp.pop %v1419
    %v1421 = vmul.f32 1.0, %v1420
    %v1422 = vxor.u32 %v1197, 2147483648
    %v1423 = vmul.f32 %v1422, 1.442695
    %v1424 = vpow.pop %v1423
    %v1425 = vadd.f32 %v1424, 1.0
    %v1426 = vrcp.pop %v1425
    %v1427 = vmul.f32 1.0, %v1426
    %v1428 = vtanh.pop %v1198
    %v1429 = vxor.u32 %v1199, 2147483648
    %v1430 = vmul.f32 %v1429, 1.442695
    %v1431 = vpow.pop %v1430
    %v1432 = vadd.f32 %v1431, 1.0
    %v1433 = vrcp.pop %v1432
    %v1434 = vmul.f32 1.0, %v1433
    %v1435 = vmul.f32 %v1427, 0.0
    %v1436 = vmul.f32 %v1421, %v1428
    %v1437 = vadd.f32 %v1435, %v1436
    %v1438 = vtanh.pop %v1437
    %v1439 = vmul.f32 %v1434, %v1438
    %v1448 = vrot.slane %v1409, 7
    %v1449 = vsel %vm777, %v1448, %v1408
    %v1450 = vrot.slane %v1410, 6
    %v1451 = vsel %vm780, %v1450, %v1449
    %v1452 = vrot.slane %v1411, 5
    %v1453 = vsel %vm783, %v1452, %v1451
    %v1454 = vrot.slane %v1412, 4
    %v1455 = vsel %vm786, %v1454, %v1453
    %v1456 = vrot.slane %v1413, 3
    %v1457 = vsel %vm789, %v1456, %v1455
    %v1458 = vrot.slane %v1414, 2
    %v1459 = vsel %vm792, %v1458, %v1457
    %v1460 = vrot.slane %v1415, 1
    %v1462 = vrot.slane %v1439, 7
    %vm1463 = vcmask 1046528
    %v1464 = vrot.slane %v1459, 1
    %v1465 = vrot.slane %v1460, 1
    %v1466 = vsel %vm1463, %v1464, %v1465
    %v1467 = vrot.slane %v1462, 1
    %v1468 = vsel %vm1463, %v1467, %v1467
    %1471 = vmatprep.subr.mxu0 %v317
    %1472 = vmatpush1.msra.mxu0 %v316
    %1473 = vmatprep.subr.mxu0 %v325
    %1474 = vmatpush1.msra.mxu0 %v324
    %1475 = vmatprep.subr.mxu0 %v333
    %1476 = vmatpush1.msra.mxu0 %v332
    %1477 = vmatprep.subr.mxu0 %v341
    %1478 = vmatpush1.msra.mxu0 %v340
    %1479 = vmatprep.subr.mxu0 %v349
    %1480 = vmatpush1.msra.mxu0 %v348
    %1481 = vmatprep.subr.mxu0 %v357
    %1482 = vmatpush1.msra.mxu0 %v356
    %1483 = vmatprep.subr.mxu0 %v365
    %1484 = vmatpush1.msra.mxu0 %v364
    %1485 = vmatprep.subr.mxu0 %v373
    %1486 = vmatpush1.msra.mxu0 %v372
    %1487 = vmatprep.subr.mxu0 %v381
    %1488 = vmatpush1.msra.mxu0 %v380
    %1489 = vmatprep.subr.mxu0 %v389
    %1490 = vmatpush1.msra.mxu0 %v388
    %1491 = vmatprep.subr.mxu0 %v397
    %1492 = vmatpush1.msra.mxu0 %v396
    %1493 = vmatprep.subr.mxu0 %v405
    %1494 = vmatpush1.msra.mxu0 %v404
    %1495 = vmatprep.subr.mxu0 %v413
    %1496 = vmatpush1.msra.mxu0 %v412
    %1497 = vmatprep.subr.mxu0 %v421
    %1498 = vmatpush1.msra.mxu0 %v420
    %1499 = vmatprep.subr.mxu0 %v429
    %1500 = vmatpush1.msra.mxu0 %v428
    %1501 = vmatprep.subr.mxu0 %v437
    %1502 = vmatpush1.msra.mxu0 %v436
    %1503 = vmatprep.subr.mxu0 %v445
    %1504 = vmatpush1.msra.mxu0 %v444
    %1505 = vmatprep.subr.mxu0 %v453
    %1506 = vmatpush1.msra.mxu0 %v452
    %1507 = vmatprep.subr.mxu0 %v461
    %1508 = vmatpush1.msra.mxu0 %v460
    %1509 = vmatprep.subr.mxu0 %v469
    %1510 = vmatpush1.msra.mxu0 %v468
    %1511 = vmatprep.subr.mxu0 %v477
    %1512 = vmatpush1.msra.mxu0 %v476
    %1513 = vmatprep.subr.mxu0 %v485
    %1514 = vmatpush1.msra.mxu0 %v484
    %1515 = vmatprep.subr.mxu0 %v493
    %1516 = vmatpush1.msra.mxu0 %v492
    %1517 = vmatprep.subr.mxu0 %v501
    %1518 = vmatpush1.msra.mxu0 %v500
    %1519 = vmatprep.subr.mxu0 %v509
    %1520 = vmatpush1.msra.mxu0 %v508
    %1521 = vmatprep.subr.mxu0 %v517
    %1522 = vmatpush1.msra.mxu0 %v516
    %1523 = vmatprep.subr.mxu0 %v525
    %1524 = vmatpush1.msra.mxu0 %v524
    %1525 = vmatprep.subr.mxu0 %v533
    %1526 = vmatpush1.msra.mxu0 %v532
    %1527 = vmatprep.subr.mxu0 %v541
    %1528 = vmatpush1.msra.mxu0 %v540
    %1529 = vmatprep.subr.mxu0 %v549
    %1530 = vmatpush1.msra.mxu0 %v548
    %1531 = vmatprep.subr.mxu0 %v557
    %1532 = vmatpush1.msra.mxu0 %v556
    %1533 = vmatprep.subr.mxu0 %v565
    %1534 = vmatpush1.msra.mxu0 %v564
    %1535 = vmatprep.mubr.f32.mxu0 %v1468
    %1536 = vmatmul.mubr.f32.gmra.mrb[0].mxu0 %v1466
    %v1537 = vpop.f32.mrb[0].mxu0
    %v1538 = vadd.f32 0.0, %v1537
    %v1539 = vpop.f32.mrb[0].mxu0
    %v1540 = vadd.f32 0.0, %v1539
    %1541 = vdwg.mxu0
    %1542 = vmatprep.subr.mxu0 %v319
    %1543 = vmatpush1.msra.mxu0 %v318
    %1544 = vmatprep.subr.mxu0 %v327
    %1545 = vmatpush1.msra.mxu0 %v326
    %1546 = vmatprep.subr.mxu0 %v335
    %1547 = vmatpush1.msra.mxu0 %v334
    %1548 = vmatprep.subr.mxu0 %v343
    %1549 = vmatpush1.msra.mxu0 %v342
    %1550 = vmatprep.subr.mxu0 %v351
    %1551 = vmatpush1.msra.mxu0 %v350
    %1552 = vmatprep.subr.mxu0 %v359
    %1553 = vmatpush1.msra.mxu0 %v358
    %1554 = vmatprep.subr.mxu0 %v367
    %1555 = vmatpush1.msra.mxu0 %v366
    %1556 = vmatprep.subr.mxu0 %v375
    %1557 = vmatpush1.msra.mxu0 %v374
    %1558 = vmatprep.subr.mxu0 %v383
    %1559 = vmatpush1.msra.mxu0 %v382
    %1560 = vmatprep.subr.mxu0 %v391
    %1561 = vmatpush1.msra.mxu0 %v390
    %1562 = vmatprep.subr.mxu0 %v399
    %1563 = vmatpush1.msra.mxu0 %v398
    %1564 = vmatprep.subr.mxu0 %v407
    %1565 = vmatpush1.msra.mxu0 %v406
    %1566 = vmatprep.subr.mxu0 %v415
    %1567 = vmatpush1.msra.mxu0 %v414
    %1568 = vmatprep.subr.mxu0 %v423
    %1569 = vmatpush1.msra.mxu0 %v422
    %1570 = vmatprep.subr.mxu0 %v431
    %1571 = vmatpush1.msra.mxu0 %v430
    %1572 = vmatprep.subr.mxu0 %v439
    %1573 = vmatpush1.msra.mxu0 %v438
    %1574 = vmatprep.subr.mxu0 %v447
    %1575 = vmatpush1.msra.mxu0 %v446
    %1576 = vmatprep.subr.mxu0 %v455
    %1577 = vmatpush1.msra.mxu0 %v454
    %1578 = vmatprep.subr.mxu0 %v463
    %1579 = vmatpush1.msra.mxu0 %v462
    %1580 = vmatprep.subr.mxu0 %v471
    %1581 = vmatpush1.msra.mxu0 %v470
    %1582 = vmatprep.subr.mxu0 %v479
    %1583 = vmatpush1.msra.mxu0 %v478
    %1584 = vmatprep.subr.mxu0 %v487
    %1585 = vmatpush1.msra.mxu0 %v486
    %1586 = vmatprep.subr.mxu0 %v495
    %1587 = vmatpush1.msra.mxu0 %v494
    %1588 = vmatprep.subr.mxu0 %v503
    %1589 = vmatpush1.msra.mxu0 %v502
    %1590 = vmatprep.subr.mxu0 %v511
    %1591 = vmatpush1.msra.mxu0 %v510
    %1592 = vmatprep.subr.mxu0 %v519
    %1593 = vmatpush1.msra.mxu0 %v518
    %1594 = vmatprep.subr.mxu0 %v527
    %1595 = vmatpush1.msra.mxu0 %v526
    %1596 = vmatprep.subr.mxu0 %v535
    %1597 = vmatpush1.msra.mxu0 %v534
    %1598 = vmatprep.subr.mxu0 %v543
    %1599 = vmatpush1.msra.mxu0 %v542
    %1600 = vmatprep.subr.mxu0 %v551
    %1601 = vmatpush1.msra.mxu0 %v550
    %1602 = vmatprep.subr.mxu0 %v559
    %1603 = vmatpush1.msra.mxu0 %v558
    %1604 = vmatprep.subr.mxu0 %v567
    %1605 = vmatpush1.msra.mxu0 %v566
    %1606 = vmatprep.mubr.f32.mxu0 %v1468
    %1607 = vmatmul.mubr.f32.gmra.mrb[0].mxu0 %v1466
    %v1608 = vpop.f32.mrb[0].mxu0
    %v1609 = vadd.f32 0.0, %v1608
    %v1610 = vpop.f32.mrb[0].mxu0
    %v1611 = vadd.f32 0.0, %v1610
    %1612 = vdwg.mxu0
    %1613 = vmatprep.subr.mxu0 %v321
    %1614 = vmatpush1.msra.mxu0 %v320
    %1615 = vmatprep.subr.mxu0 %v329
    %1616 = vmatpush1.msra.mxu0 %v328
    %1617 = vmatprep.subr.mxu0 %v337
    %1618 = vmatpush1.msra.mxu0 %v336
    %1619 = vmatprep.subr.mxu0 %v345
    %1620 = vmatpush1.msra.mxu0 %v344
    %1621 = vmatprep.subr.mxu0 %v353
    %1622 = vmatpush1.msra.mxu0 %v352
    %1623 = vmatprep.subr.mxu0 %v361
    %1624 = vmatpush1.msra.mxu0 %v360
    %1625 = vmatprep.subr.mxu0 %v369
    %1626 = vmatpush1.msra.mxu0 %v368
    %1627 = vmatprep.subr.mxu0 %v377
    %1628 = vmatpush1.msra.mxu0 %v376
    %1629 = vmatprep.subr.mxu0 %v385
    %1630 = vmatpush1.msra.mxu0 %v384
    %1631 = vmatprep.subr.mxu0 %v393
    %1632 = vmatpush1.msra.mxu0 %v392
    %1633 = vmatprep.subr.mxu0 %v401
    %1634 = vmatpush1.msra.mxu0 %v400
    %1635 = vmatprep.subr.mxu0 %v409
    %1636 = vmatpush1.msra.mxu0 %v408
    %1637 = vmatprep.subr.mxu0 %v417
    %1638 = vmatpush1.msra.mxu0 %v416
    %1639 = vmatprep.subr.mxu0 %v425
    %1640 = vmatpush1.msra.mxu0 %v424
    %1641 = vmatprep.subr.mxu0 %v433
    %1642 = vmatpush1.msra.mxu0 %v432
    %1643 = vmatprep.subr.mxu0 %v441
    %1644 = vmatpush1.msra.mxu0 %v440
    %1645 = vmatprep.subr.mxu0 %v449
    %1646 = vmatpush1.msra.mxu0 %v448
    %1647 = vmatprep.subr.mxu0 %v457
    %1648 = vmatpush1.msra.mxu0 %v456
    %1649 = vmatprep.subr.mxu0 %v465
    %1650 = vmatpush1.msra.mxu0 %v464
    %1651 = vmatprep.subr.mxu0 %v473
    %1652 = vmatpush1.msra.mxu0 %v472
    %1653 = vmatprep.subr.mxu0 %v481
    %1654 = vmatpush1.msra.mxu0 %v480
    %1655 = vmatprep.subr.mxu0 %v489
    %1656 = vmatpush1.msra.mxu0 %v488
    %1657 = vmatprep.subr.mxu0 %v497
    %1658 = vmatpush1.msra.mxu0 %v496
    %1659 = vmatprep.subr.mxu0 %v505
    %1660 = vmatpush1.msra.mxu0 %v504
    %1661 = vmatprep.subr.mxu0 %v513
    %1662 = vmatpush1.msra.mxu0 %v512
    %1663 = vmatprep.subr.mxu0 %v521
    %1664 = vmatpush1.msra.mxu0 %v520
    %1665 = vmatprep.subr.mxu0 %v529
    %1666 = vmatpush1.msra.mxu0 %v528
    %1667 = vmatprep.subr.mxu0 %v537
    %1668 = vmatpush1.msra.mxu0 %v536
    %1669 = vmatprep.subr.mxu0 %v545
    %1670 = vmatpush1.msra.mxu0 %v544
    %1671 = vmatprep.subr.mxu0 %v553
    %1672 = vmatpush1.msra.mxu0 %v552
    %1673 = vmatprep.subr.mxu0 %v561
    %1674 = vmatpush1.msra.mxu0 %v560
    %1675 = vmatprep.subr.mxu0 %v569
    %1676 = vmatpush1.msra.mxu0 %v568
    %1677 = vmatprep.mubr.f32.mxu0 %v1468
    %1678 = vmatmul.mubr.f32.gmra.mrb[0].mxu0 %v1466
    %v1679 = vpop.f32.mrb[0].mxu0
    %v1680 = vadd.f32 0.0, %v1679
    %v1681 = vpop.f32.mrb[0].mxu0
    %v1682 = vadd.f32 0.0, %v1681
    %1683 = vdwg.mxu0
    %1684 = vmatprep.subr.mxu0 %v323
    %1685 = vmatpush1.msra.mxu0 %v322
    %1686 = vmatprep.subr.mxu0 %v331
    %1687 = vmatpush1.msra.mxu0 %v330
    %1688 = vmatprep.subr.mxu0 %v339
    %1689 = vmatpush1.msra.mxu0 %v338
    %1690 = vmatprep.subr.mxu0 %v347
    %1691 = vmatpush1.msra.mxu0 %v346
    %1692 = vmatprep.subr.mxu0 %v355
    %1693 = vmatpush1.msra.mxu0 %v354
    %1694 = vmatprep.subr.mxu0 %v363
    %1695 = vmatpush1.msra.mxu0 %v362
    %1696 = vmatprep.subr.mxu0 %v371
    %1697 = vmatpush1.msra.mxu0 %v370
    %1698 = vmatprep.subr.mxu0 %v379
    %1699 = vmatpush1.msra.mxu0 %v378
    %1700 = vmatprep.subr.mxu0 %v387
    %1701 = vmatpush1.msra.mxu0 %v386
    %1702 = vmatprep.subr.mxu0 %v395
    %1703 = vmatpush1.msra.mxu0 %v394
    %1704 = vmatprep.subr.mxu0 %v403
    %1705 = vmatpush1.msra.mxu0 %v402
    %1706 = vmatprep.subr.mxu0 %v411
    %1707 = vmatpush1.msra.mxu0 %v410
    %1708 = vmatprep.subr.mxu0 %v419
    %1709 = vmatpush1.msra.mxu0 %v418
    %1710 = vmatprep.subr.mxu0 %v427
    %1711 = vmatpush1.msra.mxu0 %v426
    %1712 = vmatprep.subr.mxu0 %v435
    %1713 = vmatpush1.msra.mxu0 %v434
    %1714 = vmatprep.subr.mxu0 %v443
    %1715 = vmatpush1.msra.mxu0 %v442
    %1716 = vmatprep.subr.mxu0 %v451
    %1717 = vmatpush1.msra.mxu0 %v450
    %1718 = vmatprep.subr.mxu0 %v459
    %1719 = vmatpush1.msra.mxu0 %v458
    %1720 = vmatprep.subr.mxu0 %v467
    %1721 = vmatpush1.msra.mxu0 %v466
    %1722 = vmatprep.subr.mxu0 %v475
    %1723 = vmatpush1.msra.mxu0 %v474
    %1724 = vmatprep.subr.mxu0 %v483
    %1725 = vmatpush1.msra.mxu0 %v482
    %1726 = vmatprep.subr.mxu0 %v491
    %1727 = vmatpush1.msra.mxu0 %v490
    %1728 = vmatprep.subr.mxu0 %v499
    %1729 = vmatpush1.msra.mxu0 %v498
    %1730 = vmatprep.subr.mxu0 %v507
    %1731 = vmatpush1.msra.mxu0 %v506
    %1732 = vmatprep.subr.mxu0 %v515
    %1733 = vmatpush1.msra.mxu0 %v514
    %1734 = vmatprep.subr.mxu0 %v523
    %1735 = vmatpush1.msra.mxu0 %v522
    %1736 = vmatprep.subr.mxu0 %v531
    %1737 = vmatpush1.msra.mxu0 %v530
    %1738 = vmatprep.subr.mxu0 %v539
    %1739 = vmatpush1.msra.mxu0 %v538
    %1740 = vmatprep.subr.mxu0 %v547
    %1741 = vmatpush1.msra.mxu0 %v546
    %1742 = vmatprep.subr.mxu0 %v555
    %1743 = vmatpush1.msra.mxu0 %v554
    %1744 = vmatprep.subr.mxu0 %v563
    %1745 = vmatpush1.msra.mxu0 %v562
    %1746 = vmatprep.subr.mxu0 %v571
    %1747 = vmatpush1.msra.mxu0 %v570
    %1748 = vmatprep.mubr.f32.mxu0 %v1468
    %1749 = vmatmul.mubr.f32.gmra.mrb[0].mxu0 %v1466
    %v1750 = vpop.f32.mrb[0].mxu0
    %v1751 = vadd.f32 0.0, %v1750
    %v1752 = vpop.f32.mrb[0].mxu0
    %v1753 = vadd.f32 0.0, %v1752
    %1754 = vdwg.mxu0
    %v1759 = vrot.slane %v1538, 6
    %v1760 = vrot.slane %v1540, 6
    %v1761 = vrot.slane %v1609, 6
    %v1762 = vrot.slane %v1611, 6
    %v1763 = vrot.slane %v1538, 7
    %v1764 = vrot.slane %v1540, 7
    %v1765 = vrot.slane %v1609, 7
    %v1766 = vrot.slane %v1611, 7
    %v1767 = vrot.slane %v1538, 1
    %v1768 = vrot.slane %v1540, 1
    %v1769 = vrot.slane %v1609, 1
    %v1770 = vrot.slane %v1611, 1
    %v1771 = vrot.slane %v1538, 2
    %v1772 = vrot.slane %v1540, 2
    %v1773 = vrot.slane %v1609, 2
    %v1774 = vrot.slane %v1611, 2
    %v1775 = vrot.slane %v1538, 3
    %v1776 = vrot.slane %v1540, 3
    %v1777 = vrot.slane %v1609, 3
    %v1778 = vrot.slane %v1611, 3
    %v1779 = vrot.slane %v1538, 4
    %v1780 = vrot.slane %v1540, 4
    %v1781 = vrot.slane %v1609, 4
    %v1782 = vrot.slane %v1611, 4
    %v1783 = vrot.slane %v1538, 5
    %v1784 = vrot.slane %v1540, 5
    %v1785 = vrot.slane %v1609, 5
    %v1786 = vrot.slane %v1611, 5
    %v1819 = vadd.f32 %v157, %v1759
    %v1820 = vadd.f32 %v159, %v1760
    %v1821 = vadd.f32 %v270, %v1761
    %v1822 = vadd.f32 %v272, %v1762
    %v1823 = vadd.f32 %v163, %v1763
    %v1824 = vadd.f32 %v165, %v1764
    %v1825 = vadd.f32 %v276, %v1765
    %v1826 = vadd.f32 %v278, %v1766
    %v1827 = vadd.f32 %v169, %v1538
    %v1828 = vadd.f32 %v171, %v1540
    %v1829 = vadd.f32 %v282, %v1609
    %v1830 = vadd.f32 %v284, %v1611
    %v1831 = vadd.f32 %v175, %v1767
    %v1832 = vadd.f32 %v177, %v1768
    %v1833 = vadd.f32 %v288, %v1769
    %v1834 = vadd.f32 %v290, %v1770
    %v1835 = vadd.f32 %v181, %v1771
    %v1836 = vadd.f32 %v183, %v1772
    %v1837 = vadd.f32 %v294, %v1773
    %v1838 = vadd.f32 %v296, %v1774
    %v1839 = vadd.f32 %v187, %v1775
    %v1840 = vadd.f32 %v189, %v1776
    %v1841 = vadd.f32 %v300, %v1777
    %v1842 = vadd.f32 %v302, %v1778
    %v1843 = vadd.f32 %v193, %v1779
    %v1844 = vadd.f32 %v195, %v1780
    %v1845 = vadd.f32 %v306, %v1781
    %v1846 = vadd.f32 %v308, %v1782
    %v1847 = vadd.f32 %v199, %v1783
    %v1848 = vadd.f32 %v201, %v1784
    %v1849 = vadd.f32 %v312, %v1785
    %v1850 = vadd.f32 %v314, %v1786
    %v1851 = vadd.f32 %v1680, %v1179
    %v1852 = vadd.f32 %v1682, %v1183
    %v1853 = vadd.f32 %v1751, %v1187
    %v1854 = vadd.f32 %v1753, %v1191
    %v1855 = vxor.u32 %v1819, 2147483648
    %v1856 = vxor.u32 %v1823, 2147483648
    %v1857 = vxor.u32 %v1827, 2147483648
    %v1858 = vxor.u32 %v1831, 2147483648
    %v1859 = vxor.u32 %v1835, 2147483648
    %v1860 = vxor.u32 %v1839, 2147483648
    %v1861 = vxor.u32 %v1843, 2147483648
    %v1862 = vxor.u32 %v1847, 2147483648
    %v1863 = vmul.f32 %v1855, 1.442695
    %v1864 = vpow.pop %v1863
    %v1865 = vmul.f32 %v1856, 1.442695
    %v1866 = vpow.pop %v1865
    %v1867 = vmul.f32 %v1857, 1.442695
    %v1868 = vpow.pop %v1867
    %v1869 = vmul.f32 %v1858, 1.442695
    %v1870 = vpow.pop %v1869
    %v1871 = vmul.f32 %v1859, 1.442695
    %v1872 = vpow.pop %v1871
    %v1873 = vmul.f32 %v1860, 1.442695
    %v1874 = vpow.pop %v1873
    %v1875 = vmul.f32 %v1861, 1.442695
    %v1876 = vpow.pop %v1875
    %v1877 = vmul.f32 %v1862, 1.442695
    %v1878 = vpow.pop %v1877
    %v1879 = vadd.f32 %v1864, 1.0
    %v1880 = vadd.f32 %v1866, 1.0
    %v1881 = vadd.f32 %v1868, 1.0
    %v1882 = vadd.f32 %v1870, 1.0
    %v1883 = vadd.f32 %v1872, 1.0
    %v1884 = vadd.f32 %v1874, 1.0
    %v1885 = vadd.f32 %v1876, 1.0
    %v1886 = vadd.f32 %v1878, 1.0
    %v1887 = vrcp.pop %v1879
    %v1888 = vmul.f32 1.0, %v1887
    %v1889 = vrcp.pop %v1880
    %v1890 = vmul.f32 1.0, %v1889
    %v1891 = vrcp.pop %v1881
    %v1892 = vmul.f32 1.0, %v1891
    %v1893 = vrcp.pop %v1882
    %v1894 = vmul.f32 1.0, %v1893
    %v1895 = vrcp.pop %v1883
    %v1896 = vmul.f32 1.0, %v1895
    %v1897 = vrcp.pop %v1884
    %v1898 = vmul.f32 1.0, %v1897
    %v1899 = vrcp.pop %v1885
    %v1900 = vmul.f32 1.0, %v1899
    %v1901 = vrcp.pop %v1886
    %v1902 = vmul.f32 1.0, %v1901
    %v1903 = vxor.u32 %v1820, 2147483648
    %v1904 = vxor.u32 %v1824, 2147483648
    %v1905 = vxor.u32 %v1828, 2147483648
    %v1906 = vxor.u32 %v1832, 2147483648
    %v1907 = vxor.u32 %v1836, 2147483648
    %v1908 = vxor.u32 %v1840, 2147483648
    %v1909 = vxor.u32 %v1844, 2147483648
    %v1910 = vxor.u32 %v1848, 2147483648
    %v1911 = vmul.f32 %v1903, 1.442695
    %v1912 = vpow.pop %v1911
    %v1913 = vmul.f32 %v1904, 1.442695
    %v1914 = vpow.pop %v1913
    %v1915 = vmul.f32 %v1905, 1.442695
    %v1916 = vpow.pop %v1915
    %v1917 = vmul.f32 %v1906, 1.442695
    %v1918 = vpow.pop %v1917
    %v1919 = vmul.f32 %v1907, 1.442695
    %v1920 = vpow.pop %v1919
    %v1921 = vmul.f32 %v1908, 1.442695
    %v1922 = vpow.pop %v1921
    %v1923 = vmul.f32 %v1909, 1.442695
    %v1924 = vpow.pop %v1923
    %v1925 = vmul.f32 %v1910, 1.442695
    %v1926 = vpow.pop %v1925
    %v1927 = vadd.f32 %v1912, 1.0
    %v1928 = vadd.f32 %v1914, 1.0
    %v1929 = vadd.f32 %v1916, 1.0
    %v1930 = vadd.f32 %v1918, 1.0
    %v1931 = vadd.f32 %v1920, 1.0
    %v1932 = vadd.f32 %v1922, 1.0
    %v1933 = vadd.f32 %v1924, 1.0
    %v1934 = vadd.f32 %v1926, 1.0
    %v1935 = vrcp.pop %v1927
    %v1936 = vmul.f32 1.0, %v1935
    %v1937 = vrcp.pop %v1928
    %v1938 = vmul.f32 1.0, %v1937
    %v1939 = vrcp.pop %v1929
    %v1940 = vmul.f32 1.0, %v1939
    %v1941 = vrcp.pop %v1930
    %v1942 = vmul.f32 1.0, %v1941
    %v1943 = vrcp.pop %v1931
    %v1944 = vmul.f32 1.0, %v1943
    %v1945 = vrcp.pop %v1932
    %v1946 = vmul.f32 1.0, %v1945
    %v1947 = vrcp.pop %v1933
    %v1948 = vmul.f32 1.0, %v1947
    %v1949 = vrcp.pop %v1934
    %v1950 = vmul.f32 1.0, %v1949
    %v1951 = vtanh.pop %v1821
    %v1952 = vtanh.pop %v1825
    %v1953 = vtanh.pop %v1829
    %v1954 = vtanh.pop %v1833
    %v1955 = vtanh.pop %v1837
    %v1956 = vtanh.pop %v1841
    %v1957 = vtanh.pop %v1845
    %v1958 = vtanh.pop %v1849
    %v1959 = vxor.u32 %v1822, 2147483648
    %v1960 = vxor.u32 %v1826, 2147483648
    %v1961 = vxor.u32 %v1830, 2147483648
    %v1962 = vxor.u32 %v1834, 2147483648
    %v1963 = vxor.u32 %v1838, 2147483648
    %v1964 = vxor.u32 %v1842, 2147483648
    %v1965 = vxor.u32 %v1846, 2147483648
    %v1966 = vxor.u32 %v1850, 2147483648
    %v1967 = vmul.f32 %v1959, 1.442695
    %v1968 = vpow.pop %v1967
    %v1969 = vmul.f32 %v1960, 1.442695
    %v1970 = vpow.pop %v1969
    %v1971 = vmul.f32 %v1961, 1.442695
    %v1972 = vpow.pop %v1971
    %v1973 = vmul.f32 %v1962, 1.442695
    %v1974 = vpow.pop %v1973
    %v1975 = vmul.f32 %v1963, 1.442695
    %v1976 = vpow.pop %v1975
    %v1977 = vmul.f32 %v1964, 1.442695
    %v1978 = vpow.pop %v1977
    %v1979 = vmul.f32 %v1965, 1.442695
    %v1980 = vpow.pop %v1979
    %v1981 = vmul.f32 %v1966, 1.442695
    %v1982 = vpow.pop %v1981
    %v1983 = vadd.f32 %v1968, 1.0
    %v1984 = vadd.f32 %v1970, 1.0
    %v1985 = vadd.f32 %v1972, 1.0
    %v1986 = vadd.f32 %v1974, 1.0
    %v1987 = vadd.f32 %v1976, 1.0
    %v1988 = vadd.f32 %v1978, 1.0
    %v1989 = vadd.f32 %v1980, 1.0
    %v1990 = vadd.f32 %v1982, 1.0
    %v1991 = vrcp.pop %v1983
    %v1992 = vmul.f32 1.0, %v1991
    %v1993 = vrcp.pop %v1984
    %v1994 = vmul.f32 1.0, %v1993
    %v1995 = vrcp.pop %v1985
    %v1996 = vmul.f32 1.0, %v1995
    %v1997 = vrcp.pop %v1986
    %v1998 = vmul.f32 1.0, %v1997
    %v1999 = vrcp.pop %v1987
    %v2000 = vmul.f32 1.0, %v1999
    %v2001 = vrcp.pop %v1988
    %v2002 = vmul.f32 1.0, %v2001
    %v2003 = vrcp.pop %v1989
    %v2004 = vmul.f32 1.0, %v2003
    %v2005 = vrcp.pop %v1990
    %v2006 = vmul.f32 1.0, %v2005
    %v2015 = vrot.slane %v1392, 7
    %v2016 = vrot.slane %v1393, 7
    %v2017 = vrot.slane %v1394, 7
    %v2018 = vrot.slane %v1395, 7
    %v2019 = vrot.slane %v1396, 7
    %v2020 = vrot.slane %v1397, 7
    %v2021 = vrot.slane %v1398, 7
    %v2022 = vrot.slane %v1399, 7
    %v2031 = vmul.f32 %v1936, %v2015
    %v2032 = vmul.f32 %v1938, %v2016
    %v2033 = vmul.f32 %v1940, %v2017
    %v2034 = vmul.f32 %v1942, %v2018
    %v2035 = vmul.f32 %v1944, %v2019
    %v2036 = vmul.f32 %v1946, %v2020
    %v2037 = vmul.f32 %v1948, %v2021
    %v2038 = vmul.f32 %v1950, %v2022
    %v2039 = vmul.f32 %v1888, %v1951
    %v2040 = vmul.f32 %v1890, %v1952
    %v2041 = vmul.f32 %v1892, %v1953
    %v2042 = vmul.f32 %v1894, %v1954
    %v2043 = vmul.f32 %v1896, %v1955
    %v2044 = vmul.f32 %v1898, %v1956
    %v2045 = vmul.f32 %v1900, %v1957
    %v2046 = vmul.f32 %v1902, %v1958
    %v2047 = vadd.f32 %v2031, %v2039
    %v2048 = vadd.f32 %v2032, %v2040
    %v2049 = vadd.f32 %v2033, %v2041
    %v2050 = vadd.f32 %v2034, %v2042
    %v2051 = vadd.f32 %v2035, %v2043
    %v2052 = vadd.f32 %v2036, %v2044
    %v2053 = vadd.f32 %v2037, %v2045
    %v2054 = vadd.f32 %v2038, %v2046
    %v2055 = vtanh.pop %v2047
    %v2056 = vtanh.pop %v2048
    %v2057 = vtanh.pop %v2049
    %v2058 = vtanh.pop %v2050
    %v2059 = vtanh.pop %v2051
    %v2060 = vtanh.pop %v2052
    %v2061 = vtanh.pop %v2053
    %v2062 = vtanh.pop %v2054
    %v2063 = vmul.f32 %v1992, %v2055
    %v2064 = vmul.f32 %v1994, %v2056
    %v2065 = vmul.f32 %v1996, %v2057
    %v2066 = vmul.f32 %v1998, %v2058
    %v2067 = vmul.f32 %v2000, %v2059
    %v2068 = vmul.f32 %v2002, %v2060
    %v2069 = vmul.f32 %v2004, %v2061
    %v2070 = vmul.f32 %v2006, %v2062
    %v2071 = vxor.u32 %v1851, 2147483648
    %v2072 = vmul.f32 %v2071, 1.442695
    %v2073 = vpow.pop %v2072
    %v2074 = vadd.f32 %v2073, 1.0
    %v2075 = vrcp.pop %v2074
    %v2076 = vmul.f32 1.0, %v2075
    %v2077 = vxor.u32 %v1852, 2147483648
    %v2078 = vmul.f32 %v2077, 1.442695
    %v2079 = vpow.pop %v2078
    %v2080 = vadd.f32 %v2079, 1.0
    %v2081 = vrcp.pop %v2080
    %v2082 = vmul.f32 1.0, %v2081
    %v2083 = vtanh.pop %v1853
    %v2084 = vxor.u32 %v1854, 2147483648
    %v2085 = vmul.f32 %v2084, 1.442695
    %v2086 = vpow.pop %v2085
    %v2087 = vadd.f32 %v2086, 1.0
    %v2088 = vrcp.pop %v2087
    %v2089 = vmul.f32 1.0, %v2088
    %v2090 = vmul.f32 %v2082, %v1437
    %v2091 = vmul.f32 %v2076, %v2083
    %v2092 = vadd.f32 %v2090, %v2091
    %v2093 = vtanh.pop %v2092
    %v2094 = vmul.f32 %v2089, %v2093
    %v2103 = vrot.slane %v2064, 7
    %v2104 = vsel %vm780, %v2103, %v2063
    %v2105 = vrot.slane %v2065, 6
    %v2106 = vsel %vm783, %v2105, %v2104
    %v2107 = vrot.slane %v2066, 5
    %v2108 = vsel %vm786, %v2107, %v2106
    %v2109 = vrot.slane %v2067, 4
    %v2110 = vsel %vm789, %v2109, %v2108
    %v2111 = vrot.slane %v2068, 3
    %v2112 = vsel %vm792, %v2111, %v2110
    %v2113 = vrot.slane %v2069, 2
    %v2114 = vrot.slane %v2070, 1
    %v2115 = vsel %vm774, %v2114, %v2113
    %v2117 = vrot.slane %v2094, 6
    %vm2118 = vcmask 1045504
    %v2119 = vrot.slane %v2112, 2
    %v2120 = vrot.slane %v2115, 2
    %v2121 = vsel %vm2118, %v2119, %v2120
    %v2122 = vrot.slane %v2117, 2
    %v2123 = vsel %vm2118, %v2122, %v2122
    %2126 = vmatprep.subr.mxu0 %v317
    %2127 = vmatpush1.msra.mxu0 %v316
    %2128 = vmatprep.subr.mxu0 %v325
    %2129 = vmatpush1.msra.mxu0 %v324
    %2130 = vmatprep.subr.mxu0 %v333
    %2131 = vmatpush1.msra.mxu0 %v332
    %2132 = vmatprep.subr.mxu0 %v341
    %2133 = vmatpush1.msra.mxu0 %v340
    %2134 = vmatprep.subr.mxu0 %v349
    %2135 = vmatpush1.msra.mxu0 %v348
    %2136 = vmatprep.subr.mxu0 %v357
    %2137 = vmatpush1.msra.mxu0 %v356
    %2138 = vmatprep.subr.mxu0 %v365
    %2139 = vmatpush1.msra.mxu0 %v364
    %2140 = vmatprep.subr.mxu0 %v373
    %2141 = vmatpush1.msra.mxu0 %v372
    %2142 = vmatprep.subr.mxu0 %v381
    %2143 = vmatpush1.msra.mxu0 %v380
    %2144 = vmatprep.subr.mxu0 %v389
    %2145 = vmatpush1.msra.mxu0 %v388
    %2146 = vmatprep.subr.mxu0 %v397
    %2147 = vmatpush1.msra.mxu0 %v396
    %2148 = vmatprep.subr.mxu0 %v405
    %2149 = vmatpush1.msra.mxu0 %v404
    %2150 = vmatprep.subr.mxu0 %v413
    %2151 = vmatpush1.msra.mxu0 %v412
    %2152 = vmatprep.subr.mxu0 %v421
    %2153 = vmatpush1.msra.mxu0 %v420
    %2154 = vmatprep.subr.mxu0 %v429
    %2155 = vmatpush1.msra.mxu0 %v428
    %2156 = vmatprep.subr.mxu0 %v437
    %2157 = vmatpush1.msra.mxu0 %v436
    %2158 = vmatprep.subr.mxu0 %v445
    %2159 = vmatpush1.msra.mxu0 %v444
    %2160 = vmatprep.subr.mxu0 %v453
    %2161 = vmatpush1.msra.mxu0 %v452
    %2162 = vmatprep.subr.mxu0 %v461
    %2163 = vmatpush1.msra.mxu0 %v460
    %2164 = vmatprep.subr.mxu0 %v469
    %2165 = vmatpush1.msra.mxu0 %v468
    %2166 = vmatprep.subr.mxu0 %v477
    %2167 = vmatpush1.msra.mxu0 %v476
    %2168 = vmatprep.subr.mxu0 %v485
    %2169 = vmatpush1.msra.mxu0 %v484
    %2170 = vmatprep.subr.mxu0 %v493
    %2171 = vmatpush1.msra.mxu0 %v492
    %2172 = vmatprep.subr.mxu0 %v501
    %2173 = vmatpush1.msra.mxu0 %v500
    %2174 = vmatprep.subr.mxu0 %v509
    %2175 = vmatpush1.msra.mxu0 %v508
    %2176 = vmatprep.subr.mxu0 %v517
    %2177 = vmatpush1.msra.mxu0 %v516
    %2178 = vmatprep.subr.mxu0 %v525
    %2179 = vmatpush1.msra.mxu0 %v524
    %2180 = vmatprep.subr.mxu0 %v533
    %2181 = vmatpush1.msra.mxu0 %v532
    %2182 = vmatprep.subr.mxu0 %v541
    %2183 = vmatpush1.msra.mxu0 %v540
    %2184 = vmatprep.subr.mxu0 %v549
    %2185 = vmatpush1.msra.mxu0 %v548
    %2186 = vmatprep.subr.mxu0 %v557
    %2187 = vmatpush1.msra.mxu0 %v556
    %2188 = vmatprep.subr.mxu0 %v565
    %2189 = vmatpush1.msra.mxu0 %v564
    %2190 = vmatprep.mubr.f32.mxu0 %v2123
    %2191 = vmatmul.mubr.f32.gmra.mrb[0].mxu0 %v2121
    %v2192 = vpop.f32.mrb[0].mxu0
    %v2193 = vadd.f32 0.0, %v2192
    %v2194 = vpop.f32.mrb[0].mxu0
    %v2195 = vadd.f32 0.0, %v2194
    %2196 = vdwg.mxu0
    %2197 = vmatprep.subr.mxu0 %v319
    %2198 = vmatpush1.msra.mxu0 %v318
    %2199 = vmatprep.subr.mxu0 %v327
    %2200 = vmatpush1.msra.mxu0 %v326
    %2201 = vmatprep.subr.mxu0 %v335
    %2202 = vmatpush1.msra.mxu0 %v334
    %2203 = vmatprep.subr.mxu0 %v343
    %2204 = vmatpush1.msra.mxu0 %v342
    %2205 = vmatprep.subr.mxu0 %v351
    %2206 = vmatpush1.msra.mxu0 %v350
    %2207 = vmatprep.subr.mxu0 %v359
    %2208 = vmatpush1.msra.mxu0 %v358
    %2209 = vmatprep.subr.mxu0 %v367
    %2210 = vmatpush1.msra.mxu0 %v366
    %2211 = vmatprep.subr.mxu0 %v375
    %2212 = vmatpush1.msra.mxu0 %v374
    %2213 = vmatprep.subr.mxu0 %v383
    %2214 = vmatpush1.msra.mxu0 %v382
    %2215 = vmatprep.subr.mxu0 %v391
    %2216 = vmatpush1.msra.mxu0 %v390
    %2217 = vmatprep.subr.mxu0 %v399
    %2218 = vmatpush1.msra.mxu0 %v398
    %2219 = vmatprep.subr.mxu0 %v407
    %2220 = vmatpush1.msra.mxu0 %v406
    %2221 = vmatprep.subr.mxu0 %v415
    %2222 = vmatpush1.msra.mxu0 %v414
    %2223 = vmatprep.subr.mxu0 %v423
    %2224 = vmatpush1.msra.mxu0 %v422
    %2225 = vmatprep.subr.mxu0 %v431
    %2226 = vmatpush1.msra.mxu0 %v430
    %2227 = vmatprep.subr.mxu0 %v439
    %2228 = vmatpush1.msra.mxu0 %v438
    %2229 = vmatprep.subr.mxu0 %v447
    %2230 = vmatpush1.msra.mxu0 %v446
    %2231 = vmatprep.subr.mxu0 %v455
    %2232 = vmatpush1.msra.mxu0 %v454
    %2233 = vmatprep.subr.mxu0 %v463
    %2234 = vmatpush1.msra.mxu0 %v462
    %2235 = vmatprep.subr.mxu0 %v471
    %2236 = vmatpush1.msra.mxu0 %v470
    %2237 = vmatprep.subr.mxu0 %v479
    %2238 = vmatpush1.msra.mxu0 %v478
    %2239 = vmatprep.subr.mxu0 %v487
    %2240 = vmatpush1.msra.mxu0 %v486
    %2241 = vmatprep.subr.mxu0 %v495
    %2242 = vmatpush1.msra.mxu0 %v494
    %2243 = vmatprep.subr.mxu0 %v503
    %2244 = vmatpush1.msra.mxu0 %v502
    %2245 = vmatprep.subr.mxu0 %v511
    %2246 = vmatpush1.msra.mxu0 %v510
    %2247 = vmatprep.subr.mxu0 %v519
    %2248 = vmatpush1.msra.mxu0 %v518
    %2249 = vmatprep.subr.mxu0 %v527
    %2250 = vmatpush1.msra.mxu0 %v526
    %2251 = vmatprep.subr.mxu0 %v535
    %2252 = vmatpush1.msra.mxu0 %v534
    %2253 = vmatprep.subr.mxu0 %v543
    %2254 = vmatpush1.msra.mxu0 %v542
    %2255 = vmatprep.subr.mxu0 %v551
    %2256 = vmatpush1.msra.mxu0 %v550
    %2257 = vmatprep.subr.mxu0 %v559
    %2258 = vmatpush1.msra.mxu0 %v558
    %2259 = vmatprep.subr.mxu0 %v567
    %2260 = vmatpush1.msra.mxu0 %v566
    %2261 = vmatprep.mubr.f32.mxu0 %v2123
    %2262 = vmatmul.mubr.f32.gmra.mrb[0].mxu0 %v2121
    %v2263 = vpop.f32.mrb[0].mxu0
    %v2264 = vadd.f32 0.0, %v2263
    %v2265 = vpop.f32.mrb[0].mxu0
    %v2266 = vadd.f32 0.0, %v2265
    %2267 = vdwg.mxu0
    %2268 = vmatprep.subr.mxu0 %v321
    %2269 = vmatpush1.msra.mxu0 %v320
    %2270 = vmatprep.subr.mxu0 %v329
    %2271 = vmatpush1.msra.mxu0 %v328
    %2272 = vmatprep.subr.mxu0 %v337
    %2273 = vmatpush1.msra.mxu0 %v336
    %2274 = vmatprep.subr.mxu0 %v345
    %2275 = vmatpush1.msra.mxu0 %v344
    %2276 = vmatprep.subr.mxu0 %v353
    %2277 = vmatpush1.msra.mxu0 %v352
    %2278 = vmatprep.subr.mxu0 %v361
    %2279 = vmatpush1.msra.mxu0 %v360
    %2280 = vmatprep.subr.mxu0 %v369
    %2281 = vmatpush1.msra.mxu0 %v368
    %2282 = vmatprep.subr.mxu0 %v377
    %2283 = vmatpush1.msra.mxu0 %v376
    %2284 = vmatprep.subr.mxu0 %v385
    %2285 = vmatpush1.msra.mxu0 %v384
    %2286 = vmatprep.subr.mxu0 %v393
    %2287 = vmatpush1.msra.mxu0 %v392
    %2288 = vmatprep.subr.mxu0 %v401
    %2289 = vmatpush1.msra.mxu0 %v400
    %2290 = vmatprep.subr.mxu0 %v409
    %2291 = vmatpush1.msra.mxu0 %v408
    %2292 = vmatprep.subr.mxu0 %v417
    %2293 = vmatpush1.msra.mxu0 %v416
    %2294 = vmatprep.subr.mxu0 %v425
    %2295 = vmatpush1.msra.mxu0 %v424
    %2296 = vmatprep.subr.mxu0 %v433
    %2297 = vmatpush1.msra.mxu0 %v432
    %2298 = vmatprep.subr.mxu0 %v441
    %2299 = vmatpush1.msra.mxu0 %v440
    %2300 = vmatprep.subr.mxu0 %v449
    %2301 = vmatpush1.msra.mxu0 %v448
    %2302 = vmatprep.subr.mxu0 %v457
    %2303 = vmatpush1.msra.mxu0 %v456
    %2304 = vmatprep.subr.mxu0 %v465
    %2305 = vmatpush1.msra.mxu0 %v464
    %2306 = vmatprep.subr.mxu0 %v473
    %2307 = vmatpush1.msra.mxu0 %v472
    %2308 = vmatprep.subr.mxu0 %v481
    %2309 = vmatpush1.msra.mxu0 %v480
    %2310 = vmatprep.subr.mxu0 %v489
    %2311 = vmatpush1.msra.mxu0 %v488
    %2312 = vmatprep.subr.mxu0 %v497
    %2313 = vmatpush1.msra.mxu0 %v496
    %2314 = vmatprep.subr.mxu0 %v505
    %2315 = vmatpush1.msra.mxu0 %v504
    %2316 = vmatprep.subr.mxu0 %v513
    %2317 = vmatpush1.msra.mxu0 %v512
    %2318 = vmatprep.subr.mxu0 %v521
    %2319 = vmatpush1.msra.mxu0 %v520
    %2320 = vmatprep.subr.mxu0 %v529
    %2321 = vmatpush1.msra.mxu0 %v528
    %2322 = vmatprep.subr.mxu0 %v537
    %2323 = vmatpush1.msra.mxu0 %v536
    %2324 = vmatprep.subr.mxu0 %v545
    %2325 = vmatpush1.msra.mxu0 %v544
    %2326 = vmatprep.subr.mxu0 %v553
    %2327 = vmatpush1.msra.mxu0 %v552
    %2328 = vmatprep.subr.mxu0 %v561
    %2329 = vmatpush1.msra.mxu0 %v560
    %2330 = vmatprep.subr.mxu0 %v569
    %2331 = vmatpush1.msra.mxu0 %v568
    %2332 = vmatprep.mubr.f32.mxu0 %v2123
    %2333 = vmatmul.mubr.f32.gmra.mrb[0].mxu0 %v2121
    %v2334 = vpop.f32.mrb[0].mxu0
    %v2335 = vadd.f32 0.0, %v2334
    %v2336 = vpop.f32.mrb[0].mxu0
    %v2337 = vadd.f32 0.0, %v2336
    %2338 = vdwg.mxu0
    %2339 = vmatprep.subr.mxu0 %v323
    %2340 = vmatpush1.msra.mxu0 %v322
    %2341 = vmatprep.subr.mxu0 %v331
    %2342 = vmatpush1.msra.mxu0 %v330
    %2343 = vmatprep.subr.mxu0 %v339
    %2344 = vmatpush1.msra.mxu0 %v338
    %2345 = vmatprep.subr.mxu0 %v347
    %2346 = vmatpush1.msra.mxu0 %v346
    %2347 = vmatprep.subr.mxu0 %v355
    %2348 = vmatpush1.msra.mxu0 %v354
    %2349 = vmatprep.subr.mxu0 %v363
    %2350 = vmatpush1.msra.mxu0 %v362
    %2351 = vmatprep.subr.mxu0 %v371
    %2352 = vmatpush1.msra.mxu0 %v370
    %2353 = vmatprep.subr.mxu0 %v379
    %2354 = vmatpush1.msra.mxu0 %v378
    %2355 = vmatprep.subr.mxu0 %v387
    %2356 = vmatpush1.msra.mxu0 %v386
    %2357 = vmatprep.subr.mxu0 %v395
    %2358 = vmatpush1.msra.mxu0 %v394
    %2359 = vmatprep.subr.mxu0 %v403
    %2360 = vmatpush1.msra.mxu0 %v402
    %2361 = vmatprep.subr.mxu0 %v411
    %2362 = vmatpush1.msra.mxu0 %v410
    %2363 = vmatprep.subr.mxu0 %v419
    %2364 = vmatpush1.msra.mxu0 %v418
    %2365 = vmatprep.subr.mxu0 %v427
    %2366 = vmatpush1.msra.mxu0 %v426
    %2367 = vmatprep.subr.mxu0 %v435
    %2368 = vmatpush1.msra.mxu0 %v434
    %2369 = vmatprep.subr.mxu0 %v443
    %2370 = vmatpush1.msra.mxu0 %v442
    %2371 = vmatprep.subr.mxu0 %v451
    %2372 = vmatpush1.msra.mxu0 %v450
    %2373 = vmatprep.subr.mxu0 %v459
    %2374 = vmatpush1.msra.mxu0 %v458
    %2375 = vmatprep.subr.mxu0 %v467
    %2376 = vmatpush1.msra.mxu0 %v466
    %2377 = vmatprep.subr.mxu0 %v475
    %2378 = vmatpush1.msra.mxu0 %v474
    %2379 = vmatprep.subr.mxu0 %v483
    %2380 = vmatpush1.msra.mxu0 %v482
    %2381 = vmatprep.subr.mxu0 %v491
    %2382 = vmatpush1.msra.mxu0 %v490
    %2383 = vmatprep.subr.mxu0 %v499
    %2384 = vmatpush1.msra.mxu0 %v498
    %2385 = vmatprep.subr.mxu0 %v507
    %2386 = vmatpush1.msra.mxu0 %v506
    %2387 = vmatprep.subr.mxu0 %v515
    %2388 = vmatpush1.msra.mxu0 %v514
    %2389 = vmatprep.subr.mxu0 %v523
    %2390 = vmatpush1.msra.mxu0 %v522
    %2391 = vmatprep.subr.mxu0 %v531
    %2392 = vmatpush1.msra.mxu0 %v530
    %2393 = vmatprep.subr.mxu0 %v539
    %2394 = vmatpush1.msra.mxu0 %v538
    %2395 = vmatprep.subr.mxu0 %v547
    %2396 = vmatpush1.msra.mxu0 %v546
    %2397 = vmatprep.subr.mxu0 %v555
    %2398 = vmatpush1.msra.mxu0 %v554
    %2399 = vmatprep.subr.mxu0 %v563
    %2400 = vmatpush1.msra.mxu0 %v562
    %2401 = vmatprep.subr.mxu0 %v571
    %2402 = vmatpush1.msra.mxu0 %v570
    %2403 = vmatprep.mubr.f32.mxu0 %v2123
    %2404 = vmatmul.mubr.f32.gmra.mrb[0].mxu0 %v2121
    %v2405 = vpop.f32.mrb[0].mxu0
    %v2406 = vadd.f32 0.0, %v2405
    %v2407 = vpop.f32.mrb[0].mxu0
    %v2408 = vadd.f32 0.0, %v2407
    %2409 = vdwg.mxu0
    %v2414 = vrot.slane %v2193, 5
    %v2415 = vrot.slane %v2195, 5
    %v2416 = vrot.slane %v2264, 5
    %v2417 = vrot.slane %v2266, 5
    %v2418 = vrot.slane %v2193, 6
    %v2419 = vrot.slane %v2195, 6
    %v2420 = vrot.slane %v2264, 6
    %v2421 = vrot.slane %v2266, 6
    %v2422 = vrot.slane %v2193, 7
    %v2423 = vrot.slane %v2195, 7
    %v2424 = vrot.slane %v2264, 7
    %v2425 = vrot.slane %v2266, 7
    %v2426 = vrot.slane %v2193, 1
    %v2427 = vrot.slane %v2195, 1
    %v2428 = vrot.slane %v2264, 1
    %v2429 = vrot.slane %v2266, 1
    %v2430 = vrot.slane %v2193, 2
    %v2431 = vrot.slane %v2195, 2
    %v2432 = vrot.slane %v2264, 2
    %v2433 = vrot.slane %v2266, 2
    %v2434 = vrot.slane %v2193, 3
    %v2435 = vrot.slane %v2195, 3
    %v2436 = vrot.slane %v2264, 3
    %v2437 = vrot.slane %v2266, 3
    %v2438 = vrot.slane %v2193, 4
    %v2439 = vrot.slane %v2195, 4
    %v2440 = vrot.slane %v2264, 4
    %v2441 = vrot.slane %v2266, 4
    %v2474 = vadd.f32 %v157, %v2414
    %v2475 = vadd.f32 %v159, %v2415
    %v2476 = vadd.f32 %v270, %v2416
    %v2477 = vadd.f32 %v272, %v2417
    %v2478 = vadd.f32 %v163, %v2418
    %v2479 = vadd.f32 %v165, %v2419
    %v2480 = vadd.f32 %v276, %v2420
    %v2481 = vadd.f32 %v278, %v2421
    %v2482 = vadd.f32 %v169, %v2422
    %v2483 = vadd.f32 %v171, %v2423
    %v2484 = vadd.f32 %v282, %v2424
    %v2485 = vadd.f32 %v284, %v2425
    %v2486 = vadd.f32 %v175, %v2193
    %v2487 = vadd.f32 %v177, %v2195
    %v2488 = vadd.f32 %v288, %v2264
    %v2489 = vadd.f32 %v290, %v2266
    %v2490 = vadd.f32 %v181, %v2426
    %v2491 = vadd.f32 %v183, %v2427
    %v2492 = vadd.f32 %v294, %v2428
    %v2493 = vadd.f32 %v296, %v2429
    %v2494 = vadd.f32 %v187, %v2430
    %v2495 = vadd.f32 %v189, %v2431
    %v2496 = vadd.f32 %v300, %v2432
    %v2497 = vadd.f32 %v302, %v2433
    %v2498 = vadd.f32 %v193, %v2434
    %v2499 = vadd.f32 %v195, %v2435
    %v2500 = vadd.f32 %v306, %v2436
    %v2501 = vadd.f32 %v308, %v2437
    %v2502 = vadd.f32 %v199, %v2438
    %v2503 = vadd.f32 %v201, %v2439
    %v2504 = vadd.f32 %v312, %v2440
    %v2505 = vadd.f32 %v314, %v2441
    %v2506 = vadd.f32 %v2335, %v1179
    %v2507 = vadd.f32 %v2337, %v1183
    %v2508 = vadd.f32 %v2406, %v1187
    %v2509 = vadd.f32 %v2408, %v1191
    %v2510 = vxor.u32 %v2474, 2147483648
    %v2511 = vxor.u32 %v2478, 2147483648
    %v2512 = vxor.u32 %v2482, 2147483648
    %v2513 = vxor.u32 %v2486, 2147483648
    %v2514 = vxor.u32 %v2490, 2147483648
    %v2515 = vxor.u32 %v2494, 2147483648
    %v2516 = vxor.u32 %v2498, 2147483648
    %v2517 = vxor.u32 %v2502, 2147483648
    %v2518 = vmul.f32 %v2510, 1.442695
    %v2519 = vpow.pop %v2518
    %v2520 = vmul.f32 %v2511, 1.442695
    %v2521 = vpow.pop %v2520
    %v2522 = vmul.f32 %v2512, 1.442695
    %v2523 = vpow.pop %v2522
    %v2524 = vmul.f32 %v2513, 1.442695
    %v2525 = vpow.pop %v2524
    %v2526 = vmul.f32 %v2514, 1.442695
    %v2527 = vpow.pop %v2526
    %v2528 = vmul.f32 %v2515, 1.442695
    %v2529 = vpow.pop %v2528
    %v2530 = vmul.f32 %v2516, 1.442695
    %v2531 = vpow.pop %v2530
    %v2532 = vmul.f32 %v2517, 1.442695
    %v2533 = vpow.pop %v2532
    %v2534 = vadd.f32 %v2519, 1.0
    %v2535 = vadd.f32 %v2521, 1.0
    %v2536 = vadd.f32 %v2523, 1.0
    %v2537 = vadd.f32 %v2525, 1.0
    %v2538 = vadd.f32 %v2527, 1.0
    %v2539 = vadd.f32 %v2529, 1.0
    %v2540 = vadd.f32 %v2531, 1.0
    %v2541 = vadd.f32 %v2533, 1.0
    %v2542 = vrcp.pop %v2534
    %v2543 = vmul.f32 1.0, %v2542
    %v2544 = vrcp.pop %v2535
    %v2545 = vmul.f32 1.0, %v2544
    %v2546 = vrcp.pop %v2536
    %v2547 = vmul.f32 1.0, %v2546
    %v2548 = vrcp.pop %v2537
    %v2549 = vmul.f32 1.0, %v2548
    %v2550 = vrcp.pop %v2538
    %v2551 = vmul.f32 1.0, %v2550
    %v2552 = vrcp.pop %v2539
    %v2553 = vmul.f32 1.0, %v2552
    %v2554 = vrcp.pop %v2540
    %v2555 = vmul.f32 1.0, %v2554
    %v2556 = vrcp.pop %v2541
    %v2557 = vmul.f32 1.0, %v2556
    %v2558 = vxor.u32 %v2475, 2147483648
    %v2559 = vxor.u32 %v2479, 2147483648
    %v2560 = vxor.u32 %v2483, 2147483648
    %v2561 = vxor.u32 %v2487, 2147483648
    %v2562 = vxor.u32 %v2491, 2147483648
    %v2563 = vxor.u32 %v2495, 2147483648
    %v2564 = vxor.u32 %v2499, 2147483648
    %v2565 = vxor.u32 %v2503, 2147483648
    %v2566 = vmul.f32 %v2558, 1.442695
    %v2567 = vpow.pop %v2566
    %v2568 = vmul.f32 %v2559, 1.442695
    %v2569 = vpow.pop %v2568
    %v2570 = vmul.f32 %v2560, 1.442695
    %v2571 = vpow.pop %v2570
    %v2572 = vmul.f32 %v2561, 1.442695
    %v2573 = vpow.pop %v2572
    %v2574 = vmul.f32 %v2562, 1.442695
    %v2575 = vpow.pop %v2574
    %v2576 = vmul.f32 %v2563, 1.442695
    %v2577 = vpow.pop %v2576
    %v2578 = vmul.f32 %v2564, 1.442695
    %v2579 = vpow.pop %v2578
    %v2580 = vmul.f32 %v2565, 1.442695
    %v2581 = vpow.pop %v2580
    %v2582 = vadd.f32 %v2567, 1.0
    %v2583 = vadd.f32 %v2569, 1.0
    %v2584 = vadd.f32 %v2571, 1.0
    %v2585 = vadd.f32 %v2573, 1.0
    %v2586 = vadd.f32 %v2575, 1.0
    %v2587 = vadd.f32 %v2577, 1.0
    %v2588 = vadd.f32 %v2579, 1.0
    %v2589 = vadd.f32 %v2581, 1.0
    %v2590 = vrcp.pop %v2582
    %v2591 = vmul.f32 1.0, %v2590
    %v2592 = vrcp.pop %v2583
    %v2593 = vmul.f32 1.0, %v2592
    %v2594 = vrcp.pop %v2584
    %v2595 = vmul.f32 1.0, %v2594
    %v2596 = vrcp.pop %v2585
    %v2597 = vmul.f32 1.0, %v2596
    %v2598 = vrcp.pop %v2586
    %v2599 = vmul.f32 1.0, %v2598
    %v2600 = vrcp.pop %v2587
    %v2601 = vmul.f32 1.0, %v2600
    %v2602 = vrcp.pop %v2588
    %v2603 = vmul.f32 1.0, %v2602
    %v2604 = vrcp.pop %v2589
    %v2605 = vmul.f32 1.0, %v2604
    %v2606 = vtanh.pop %v2476
    %v2607 = vtanh.pop %v2480
    %v2608 = vtanh.pop %v2484
    %v2609 = vtanh.pop %v2488
    %v2610 = vtanh.pop %v2492
    %v2611 = vtanh.pop %v2496
    %v2612 = vtanh.pop %v2500
    %v2613 = vtanh.pop %v2504
    %v2614 = vxor.u32 %v2477, 2147483648
    %v2615 = vxor.u32 %v2481, 2147483648
    %v2616 = vxor.u32 %v2485, 2147483648
    %v2617 = vxor.u32 %v2489, 2147483648
    %v2618 = vxor.u32 %v2493, 2147483648
    %v2619 = vxor.u32 %v2497, 2147483648
    %v2620 = vxor.u32 %v2501, 2147483648
    %v2621 = vxor.u32 %v2505, 2147483648
    %v2622 = vmul.f32 %v2614, 1.442695
    %v2623 = vpow.pop %v2622
    %v2624 = vmul.f32 %v2615, 1.442695
    %v2625 = vpow.pop %v2624
    %v2626 = vmul.f32 %v2616, 1.442695
    %v2627 = vpow.pop %v2626
    %v2628 = vmul.f32 %v2617, 1.442695
    %v2629 = vpow.pop %v2628
    %v2630 = vmul.f32 %v2618, 1.442695
    %v2631 = vpow.pop %v2630
    %v2632 = vmul.f32 %v2619, 1.442695
    %v2633 = vpow.pop %v2632
    %v2634 = vmul.f32 %v2620, 1.442695
    %v2635 = vpow.pop %v2634
    %v2636 = vmul.f32 %v2621, 1.442695
    %v2637 = vpow.pop %v2636
    %v2638 = vadd.f32 %v2623, 1.0
    %v2639 = vadd.f32 %v2625, 1.0
    %v2640 = vadd.f32 %v2627, 1.0
    %v2641 = vadd.f32 %v2629, 1.0
    %v2642 = vadd.f32 %v2631, 1.0
    %v2643 = vadd.f32 %v2633, 1.0
    %v2644 = vadd.f32 %v2635, 1.0
    %v2645 = vadd.f32 %v2637, 1.0
    %v2646 = vrcp.pop %v2638
    %v2647 = vmul.f32 1.0, %v2646
    %v2648 = vrcp.pop %v2639
    %v2649 = vmul.f32 1.0, %v2648
    %v2650 = vrcp.pop %v2640
    %v2651 = vmul.f32 1.0, %v2650
    %v2652 = vrcp.pop %v2641
    %v2653 = vmul.f32 1.0, %v2652
    %v2654 = vrcp.pop %v2642
    %v2655 = vmul.f32 1.0, %v2654
    %v2656 = vrcp.pop %v2643
    %v2657 = vmul.f32 1.0, %v2656
    %v2658 = vrcp.pop %v2644
    %v2659 = vmul.f32 1.0, %v2658
    %v2660 = vrcp.pop %v2645
    %v2661 = vmul.f32 1.0, %v2660
    %v2670 = vrot.slane %v2047, 7
    %v2671 = vrot.slane %v2048, 7
    %v2672 = vrot.slane %v2049, 7
    %v2673 = vrot.slane %v2050, 7
    %v2674 = vrot.slane %v2051, 7
    %v2675 = vrot.slane %v2052, 7
    %v2676 = vrot.slane %v2053, 7
    %v2677 = vrot.slane %v2054, 7
    %v2686 = vmul.f32 %v2591, %v2670
    %v2687 = vmul.f32 %v2593, %v2671
    %v2688 = vmul.f32 %v2595, %v2672
    %v2689 = vmul.f32 %v2597, %v2673
    %v2690 = vmul.f32 %v2599, %v2674
    %v2691 = vmul.f32 %v2601, %v2675
    %v2692 = vmul.f32 %v2603, %v2676
    %v2693 = vmul.f32 %v2605, %v2677
    %v2694 = vmul.f32 %v2543, %v2606
    %v2695 = vmul.f32 %v2545, %v2607
    %v2696 = vmul.f32 %v2547, %v2608
    %v2697 = vmul.f32 %v2549, %v2609
    %v2698 = vmul.f32 %v2551, %v2610
    %v2699 = vmul.f32 %v2553, %v2611
    %v2700 = vmul.f32 %v2555, %v2612
    %v2701 = vmul.f32 %v2557, %v2613
    %v2702 = vadd.f32 %v2686, %v2694
    %v2703 = vadd.f32 %v2687, %v2695
    %v2704 = vadd.f32 %v2688, %v2696
    %v2705 = vadd.f32 %v2689, %v2697
    %v2706 = vadd.f32 %v2690, %v2698
    %v2707 = vadd.f32 %v2691, %v2699
    %v2708 = vadd.f32 %v2692, %v2700
    %v2709 = vadd.f32 %v2693, %v2701
    %v2710 = vtanh.pop %v2702
    %v2711 = vtanh.pop %v2703
    %v2712 = vtanh.pop %v2704
    %v2713 = vtanh.pop %v2705
    %v2714 = vtanh.pop %v2706
    %v2715 = vtanh.pop %v2707
    %v2716 = vtanh.pop %v2708
    %v2717 = vtanh.pop %v2709
    %v2718 = vmul.f32 %v2647, %v2710
    %v2719 = vmul.f32 %v2649, %v2711
    %v2720 = vmul.f32 %v2651, %v2712
    %v2721 = vmul.f32 %v2653, %v2713
    %v2722 = vmul.f32 %v2655, %v2714
    %v2723 = vmul.f32 %v2657, %v2715
    %v2724 = vmul.f32 %v2659, %v2716
    %v2725 = vmul.f32 %v2661, %v2717
    %v2726 = vxor.u32 %v2506, 2147483648
    %v2727 = vmul.f32 %v2726, 1.442695
    %v2728 = vpow.pop %v2727
    %v2729 = vadd.f32 %v2728, 1.0
    %v2730 = vrcp.pop %v2729
    %v2731 = vmul.f32 1.0, %v2730
    %v2732 = vxor.u32 %v2507, 2147483648
    %v2733 = vmul.f32 %v2732, 1.442695
    %v2734 = vpow.pop %v2733
    %v2735 = vadd.f32 %v2734, 1.0
    %v2736 = vrcp.pop %v2735
    %v2737 = vmul.f32 1.0, %v2736
    %v2738 = vtanh.pop %v2508
    %v2739 = vxor.u32 %v2509, 2147483648
    %v2740 = vmul.f32 %v2739, 1.442695
    %v2741 = vpow.pop %v2740
    %v2742 = vadd.f32 %v2741, 1.0
    %v2743 = vrcp.pop %v2742
    %v2744 = vmul.f32 1.0, %v2743
    %v2745 = vmul.f32 %v2737, %v2092
    %v2746 = vmul.f32 %v2731, %v2738
    %v2747 = vadd.f32 %v2745, %v2746
    %v2748 = vtanh.pop %v2747
    %v2749 = vmul.f32 %v2744, %v2748
    %v2758 = vrot.slane %v2719, 7
    %v2759 = vsel %vm783, %v2758, %v2718
    %v2760 = vrot.slane %v2720, 6
    %v2761 = vsel %vm786, %v2760, %v2759
    %v2762 = vrot.slane %v2721, 5
    %v2763 = vsel %vm789, %v2762, %v2761
    %v2764 = vrot.slane %v2722, 4
    %v2765 = vsel %vm792, %v2764, %v2763
    %v2766 = vrot.slane %v2723, 3
    %v2767 = vrot.slane %v2724, 2
    %v2768 = vsel %vm774, %v2767, %v2766
    %v2769 = vrot.slane %v2725, 1
    %v2770 = vsel %vm777, %v2769, %v2768
    %v2772 = vrot.slane %v2749, 5
    %vm2773 = vcmask 1044480
    %v2774 = vrot.slane %v2765, 3
    %v2775 = vrot.slane %v2770, 3
    %v2776 = vsel %vm2773, %v2774, %v2775
    %v2777 = vrot.slane %v2772, 3
    %v2778 = vsel %vm2773, %v2777, %v2777
    %2781 = vmatprep.subr.mxu0 %v317
    %2782 = vmatpush1.msra.mxu0 %v316
    %2783 = vmatprep.subr.mxu0 %v325
    %2784 = vmatpush1.msra.mxu0 %v324
    %2785 = vmatprep.subr.mxu0 %v333
    %2786 = vmatpush1.msra.mxu0 %v332
    %2787 = vmatprep.subr.mxu0 %v341
    %2788 = vmatpush1.msra.mxu0 %v340
    %2789 = vmatprep.subr.mxu0 %v349
    %2790 = vmatpush1.msra.mxu0 %v348
    %2791 = vmatprep.subr.mxu0 %v357
    %2792 = vmatpush1.msra.mxu0 %v356
    %2793 = vmatprep.subr.mxu0 %v365
    %2794 = vmatpush1.msra.mxu0 %v364
    %2795 = vmatprep.subr.mxu0 %v373
    %2796 = vmatpush1.msra.mxu0 %v372
    %2797 = vmatprep.subr.mxu0 %v381
    %2798 = vmatpush1.msra.mxu0 %v380
    %2799 = vmatprep.subr.mxu0 %v389
    %2800 = vmatpush1.msra.mxu0 %v388
    %2801 = vmatprep.subr.mxu0 %v397
    %2802 = vmatpush1.msra.mxu0 %v396
    %2803 = vmatprep.subr.mxu0 %v405
    %2804 = vmatpush1.msra.mxu0 %v404
    %2805 = vmatprep.subr.mxu0 %v413
    %2806 = vmatpush1.msra.mxu0 %v412
    %2807 = vmatprep.subr.mxu0 %v421
    %2808 = vmatpush1.msra.mxu0 %v420
    %2809 = vmatprep.subr.mxu0 %v429
    %2810 = vmatpush1.msra.mxu0 %v428
    %2811 = vmatprep.subr.mxu0 %v437
    %2812 = vmatpush1.msra.mxu0 %v436
    %2813 = vmatprep.subr.mxu0 %v445
    %2814 = vmatpush1.msra.mxu0 %v444
    %2815 = vmatprep.subr.mxu0 %v453
    %2816 = vmatpush1.msra.mxu0 %v452
    %2817 = vmatprep.subr.mxu0 %v461
    %2818 = vmatpush1.msra.mxu0 %v460
    %2819 = vmatprep.subr.mxu0 %v469
    %2820 = vmatpush1.msra.mxu0 %v468
    %2821 = vmatprep.subr.mxu0 %v477
    %2822 = vmatpush1.msra.mxu0 %v476
    %2823 = vmatprep.subr.mxu0 %v485
    %2824 = vmatpush1.msra.mxu0 %v484
    %2825 = vmatprep.subr.mxu0 %v493
    %2826 = vmatpush1.msra.mxu0 %v492
    %2827 = vmatprep.subr.mxu0 %v501
    %2828 = vmatpush1.msra.mxu0 %v500
    %2829 = vmatprep.subr.mxu0 %v509
    %2830 = vmatpush1.msra.mxu0 %v508
    %2831 = vmatprep.subr.mxu0 %v517
    %2832 = vmatpush1.msra.mxu0 %v516
    %2833 = vmatprep.subr.mxu0 %v525
    %2834 = vmatpush1.msra.mxu0 %v524
    %2835 = vmatprep.subr.mxu0 %v533
    %2836 = vmatpush1.msra.mxu0 %v532
    %2837 = vmatprep.subr.mxu0 %v541
    %2838 = vmatpush1.msra.mxu0 %v540
    %2839 = vmatprep.subr.mxu0 %v549
    %2840 = vmatpush1.msra.mxu0 %v548
    %2841 = vmatprep.subr.mxu0 %v557
    %2842 = vmatpush1.msra.mxu0 %v556
    %2843 = vmatprep.subr.mxu0 %v565
    %2844 = vmatpush1.msra.mxu0 %v564
    %2845 = vmatprep.mubr.f32.mxu0 %v2778
    %2846 = vmatmul.mubr.f32.gmra.mrb[0].mxu0 %v2776
    %v2847 = vpop.f32.mrb[0].mxu0
    %v2848 = vadd.f32 0.0, %v2847
    %v2849 = vpop.f32.mrb[0].mxu0
    %v2850 = vadd.f32 0.0, %v2849
    %2851 = vdwg.mxu0
    %2852 = vmatprep.subr.mxu0 %v319
    %2853 = vmatpush1.msra.mxu0 %v318
    %2854 = vmatprep.subr.mxu0 %v327
    %2855 = vmatpush1.msra.mxu0 %v326
    %2856 = vmatprep.subr.mxu0 %v335
    %2857 = vmatpush1.msra.mxu0 %v334
    %2858 = vmatprep.subr.mxu0 %v343
    %2859 = vmatpush1.msra.mxu0 %v342
    %2860 = vmatprep.subr.mxu0 %v351
    %2861 = vmatpush1.msra.mxu0 %v350
    %2862 = vmatprep.subr.mxu0 %v359
    %2863 = vmatpush1.msra.mxu0 %v358
    %2864 = vmatprep.subr.mxu0 %v367
    %2865 = vmatpush1.msra.mxu0 %v366
    %2866 = vmatprep.subr.mxu0 %v375
    %2867 = vmatpush1.msra.mxu0 %v374
    %2868 = vmatprep.subr.mxu0 %v383
    %2869 = vmatpush1.msra.mxu0 %v382
    %2870 = vmatprep.subr.mxu0 %v391
    %2871 = vmatpush1.msra.mxu0 %v390
    %2872 = vmatprep.subr.mxu0 %v399
    %2873 = vmatpush1.msra.mxu0 %v398
    %2874 = vmatprep.subr.mxu0 %v407
    %2875 = vmatpush1.msra.mxu0 %v406
    %2876 = vmatprep.subr.mxu0 %v415
    %2877 = vmatpush1.msra.mxu0 %v414
    %2878 = vmatprep.subr.mxu0 %v423
    %2879 = vmatpush1.msra.mxu0 %v422
    %2880 = vmatprep.subr.mxu0 %v431
    %2881 = vmatpush1.msra.mxu0 %v430
    %2882 = vmatprep.subr.mxu0 %v439
    %2883 = vmatpush1.msra.mxu0 %v438
    %2884 = vmatprep.subr.mxu0 %v447
    %2885 = vmatpush1.msra.mxu0 %v446
    %2886 = vmatprep.subr.mxu0 %v455
    %2887 = vmatpush1.msra.mxu0 %v454
    %2888 = vmatprep.subr.mxu0 %v463
    %2889 = vmatpush1.msra.mxu0 %v462
    %2890 = vmatprep.subr.mxu0 %v471
    %2891 = vmatpush1.msra.mxu0 %v470
    %2892 = vmatprep.subr.mxu0 %v479
    %2893 = vmatpush1.msra.mxu0 %v478
    %2894 = vmatprep.subr.mxu0 %v487
    %2895 = vmatpush1.msra.mxu0 %v486
    %2896 = vmatprep.subr.mxu0 %v495
    %2897 = vmatpush1.msra.mxu0 %v494
    %2898 = vmatprep.subr.mxu0 %v503
    %2899 = vmatpush1.msra.mxu0 %v502
    %2900 = vmatprep.subr.mxu0 %v511
    %2901 = vmatpush1.msra.mxu0 %v510
    %2902 = vmatprep.subr.mxu0 %v519
    %2903 = vmatpush1.msra.mxu0 %v518
    %2904 = vmatprep.subr.mxu0 %v527
    %2905 = vmatpush1.msra.mxu0 %v526
    %2906 = vmatprep.subr.mxu0 %v535
    %2907 = vmatpush1.msra.mxu0 %v534
    %2908 = vmatprep.subr.mxu0 %v543
    %2909 = vmatpush1.msra.mxu0 %v542
    %2910 = vmatprep.subr.mxu0 %v551
    %2911 = vmatpush1.msra.mxu0 %v550
    %2912 = vmatprep.subr.mxu0 %v559
    %2913 = vmatpush1.msra.mxu0 %v558
    %2914 = vmatprep.subr.mxu0 %v567
    %2915 = vmatpush1.msra.mxu0 %v566
    %2916 = vmatprep.mubr.f32.mxu0 %v2778
    %2917 = vmatmul.mubr.f32.gmra.mrb[0].mxu0 %v2776
    %v2918 = vpop.f32.mrb[0].mxu0
    %v2919 = vadd.f32 0.0, %v2918
    %v2920 = vpop.f32.mrb[0].mxu0
    %v2921 = vadd.f32 0.0, %v2920
    %2922 = vdwg.mxu0
    %2923 = vmatprep.subr.mxu0 %v321
    %2924 = vmatpush1.msra.mxu0 %v320
    %2925 = vmatprep.subr.mxu0 %v329
    %2926 = vmatpush1.msra.mxu0 %v328
    %2927 = vmatprep.subr.mxu0 %v337
    %2928 = vmatpush1.msra.mxu0 %v336
    %2929 = vmatprep.subr.mxu0 %v345
    %2930 = vmatpush1.msra.mxu0 %v344
    %2931 = vmatprep.subr.mxu0 %v353
    %2932 = vmatpush1.msra.mxu0 %v352
    %2933 = vmatprep.subr.mxu0 %v361
    %2934 = vmatpush1.msra.mxu0 %v360
    %2935 = vmatprep.subr.mxu0 %v369
    %2936 = vmatpush1.msra.mxu0 %v368
    %2937 = vmatprep.subr.mxu0 %v377
    %2938 = vmatpush1.msra.mxu0 %v376
    %2939 = vmatprep.subr.mxu0 %v385
    %2940 = vmatpush1.msra.mxu0 %v384
    %2941 = vmatprep.subr.mxu0 %v393
    %2942 = vmatpush1.msra.mxu0 %v392
    %2943 = vmatprep.subr.mxu0 %v401
    %2944 = vmatpush1.msra.mxu0 %v400
    %2945 = vmatprep.subr.mxu0 %v409
    %2946 = vmatpush1.msra.mxu0 %v408
    %2947 = vmatprep.subr.mxu0 %v417
    %2948 = vmatpush1.msra.mxu0 %v416
    %2949 = vmatprep.subr.mxu0 %v425
    %2950 = vmatpush1.msra.mxu0 %v424
    %2951 = vmatprep.subr.mxu0 %v433
    %2952 = vmatpush1.msra.mxu0 %v432
    %2953 = vmatprep.subr.mxu0 %v441
    %2954 = vmatpush1.msra.mxu0 %v440
    %2955 = vmatprep.subr.mxu0 %v449
    %2956 = vmatpush1.msra.mxu0 %v448
    %2957 = vmatprep.subr.mxu0 %v457
    %2958 = vmatpush1.msra.mxu0 %v456
    %2959 = vmatprep.subr.mxu0 %v465
    %2960 = vmatpush1.msra.mxu0 %v464
    %2961 = vmatprep.subr.mxu0 %v473
    %2962 = vmatpush1.msra.mxu0 %v472
    %2963 = vmatprep.subr.mxu0 %v481
    %2964 = vmatpush1.msra.mxu0 %v480
    %2965 = vmatprep.subr.mxu0 %v489
    %2966 = vmatpush1.msra.mxu0 %v488
    %2967 = vmatprep.subr.mxu0 %v497
    %2968 = vmatpush1.msra.mxu0 %v496
    %2969 = vmatprep.subr.mxu0 %v505
    %2970 = vmatpush1.msra.mxu0 %v504
    %2971 = vmatprep.subr.mxu0 %v513
    %2972 = vmatpush1.msra.mxu0 %v512
    %2973 = vmatprep.subr.mxu0 %v521
    %2974 = vmatpush1.msra.mxu0 %v520
    %2975 = vmatprep.subr.mxu0 %v529
    %2976 = vmatpush1.msra.mxu0 %v528
    %2977 = vmatprep.subr.mxu0 %v537
    %2978 = vmatpush1.msra.mxu0 %v536
    %2979 = vmatprep.subr.mxu0 %v545
    %2980 = vmatpush1.msra.mxu0 %v544
    %2981 = vmatprep.subr.mxu0 %v553
    %2982 = vmatpush1.msra.mxu0 %v552
    %2983 = vmatprep.subr.mxu0 %v561
    %2984 = vmatpush1.msra.mxu0 %v560
    %2985 = vmatprep.subr.mxu0 %v569
    %2986 = vmatpush1.msra.mxu0 %v568
    %2987 = vmatprep.mubr.f32.mxu0 %v2778
    %2988 = vmatmul.mubr.f32.gmra.mrb[0].mxu0 %v2776
    %v2989 = vpop.f32.mrb[0].mxu0
    %v2990 = vadd.f32 0.0, %v2989
    %v2991 = vpop.f32.mrb[0].mxu0
    %v2992 = vadd.f32 0.0, %v2991
    %2993 = vdwg.mxu0
    %2994 = vmatprep.subr.mxu0 %v323
    %2995 = vmatpush1.msra.mxu0 %v322
    %2996 = vmatprep.subr.mxu0 %v331
    %2997 = vmatpush1.msra.mxu0 %v330
    %2998 = vmatprep.subr.mxu0 %v339
    %2999 = vmatpush1.msra.mxu0 %v338
    %3000 = vmatprep.subr.mxu0 %v347
    %3001 = vmatpush1.msra.mxu0 %v346
    %3002 = vmatprep.subr.mxu0 %v355
    %3003 = vmatpush1.msra.mxu0 %v354
    %3004 = vmatprep.subr.mxu0 %v363
    %3005 = vmatpush1.msra.mxu0 %v362
    %3006 = vmatprep.subr.mxu0 %v371
    %3007 = vmatpush1.msra.mxu0 %v370
    %3008 = vmatprep.subr.mxu0 %v379
    %3009 = vmatpush1.msra.mxu0 %v378
    %3010 = vmatprep.subr.mxu0 %v387
    %3011 = vmatpush1.msra.mxu0 %v386
    %3012 = vmatprep.subr.mxu0 %v395
    %3013 = vmatpush1.msra.mxu0 %v394
    %3014 = vmatprep.subr.mxu0 %v403
    %3015 = vmatpush1.msra.mxu0 %v402
    %3016 = vmatprep.subr.mxu0 %v411
    %3017 = vmatpush1.msra.mxu0 %v410
    %3018 = vmatprep.subr.mxu0 %v419
    %3019 = vmatpush1.msra.mxu0 %v418
    %3020 = vmatprep.subr.mxu0 %v427
    %3021 = vmatpush1.msra.mxu0 %v426
    %3022 = vmatprep.subr.mxu0 %v435
    %3023 = vmatpush1.msra.mxu0 %v434
    %3024 = vmatprep.subr.mxu0 %v443
    %3025 = vmatpush1.msra.mxu0 %v442
    %3026 = vmatprep.subr.mxu0 %v451
    %3027 = vmatpush1.msra.mxu0 %v450
    %3028 = vmatprep.subr.mxu0 %v459
    %3029 = vmatpush1.msra.mxu0 %v458
    %3030 = vmatprep.subr.mxu0 %v467
    %3031 = vmatpush1.msra.mxu0 %v466
    %3032 = vmatprep.subr.mxu0 %v475
    %3033 = vmatpush1.msra.mxu0 %v474
    %3034 = vmatprep.subr.mxu0 %v483
    %3035 = vmatpush1.msra.mxu0 %v482
    %3036 = vmatprep.subr.mxu0 %v491
    %3037 = vmatpush1.msra.mxu0 %v490
    %3038 = vmatprep.subr.mxu0 %v499
    %3039 = vmatpush1.msra.mxu0 %v498
    %3040 = vmatprep.subr.mxu0 %v507
    %3041 = vmatpush1.msra.mxu0 %v506
    %3042 = vmatprep.subr.mxu0 %v515
    %3043 = vmatpush1.msra.mxu0 %v514
    %3044 = vmatprep.subr.mxu0 %v523
    %3045 = vmatpush1.msra.mxu0 %v522
    %3046 = vmatprep.subr.mxu0 %v531
    %3047 = vmatpush1.msra.mxu0 %v530
    %3048 = vmatprep.subr.mxu0 %v539
    %3049 = vmatpush1.msra.mxu0 %v538
    %3050 = vmatprep.subr.mxu0 %v547
    %3051 = vmatpush1.msra.mxu0 %v546
    %3052 = vmatprep.subr.mxu0 %v555
    %3053 = vmatpush1.msra.mxu0 %v554
    %3054 = vmatprep.subr.mxu0 %v563
    %3055 = vmatpush1.msra.mxu0 %v562
    %3056 = vmatprep.subr.mxu0 %v571
    %3057 = vmatpush1.msra.mxu0 %v570
    %3058 = vmatprep.mubr.f32.mxu0 %v2778
    %3059 = vmatmul.mubr.f32.gmra.mrb[0].mxu0 %v2776
    %v3060 = vpop.f32.mrb[0].mxu0
    %v3061 = vadd.f32 0.0, %v3060
    %v3062 = vpop.f32.mrb[0].mxu0
    %v3063 = vadd.f32 0.0, %v3062
    %3064 = vdwg.mxu0
    %v3069 = vrot.slane %v2848, 4
    %v3070 = vrot.slane %v2850, 4
    %v3071 = vrot.slane %v2919, 4
    %v3072 = vrot.slane %v2921, 4
    %v3073 = vrot.slane %v2848, 5
    %v3074 = vrot.slane %v2850, 5
    %v3075 = vrot.slane %v2919, 5
    %v3076 = vrot.slane %v2921, 5
    %v3077 = vrot.slane %v2848, 6
    %v3078 = vrot.slane %v2850, 6
    %v3079 = vrot.slane %v2919, 6
    %v3080 = vrot.slane %v2921, 6
    %v3081 = vrot.slane %v2848, 7
    %v3082 = vrot.slane %v2850, 7
    %v3083 = vrot.slane %v2919, 7
    %v3084 = vrot.slane %v2921, 7
    %v3085 = vrot.slane %v2848, 1
    %v3086 = vrot.slane %v2850, 1
    %v3087 = vrot.slane %v2919, 1
    %v3088 = vrot.slane %v2921, 1
    %v3089 = vrot.slane %v2848, 2
    %v3090 = vrot.slane %v2850, 2
    %v3091 = vrot.slane %v2919, 2
    %v3092 = vrot.slane %v2921, 2
    %v3093 = vrot.slane %v2848, 3
    %v3094 = vrot.slane %v2850, 3
    %v3095 = vrot.slane %v2919, 3
    %v3096 = vrot.slane %v2921, 3
    %v3129 = vadd.f32 %v157, %v3069
    %v3130 = vadd.f32 %v159, %v3070
    %v3131 = vadd.f32 %v270, %v3071
    %v3132 = vadd.f32 %v272, %v3072
    %v3133 = vadd.f32 %v163, %v3073
    %v3134 = vadd.f32 %v165, %v3074
    %v3135 = vadd.f32 %v276, %v3075
    %v3136 = vadd.f32 %v278, %v3076
    %v3137 = vadd.f32 %v169, %v3077
    %v3138 = vadd.f32 %v171, %v3078
    %v3139 = vadd.f32 %v282, %v3079
    %v3140 = vadd.f32 %v284, %v3080
    %v3141 = vadd.f32 %v175, %v3081
    %v3142 = vadd.f32 %v177, %v3082
    %v3143 = vadd.f32 %v288, %v3083
    %v3144 = vadd.f32 %v290, %v3084
    %v3145 = vadd.f32 %v181, %v2848
    %v3146 = vadd.f32 %v183, %v2850
    %v3147 = vadd.f32 %v294, %v2919
    %v3148 = vadd.f32 %v296, %v2921
    %v3149 = vadd.f32 %v187, %v3085
    %v3150 = vadd.f32 %v189, %v3086
    %v3151 = vadd.f32 %v300, %v3087
    %v3152 = vadd.f32 %v302, %v3088
    %v3153 = vadd.f32 %v193, %v3089
    %v3154 = vadd.f32 %v195, %v3090
    %v3155 = vadd.f32 %v306, %v3091
    %v3156 = vadd.f32 %v308, %v3092
    %v3157 = vadd.f32 %v199, %v3093
    %v3158 = vadd.f32 %v201, %v3094
    %v3159 = vadd.f32 %v312, %v3095
    %v3160 = vadd.f32 %v314, %v3096
    %v3161 = vadd.f32 %v2990, %v1179
    %v3162 = vadd.f32 %v2992, %v1183
    %v3163 = vadd.f32 %v3061, %v1187
    %v3164 = vadd.f32 %v3063, %v1191
    %v3165 = vxor.u32 %v3129, 2147483648
    %v3166 = vxor.u32 %v3133, 2147483648
    %v3167 = vxor.u32 %v3137, 2147483648
    %v3168 = vxor.u32 %v3141, 2147483648
    %v3169 = vxor.u32 %v3145, 2147483648
    %v3170 = vxor.u32 %v3149, 2147483648
    %v3171 = vxor.u32 %v3153, 2147483648
    %v3172 = vxor.u32 %v3157, 2147483648
    %v3173 = vmul.f32 %v3165, 1.442695
    %v3174 = vpow.pop %v3173
    %v3175 = vmul.f32 %v3166, 1.442695
    %v3176 = vpow.pop %v3175
    %v3177 = vmul.f32 %v3167, 1.442695
    %v3178 = vpow.pop %v3177
    %v3179 = vmul.f32 %v3168, 1.442695
    %v3180 = vpow.pop %v3179
    %v3181 = vmul.f32 %v3169, 1.442695
    %v3182 = vpow.pop %v3181
    %v3183 = vmul.f32 %v3170, 1.442695
    %v3184 = vpow.pop %v3183
    %v3185 = vmul.f32 %v3171, 1.442695
    %v3186 = vpow.pop %v3185
    %v3187 = vmul.f32 %v3172, 1.442695
    %v3188 = vpow.pop %v3187
    %v3189 = vadd.f32 %v3174, 1.0
    %v3190 = vadd.f32 %v3176, 1.0
    %v3191 = vadd.f32 %v3178, 1.0
    %v3192 = vadd.f32 %v3180, 1.0
    %v3193 = vadd.f32 %v3182, 1.0
    %v3194 = vadd.f32 %v3184, 1.0
    %v3195 = vadd.f32 %v3186, 1.0
    %v3196 = vadd.f32 %v3188, 1.0
    %v3197 = vrcp.pop %v3189
    %v3198 = vmul.f32 1.0, %v3197
    %v3199 = vrcp.pop %v3190
    %v3200 = vmul.f32 1.0, %v3199
    %v3201 = vrcp.pop %v3191
    %v3202 = vmul.f32 1.0, %v3201
    %v3203 = vrcp.pop %v3192
    %v3204 = vmul.f32 1.0, %v3203
    %v3205 = vrcp.pop %v3193
    %v3206 = vmul.f32 1.0, %v3205
    %v3207 = vrcp.pop %v3194
    %v3208 = vmul.f32 1.0, %v3207
    %v3209 = vrcp.pop %v3195
    %v3210 = vmul.f32 1.0, %v3209
    %v3211 = vrcp.pop %v3196
    %v3212 = vmul.f32 1.0, %v3211
    %v3213 = vxor.u32 %v3130, 2147483648
    %v3214 = vxor.u32 %v3134, 2147483648
    %v3215 = vxor.u32 %v3138, 2147483648
    %v3216 = vxor.u32 %v3142, 2147483648
    %v3217 = vxor.u32 %v3146, 2147483648
    %v3218 = vxor.u32 %v3150, 2147483648
    %v3219 = vxor.u32 %v3154, 2147483648
    %v3220 = vxor.u32 %v3158, 2147483648
    %v3221 = vmul.f32 %v3213, 1.442695
    %v3222 = vpow.pop %v3221
    %v3223 = vmul.f32 %v3214, 1.442695
    %v3224 = vpow.pop %v3223
    %v3225 = vmul.f32 %v3215, 1.442695
    %v3226 = vpow.pop %v3225
    %v3227 = vmul.f32 %v3216, 1.442695
    %v3228 = vpow.pop %v3227
    %v3229 = vmul.f32 %v3217, 1.442695
    %v3230 = vpow.pop %v3229
    %v3231 = vmul.f32 %v3218, 1.442695
    %v3232 = vpow.pop %v3231
    %v3233 = vmul.f32 %v3219, 1.442695
    %v3234 = vpow.pop %v3233
    %v3235 = vmul.f32 %v3220, 1.442695
    %v3236 = vpow.pop %v3235
    %v3237 = vadd.f32 %v3222, 1.0
    %v3238 = vadd.f32 %v3224, 1.0
    %v3239 = vadd.f32 %v3226, 1.0
    %v3240 = vadd.f32 %v3228, 1.0
    %v3241 = vadd.f32 %v3230, 1.0
    %v3242 = vadd.f32 %v3232, 1.0
    %v3243 = vadd.f32 %v3234, 1.0
    %v3244 = vadd.f32 %v3236, 1.0
    %v3245 = vrcp.pop %v3237
    %v3246 = vmul.f32 1.0, %v3245
    %v3247 = vrcp.pop %v3238
    %v3248 = vmul.f32 1.0, %v3247
    %v3249 = vrcp.pop %v3239
    %v3250 = vmul.f32 1.0, %v3249
    %v3251 = vrcp.pop %v3240
    %v3252 = vmul.f32 1.0, %v3251
    %v3253 = vrcp.pop %v3241
    %v3254 = vmul.f32 1.0, %v3253
    %v3255 = vrcp.pop %v3242
    %v3256 = vmul.f32 1.0, %v3255
    %v3257 = vrcp.pop %v3243
    %v3258 = vmul.f32 1.0, %v3257
    %v3259 = vrcp.pop %v3244
    %v3260 = vmul.f32 1.0, %v3259
    %v3261 = vtanh.pop %v3131
    %v3262 = vtanh.pop %v3135
    %v3263 = vtanh.pop %v3139
    %v3264 = vtanh.pop %v3143
    %v3265 = vtanh.pop %v3147
    %v3266 = vtanh.pop %v3151
    %v3267 = vtanh.pop %v3155
    %v3268 = vtanh.pop %v3159
    %v3269 = vxor.u32 %v3132, 2147483648
    %v3270 = vxor.u32 %v3136, 2147483648
    %v3271 = vxor.u32 %v3140, 2147483648
    %v3272 = vxor.u32 %v3144, 2147483648
    %v3273 = vxor.u32 %v3148, 2147483648
    %v3274 = vxor.u32 %v3152, 2147483648
    %v3275 = vxor.u32 %v3156, 2147483648
    %v3276 = vxor.u32 %v3160, 2147483648
    %v3277 = vmul.f32 %v3269, 1.442695
    %v3278 = vpow.pop %v3277
    %v3279 = vmul.f32 %v3270, 1.442695
    %v3280 = vpow.pop %v3279
    %v3281 = vmul.f32 %v3271, 1.442695
    %v3282 = vpow.pop %v3281
    %v3283 = vmul.f32 %v3272, 1.442695
    %v3284 = vpow.pop %v3283
    %v3285 = vmul.f32 %v3273, 1.442695
    %v3286 = vpow.pop %v3285
    %v3287 = vmul.f32 %v3274, 1.442695
    %v3288 = vpow.pop %v3287
    %v3289 = vmul.f32 %v3275, 1.442695
    %v3290 = vpow.pop %v3289
    %v3291 = vmul.f32 %v3276, 1.442695
    %v3292 = vpow.pop %v3291
    %v3293 = vadd.f32 %v3278, 1.0
    %v3294 = vadd.f32 %v3280, 1.0
    %v3295 = vadd.f32 %v3282, 1.0
    %v3296 = vadd.f32 %v3284, 1.0
    %v3297 = vadd.f32 %v3286, 1.0
    %v3298 = vadd.f32 %v3288, 1.0
    %v3299 = vadd.f32 %v3290, 1.0
    %v3300 = vadd.f32 %v3292, 1.0
    %v3301 = vrcp.pop %v3293
    %v3302 = vmul.f32 1.0, %v3301
    %v3303 = vrcp.pop %v3294
    %v3304 = vmul.f32 1.0, %v3303
    %v3305 = vrcp.pop %v3295
    %v3306 = vmul.f32 1.0, %v3305
    %v3307 = vrcp.pop %v3296
    %v3308 = vmul.f32 1.0, %v3307
    %v3309 = vrcp.pop %v3297
    %v3310 = vmul.f32 1.0, %v3309
    %v3311 = vrcp.pop %v3298
    %v3312 = vmul.f32 1.0, %v3311
    %v3313 = vrcp.pop %v3299
    %v3314 = vmul.f32 1.0, %v3313
    %v3315 = vrcp.pop %v3300
    %v3316 = vmul.f32 1.0, %v3315
    %v3325 = vrot.slane %v2702, 7
    %v3326 = vrot.slane %v2703, 7
    %v3327 = vrot.slane %v2704, 7
    %v3328 = vrot.slane %v2705, 7
    %v3329 = vrot.slane %v2706, 7
    %v3330 = vrot.slane %v2707, 7
    %v3331 = vrot.slane %v2708, 7
    %v3332 = vrot.slane %v2709, 7
    %v3341 = vmul.f32 %v3246, %v3325
    %v3342 = vmul.f32 %v3248, %v3326
    %v3343 = vmul.f32 %v3250, %v3327
    %v3344 = vmul.f32 %v3252, %v3328
    %v3345 = vmul.f32 %v3254, %v3329
    %v3346 = vmul.f32 %v3256, %v3330
    %v3347 = vmul.f32 %v3258, %v3331
    %v3348 = vmul.f32 %v3260, %v3332
    %v3349 = vmul.f32 %v3198, %v3261
    %v3350 = vmul.f32 %v3200, %v3262
    %v3351 = vmul.f32 %v3202, %v3263
    %v3352 = vmul.f32 %v3204, %v3264
    %v3353 = vmul.f32 %v3206, %v3265
    %v3354 = vmul.f32 %v3208, %v3266
    %v3355 = vmul.f32 %v3210, %v3267
    %v3356 = vmul.f32 %v3212, %v3268
    %v3357 = vadd.f32 %v3341, %v3349
    %v3358 = vadd.f32 %v3342, %v3350
    %v3359 = vadd.f32 %v3343, %v3351
    %v3360 = vadd.f32 %v3344, %v3352
    %v3361 = vadd.f32 %v3345, %v3353
    %v3362 = vadd.f32 %v3346, %v3354
    %v3363 = vadd.f32 %v3347, %v3355
    %v3364 = vadd.f32 %v3348, %v3356
    %v3365 = vtanh.pop %v3357
    %v3366 = vtanh.pop %v3358
    %v3367 = vtanh.pop %v3359
    %v3368 = vtanh.pop %v3360
    %v3369 = vtanh.pop %v3361
    %v3370 = vtanh.pop %v3362
    %v3371 = vtanh.pop %v3363
    %v3372 = vtanh.pop %v3364
    %v3373 = vmul.f32 %v3302, %v3365
    %v3374 = vmul.f32 %v3304, %v3366
    %v3375 = vmul.f32 %v3306, %v3367
    %v3376 = vmul.f32 %v3308, %v3368
    %v3377 = vmul.f32 %v3310, %v3369
    %v3378 = vmul.f32 %v3312, %v3370
    %v3379 = vmul.f32 %v3314, %v3371
    %v3380 = vmul.f32 %v3316, %v3372
    %v3381 = vxor.u32 %v3161, 2147483648
    %v3382 = vmul.f32 %v3381, 1.442695
    %v3383 = vpow.pop %v3382
    %v3384 = vadd.f32 %v3383, 1.0
    %v3385 = vrcp.pop %v3384
    %v3386 = vmul.f32 1.0, %v3385
    %v3387 = vxor.u32 %v3162, 2147483648
    %v3388 = vmul.f32 %v3387, 1.442695
    %v3389 = vpow.pop %v3388
    %v3390 = vadd.f32 %v3389, 1.0
    %v3391 = vrcp.pop %v3390
    %v3392 = vmul.f32 1.0, %v3391
    %v3393 = vtanh.pop %v3163
    %v3394 = vxor.u32 %v3164, 2147483648
    %v3395 = vmul.f32 %v3394, 1.442695
    %v3396 = vpow.pop %v3395
    %v3397 = vadd.f32 %v3396, 1.0
    %v3398 = vrcp.pop %v3397
    %v3399 = vmul.f32 1.0, %v3398
    %v3400 = vmul.f32 %v3392, %v2747
    %v3401 = vmul.f32 %v3386, %v3393
    %v3402 = vadd.f32 %v3400, %v3401
    %v3403 = vtanh.pop %v3402
    %v3404 = vmul.f32 %v3399, %v3403
    %v3413 = vrot.slane %v3374, 7
    %v3414 = vsel %vm786, %v3413, %v3373
    %v3415 = vrot.slane %v3375, 6
    %v3416 = vsel %vm789, %v3415, %v3414
    %v3417 = vrot.slane %v3376, 5
    %v3418 = vsel %vm792, %v3417, %v3416
    %v3419 = vrot.slane %v3377, 4
    %v3420 = vrot.slane %v3378, 3
    %v3421 = vsel %vm774, %v3420, %v3419
    %v3422 = vrot.slane %v3379, 2
    %v3423 = vsel %vm777, %v3422, %v3421
    %v3424 = vrot.slane %v3380, 1
    %v3425 = vsel %vm780, %v3424, %v3423
    %v3427 = vrot.slane %v3404, 4
    %vm3428 = vcmask 1043456
    %v3429 = vrot.slane %v3418, 4
    %v3430 = vrot.slane %v3425, 4
    %v3431 = vsel %vm3428, %v3429, %v3430
    %v3432 = vrot.slane %v3427, 4
    %v3433 = vsel %vm3428, %v3432, %v3432
    %3436 = vmatprep.subr.mxu0 %v317
    %3437 = vmatpush1.msra.mxu0 %v316
    %3438 = vmatprep.subr.mxu0 %v325
    %3439 = vmatpush1.msra.mxu0 %v324
    %3440 = vmatprep.subr.mxu0 %v333
    %3441 = vmatpush1.msra.mxu0 %v332
    %3442 = vmatprep.subr.mxu0 %v341
    %3443 = vmatpush1.msra.mxu0 %v340
    %3444 = vmatprep.subr.mxu0 %v349
    %3445 = vmatpush1.msra.mxu0 %v348
    %3446 = vmatprep.subr.mxu0 %v357
    %3447 = vmatpush1.msra.mxu0 %v356
    %3448 = vmatprep.subr.mxu0 %v365
    %3449 = vmatpush1.msra.mxu0 %v364
    %3450 = vmatprep.subr.mxu0 %v373
    %3451 = vmatpush1.msra.mxu0 %v372
    %3452 = vmatprep.subr.mxu0 %v381
    %3453 = vmatpush1.msra.mxu0 %v380
    %3454 = vmatprep.subr.mxu0 %v389
    %3455 = vmatpush1.msra.mxu0 %v388
    %3456 = vmatprep.subr.mxu0 %v397
    %3457 = vmatpush1.msra.mxu0 %v396
    %3458 = vmatprep.subr.mxu0 %v405
    %3459 = vmatpush1.msra.mxu0 %v404
    %3460 = vmatprep.subr.mxu0 %v413
    %3461 = vmatpush1.msra.mxu0 %v412
    %3462 = vmatprep.subr.mxu0 %v421
    %3463 = vmatpush1.msra.mxu0 %v420
    %3464 = vmatprep.subr.mxu0 %v429
    %3465 = vmatpush1.msra.mxu0 %v428
    %3466 = vmatprep.subr.mxu0 %v437
    %3467 = vmatpush1.msra.mxu0 %v436
    %3468 = vmatprep.subr.mxu0 %v445
    %3469 = vmatpush1.msra.mxu0 %v444
    %3470 = vmatprep.subr.mxu0 %v453
    %3471 = vmatpush1.msra.mxu0 %v452
    %3472 = vmatprep.subr.mxu0 %v461
    %3473 = vmatpush1.msra.mxu0 %v460
    %3474 = vmatprep.subr.mxu0 %v469
    %3475 = vmatpush1.msra.mxu0 %v468
    %3476 = vmatprep.subr.mxu0 %v477
    %3477 = vmatpush1.msra.mxu0 %v476
    %3478 = vmatprep.subr.mxu0 %v485
    %3479 = vmatpush1.msra.mxu0 %v484
    %3480 = vmatprep.subr.mxu0 %v493
    %3481 = vmatpush1.msra.mxu0 %v492
    %3482 = vmatprep.subr.mxu0 %v501
    %3483 = vmatpush1.msra.mxu0 %v500
    %3484 = vmatprep.subr.mxu0 %v509
    %3485 = vmatpush1.msra.mxu0 %v508
    %3486 = vmatprep.subr.mxu0 %v517
    %3487 = vmatpush1.msra.mxu0 %v516
    %3488 = vmatprep.subr.mxu0 %v525
    %3489 = vmatpush1.msra.mxu0 %v524
    %3490 = vmatprep.subr.mxu0 %v533
    %3491 = vmatpush1.msra.mxu0 %v532
    %3492 = vmatprep.subr.mxu0 %v541
    %3493 = vmatpush1.msra.mxu0 %v540
    %3494 = vmatprep.subr.mxu0 %v549
    %3495 = vmatpush1.msra.mxu0 %v548
    %3496 = vmatprep.subr.mxu0 %v557
    %3497 = vmatpush1.msra.mxu0 %v556
    %3498 = vmatprep.subr.mxu0 %v565
    %3499 = vmatpush1.msra.mxu0 %v564
    %3500 = vmatprep.mubr.f32.mxu0 %v3433
    %3501 = vmatmul.mubr.f32.gmra.mrb[0].mxu0 %v3431
    %v3502 = vpop.f32.mrb[0].mxu0
    %v3503 = vadd.f32 0.0, %v3502
    %v3504 = vpop.f32.mrb[0].mxu0
    %v3505 = vadd.f32 0.0, %v3504
    %3506 = vdwg.mxu0
    %3507 = vmatprep.subr.mxu0 %v319
    %3508 = vmatpush1.msra.mxu0 %v318
    %3509 = vmatprep.subr.mxu0 %v327
    %3510 = vmatpush1.msra.mxu0 %v326
    %3511 = vmatprep.subr.mxu0 %v335
    %3512 = vmatpush1.msra.mxu0 %v334
    %3513 = vmatprep.subr.mxu0 %v343
    %3514 = vmatpush1.msra.mxu0 %v342
    %3515 = vmatprep.subr.mxu0 %v351
    %3516 = vmatpush1.msra.mxu0 %v350
    %3517 = vmatprep.subr.mxu0 %v359
    %3518 = vmatpush1.msra.mxu0 %v358
    %3519 = vmatprep.subr.mxu0 %v367
    %3520 = vmatpush1.msra.mxu0 %v366
    %3521 = vmatprep.subr.mxu0 %v375
    %3522 = vmatpush1.msra.mxu0 %v374
    %3523 = vmatprep.subr.mxu0 %v383
    %3524 = vmatpush1.msra.mxu0 %v382
    %3525 = vmatprep.subr.mxu0 %v391
    %3526 = vmatpush1.msra.mxu0 %v390
    %3527 = vmatprep.subr.mxu0 %v399
    %3528 = vmatpush1.msra.mxu0 %v398
    %3529 = vmatprep.subr.mxu0 %v407
    %3530 = vmatpush1.msra.mxu0 %v406
    %3531 = vmatprep.subr.mxu0 %v415
    %3532 = vmatpush1.msra.mxu0 %v414
    %3533 = vmatprep.subr.mxu0 %v423
    %3534 = vmatpush1.msra.mxu0 %v422
    %3535 = vmatprep.subr.mxu0 %v431
    %3536 = vmatpush1.msra.mxu0 %v430
    %3537 = vmatprep.subr.mxu0 %v439
    %3538 = vmatpush1.msra.mxu0 %v438
    %3539 = vmatprep.subr.mxu0 %v447
    %3540 = vmatpush1.msra.mxu0 %v446
    %3541 = vmatprep.subr.mxu0 %v455
    %3542 = vmatpush1.msra.mxu0 %v454
    %3543 = vmatprep.subr.mxu0 %v463
    %3544 = vmatpush1.msra.mxu0 %v462
    %3545 = vmatprep.subr.mxu0 %v471
    %3546 = vmatpush1.msra.mxu0 %v470
    %3547 = vmatprep.subr.mxu0 %v479
    %3548 = vmatpush1.msra.mxu0 %v478
    %3549 = vmatprep.subr.mxu0 %v487
    %3550 = vmatpush1.msra.mxu0 %v486
    %3551 = vmatprep.subr.mxu0 %v495
    %3552 = vmatpush1.msra.mxu0 %v494
    %3553 = vmatprep.subr.mxu0 %v503
    %3554 = vmatpush1.msra.mxu0 %v502
    %3555 = vmatprep.subr.mxu0 %v511
    %3556 = vmatpush1.msra.mxu0 %v510
    %3557 = vmatprep.subr.mxu0 %v519
    %3558 = vmatpush1.msra.mxu0 %v518
    %3559 = vmatprep.subr.mxu0 %v527
    %3560 = vmatpush1.msra.mxu0 %v526
    %3561 = vmatprep.subr.mxu0 %v535
    %3562 = vmatpush1.msra.mxu0 %v534
    %3563 = vmatprep.subr.mxu0 %v543
    %3564 = vmatpush1.msra.mxu0 %v542
    %3565 = vmatprep.subr.mxu0 %v551
    %3566 = vmatpush1.msra.mxu0 %v550
    %3567 = vmatprep.subr.mxu0 %v559
    %3568 = vmatpush1.msra.mxu0 %v558
    %3569 = vmatprep.subr.mxu0 %v567
    %3570 = vmatpush1.msra.mxu0 %v566
    %3571 = vmatprep.mubr.f32.mxu0 %v3433
    %3572 = vmatmul.mubr.f32.gmra.mrb[0].mxu0 %v3431
    %v3573 = vpop.f32.mrb[0].mxu0
    %v3574 = vadd.f32 0.0, %v3573
    %v3575 = vpop.f32.mrb[0].mxu0
    %v3576 = vadd.f32 0.0, %v3575
    %3577 = vdwg.mxu0
    %3578 = vmatprep.subr.mxu0 %v321
    %3579 = vmatpush1.msra.mxu0 %v320
    %3580 = vmatprep.subr.mxu0 %v329
    %3581 = vmatpush1.msra.mxu0 %v328
    %3582 = vmatprep.subr.mxu0 %v337
    %3583 = vmatpush1.msra.mxu0 %v336
    %3584 = vmatprep.subr.mxu0 %v345
    %3585 = vmatpush1.msra.mxu0 %v344
    %3586 = vmatprep.subr.mxu0 %v353
    %3587 = vmatpush1.msra.mxu0 %v352
    %3588 = vmatprep.subr.mxu0 %v361
    %3589 = vmatpush1.msra.mxu0 %v360
    %3590 = vmatprep.subr.mxu0 %v369
    %3591 = vmatpush1.msra.mxu0 %v368
    %3592 = vmatprep.subr.mxu0 %v377
    %3593 = vmatpush1.msra.mxu0 %v376
    %3594 = vmatprep.subr.mxu0 %v385
    %3595 = vmatpush1.msra.mxu0 %v384
    %3596 = vmatprep.subr.mxu0 %v393
    %3597 = vmatpush1.msra.mxu0 %v392
    %3598 = vmatprep.subr.mxu0 %v401
    %3599 = vmatpush1.msra.mxu0 %v400
    %3600 = vmatprep.subr.mxu0 %v409
    %3601 = vmatpush1.msra.mxu0 %v408
    %3602 = vmatprep.subr.mxu0 %v417
    %3603 = vmatpush1.msra.mxu0 %v416
    %3604 = vmatprep.subr.mxu0 %v425
    %3605 = vmatpush1.msra.mxu0 %v424
    %3606 = vmatprep.subr.mxu0 %v433
    %3607 = vmatpush1.msra.mxu0 %v432
    %3608 = vmatprep.subr.mxu0 %v441
    %3609 = vmatpush1.msra.mxu0 %v440
    %3610 = vmatprep.subr.mxu0 %v449
    %3611 = vmatpush1.msra.mxu0 %v448
    %3612 = vmatprep.subr.mxu0 %v457
    %3613 = vmatpush1.msra.mxu0 %v456
    %3614 = vmatprep.subr.mxu0 %v465
    %3615 = vmatpush1.msra.mxu0 %v464
    %3616 = vmatprep.subr.mxu0 %v473
    %3617 = vmatpush1.msra.mxu0 %v472
    %3618 = vmatprep.subr.mxu0 %v481
    %3619 = vmatpush1.msra.mxu0 %v480
    %3620 = vmatprep.subr.mxu0 %v489
    %3621 = vmatpush1.msra.mxu0 %v488
    %3622 = vmatprep.subr.mxu0 %v497
    %3623 = vmatpush1.msra.mxu0 %v496
    %3624 = vmatprep.subr.mxu0 %v505
    %3625 = vmatpush1.msra.mxu0 %v504
    %3626 = vmatprep.subr.mxu0 %v513
    %3627 = vmatpush1.msra.mxu0 %v512
    %3628 = vmatprep.subr.mxu0 %v521
    %3629 = vmatpush1.msra.mxu0 %v520
    %3630 = vmatprep.subr.mxu0 %v529
    %3631 = vmatpush1.msra.mxu0 %v528
    %3632 = vmatprep.subr.mxu0 %v537
    %3633 = vmatpush1.msra.mxu0 %v536
    %3634 = vmatprep.subr.mxu0 %v545
    %3635 = vmatpush1.msra.mxu0 %v544
    %3636 = vmatprep.subr.mxu0 %v553
    %3637 = vmatpush1.msra.mxu0 %v552
    %3638 = vmatprep.subr.mxu0 %v561
    %3639 = vmatpush1.msra.mxu0 %v560
    %3640 = vmatprep.subr.mxu0 %v569
    %3641 = vmatpush1.msra.mxu0 %v568
    %3642 = vmatprep.mubr.f32.mxu0 %v3433
    %3643 = vmatmul.mubr.f32.gmra.mrb[0].mxu0 %v3431
    %v3644 = vpop.f32.mrb[0].mxu0
    %v3645 = vadd.f32 0.0, %v3644
    %v3646 = vpop.f32.mrb[0].mxu0
    %v3647 = vadd.f32 0.0, %v3646
    %3648 = vdwg.mxu0
    %3649 = vmatprep.subr.mxu0 %v323
    %3650 = vmatpush1.msra.mxu0 %v322
    %3651 = vmatprep.subr.mxu0 %v331
    %3652 = vmatpush1.msra.mxu0 %v330
    %3653 = vmatprep.subr.mxu0 %v339
    %3654 = vmatpush1.msra.mxu0 %v338
    %3655 = vmatprep.subr.mxu0 %v347
    %3656 = vmatpush1.msra.mxu0 %v346
    %3657 = vmatprep.subr.mxu0 %v355
    %3658 = vmatpush1.msra.mxu0 %v354
    %3659 = vmatprep.subr.mxu0 %v363
    %3660 = vmatpush1.msra.mxu0 %v362
    %3661 = vmatprep.subr.mxu0 %v371
    %3662 = vmatpush1.msra.mxu0 %v370
    %3663 = vmatprep.subr.mxu0 %v379
    %3664 = vmatpush1.msra.mxu0 %v378
    %3665 = vmatprep.subr.mxu0 %v387
    %3666 = vmatpush1.msra.mxu0 %v386
    %3667 = vmatprep.subr.mxu0 %v395
    %3668 = vmatpush1.msra.mxu0 %v394
    %3669 = vmatprep.subr.mxu0 %v403
    %3670 = vmatpush1.msra.mxu0 %v402
    %3671 = vmatprep.subr.mxu0 %v411
    %3672 = vmatpush1.msra.mxu0 %v410
    %3673 = vmatprep.subr.mxu0 %v419
    %3674 = vmatpush1.msra.mxu0 %v418
    %3675 = vmatprep.subr.mxu0 %v427
    %3676 = vmatpush1.msra.mxu0 %v426
    %3677 = vmatprep.subr.mxu0 %v435
    %3678 = vmatpush1.msra.mxu0 %v434
    %3679 = vmatprep.subr.mxu0 %v443
    %3680 = vmatpush1.msra.mxu0 %v442
    %3681 = vmatprep.subr.mxu0 %v451
    %3682 = vmatpush1.msra.mxu0 %v450
    %3683 = vmatprep.subr.mxu0 %v459
    %3684 = vmatpush1.msra.mxu0 %v458
    %3685 = vmatprep.subr.mxu0 %v467
    %3686 = vmatpush1.msra.mxu0 %v466
    %3687 = vmatprep.subr.mxu0 %v475
    %3688 = vmatpush1.msra.mxu0 %v474
    %3689 = vmatprep.subr.mxu0 %v483
    %3690 = vmatpush1.msra.mxu0 %v482
    %3691 = vmatprep.subr.mxu0 %v491
    %3692 = vmatpush1.msra.mxu0 %v490
    %3693 = vmatprep.subr.mxu0 %v499
    %3694 = vmatpush1.msra.mxu0 %v498
    %3695 = vmatprep.subr.mxu0 %v507
    %3696 = vmatpush1.msra.mxu0 %v506
    %3697 = vmatprep.subr.mxu0 %v515
    %3698 = vmatpush1.msra.mxu0 %v514
    %3699 = vmatprep.subr.mxu0 %v523
    %3700 = vmatpush1.msra.mxu0 %v522
    %3701 = vmatprep.subr.mxu0 %v531
    %3702 = vmatpush1.msra.mxu0 %v530
    %3703 = vmatprep.subr.mxu0 %v539
    %3704 = vmatpush1.msra.mxu0 %v538
    %3705 = vmatprep.subr.mxu0 %v547
    %3706 = vmatpush1.msra.mxu0 %v546
    %3707 = vmatprep.subr.mxu0 %v555
    %3708 = vmatpush1.msra.mxu0 %v554
    %3709 = vmatprep.subr.mxu0 %v563
    %3710 = vmatpush1.msra.mxu0 %v562
    %3711 = vmatprep.subr.mxu0 %v571
    %3712 = vmatpush1.msra.mxu0 %v570
    %3713 = vmatprep.mubr.f32.mxu0 %v3433
    %3714 = vmatmul.mubr.f32.gmra.mrb[0].mxu0 %v3431
    %v3715 = vpop.f32.mrb[0].mxu0
    %v3716 = vadd.f32 0.0, %v3715
    %v3717 = vpop.f32.mrb[0].mxu0
    %v3718 = vadd.f32 0.0, %v3717
    %3719 = vdwg.mxu0
    %v3724 = vrot.slane %v3503, 3
    %v3725 = vrot.slane %v3505, 3
    %v3726 = vrot.slane %v3574, 3
    %v3727 = vrot.slane %v3576, 3
    %v3728 = vrot.slane %v3503, 4
    %v3729 = vrot.slane %v3505, 4
    %v3730 = vrot.slane %v3574, 4
    %v3731 = vrot.slane %v3576, 4
    %v3732 = vrot.slane %v3503, 5
    %v3733 = vrot.slane %v3505, 5
    %v3734 = vrot.slane %v3574, 5
    %v3735 = vrot.slane %v3576, 5
    %v3736 = vrot.slane %v3503, 6
    %v3737 = vrot.slane %v3505, 6
    %v3738 = vrot.slane %v3574, 6
    %v3739 = vrot.slane %v3576, 6
    %v3740 = vrot.slane %v3503, 7
    %v3741 = vrot.slane %v3505, 7
    %v3742 = vrot.slane %v3574, 7
    %v3743 = vrot.slane %v3576, 7
    %v3744 = vrot.slane %v3503, 1
    %v3745 = vrot.slane %v3505, 1
    %v3746 = vrot.slane %v3574, 1
    %v3747 = vrot.slane %v3576, 1
    %v3748 = vrot.slane %v3503, 2
    %v3749 = vrot.slane %v3505, 2
    %v3750 = vrot.slane %v3574, 2
    %v3751 = vrot.slane %v3576, 2
    %v3784 = vadd.f32 %v157, %v3724
    %v3785 = vadd.f32 %v159, %v3725
    %v3786 = vadd.f32 %v270, %v3726
    %v3787 = vadd.f32 %v272, %v3727
    %v3788 = vadd.f32 %v163, %v3728
    %v3789 = vadd.f32 %v165, %v3729
    %v3790 = vadd.f32 %v276, %v3730
    %v3791 = vadd.f32 %v278, %v3731
    %v3792 = vadd.f32 %v169, %v3732
    %v3793 = vadd.f32 %v171, %v3733
    %v3794 = vadd.f32 %v282, %v3734
    %v3795 = vadd.f32 %v284, %v3735
    %v3796 = vadd.f32 %v175, %v3736
    %v3797 = vadd.f32 %v177, %v3737
    %v3798 = vadd.f32 %v288, %v3738
    %v3799 = vadd.f32 %v290, %v3739
    %v3800 = vadd.f32 %v181, %v3740
    %v3801 = vadd.f32 %v183, %v3741
    %v3802 = vadd.f32 %v294, %v3742
    %v3803 = vadd.f32 %v296, %v3743
    %v3804 = vadd.f32 %v187, %v3503
    %v3805 = vadd.f32 %v189, %v3505
    %v3806 = vadd.f32 %v300, %v3574
    %v3807 = vadd.f32 %v302, %v3576
    %v3808 = vadd.f32 %v193, %v3744
    %v3809 = vadd.f32 %v195, %v3745
    %v3810 = vadd.f32 %v306, %v3746
    %v3811 = vadd.f32 %v308, %v3747
    %v3812 = vadd.f32 %v199, %v3748
    %v3813 = vadd.f32 %v201, %v3749
    %v3814 = vadd.f32 %v312, %v3750
    %v3815 = vadd.f32 %v314, %v3751
    %v3816 = vadd.f32 %v3645, %v1179
    %v3817 = vadd.f32 %v3647, %v1183
    %v3818 = vadd.f32 %v3716, %v1187
    %v3819 = vadd.f32 %v3718, %v1191
    %v3820 = vxor.u32 %v3784, 2147483648
    %v3821 = vxor.u32 %v3788, 2147483648
    %v3822 = vxor.u32 %v3792, 2147483648
    %v3823 = vxor.u32 %v3796, 2147483648
    %v3824 = vxor.u32 %v3800, 2147483648
    %v3825 = vxor.u32 %v3804, 2147483648
    %v3826 = vxor.u32 %v3808, 2147483648
    %v3827 = vxor.u32 %v3812, 2147483648
    %v3828 = vmul.f32 %v3820, 1.442695
    %v3829 = vpow.pop %v3828
    %v3830 = vmul.f32 %v3821, 1.442695
    %v3831 = vpow.pop %v3830
    %v3832 = vmul.f32 %v3822, 1.442695
    %v3833 = vpow.pop %v3832
    %v3834 = vmul.f32 %v3823, 1.442695
    %v3835 = vpow.pop %v3834
    %v3836 = vmul.f32 %v3824, 1.442695
    %v3837 = vpow.pop %v3836
    %v3838 = vmul.f32 %v3825, 1.442695
    %v3839 = vpow.pop %v3838
    %v3840 = vmul.f32 %v3826, 1.442695
    %v3841 = vpow.pop %v3840
    %v3842 = vmul.f32 %v3827, 1.442695
    %v3843 = vpow.pop %v3842
    %v3844 = vadd.f32 %v3829, 1.0
    %v3845 = vadd.f32 %v3831, 1.0
    %v3846 = vadd.f32 %v3833, 1.0
    %v3847 = vadd.f32 %v3835, 1.0
    %v3848 = vadd.f32 %v3837, 1.0
    %v3849 = vadd.f32 %v3839, 1.0
    %v3850 = vadd.f32 %v3841, 1.0
    %v3851 = vadd.f32 %v3843, 1.0
    %v3852 = vrcp.pop %v3844
    %v3853 = vmul.f32 1.0, %v3852
    %v3854 = vrcp.pop %v3845
    %v3855 = vmul.f32 1.0, %v3854
    %v3856 = vrcp.pop %v3846
    %v3857 = vmul.f32 1.0, %v3856
    %v3858 = vrcp.pop %v3847
    %v3859 = vmul.f32 1.0, %v3858
    %v3860 = vrcp.pop %v3848
    %v3861 = vmul.f32 1.0, %v3860
    %v3862 = vrcp.pop %v3849
    %v3863 = vmul.f32 1.0, %v3862
    %v3864 = vrcp.pop %v3850
    %v3865 = vmul.f32 1.0, %v3864
    %v3866 = vrcp.pop %v3851
    %v3867 = vmul.f32 1.0, %v3866
    %v3868 = vxor.u32 %v3785, 2147483648
    %v3869 = vxor.u32 %v3789, 2147483648
    %v3870 = vxor.u32 %v3793, 2147483648
    %v3871 = vxor.u32 %v3797, 2147483648
    %v3872 = vxor.u32 %v3801, 2147483648
    %v3873 = vxor.u32 %v3805, 2147483648
    %v3874 = vxor.u32 %v3809, 2147483648
    %v3875 = vxor.u32 %v3813, 2147483648
    %v3876 = vmul.f32 %v3868, 1.442695
    %v3877 = vpow.pop %v3876
    %v3878 = vmul.f32 %v3869, 1.442695
    %v3879 = vpow.pop %v3878
    %v3880 = vmul.f32 %v3870, 1.442695
    %v3881 = vpow.pop %v3880
    %v3882 = vmul.f32 %v3871, 1.442695
    %v3883 = vpow.pop %v3882
    %v3884 = vmul.f32 %v3872, 1.442695
    %v3885 = vpow.pop %v3884
    %v3886 = vmul.f32 %v3873, 1.442695
    %v3887 = vpow.pop %v3886
    %v3888 = vmul.f32 %v3874, 1.442695
    %v3889 = vpow.pop %v3888
    %v3890 = vmul.f32 %v3875, 1.442695
    %v3891 = vpow.pop %v3890
    %v3892 = vadd.f32 %v3877, 1.0
    %v3893 = vadd.f32 %v3879, 1.0
    %v3894 = vadd.f32 %v3881, 1.0
    %v3895 = vadd.f32 %v3883, 1.0
    %v3896 = vadd.f32 %v3885, 1.0
    %v3897 = vadd.f32 %v3887, 1.0
    %v3898 = vadd.f32 %v3889, 1.0
    %v3899 = vadd.f32 %v3891, 1.0
    %v3900 = vrcp.pop %v3892
    %v3901 = vmul.f32 1.0, %v3900
    %v3902 = vrcp.pop %v3893
    %v3903 = vmul.f32 1.0, %v3902
    %v3904 = vrcp.pop %v3894
    %v3905 = vmul.f32 1.0, %v3904
    %v3906 = vrcp.pop %v3895
    %v3907 = vmul.f32 1.0, %v3906
    %v3908 = vrcp.pop %v3896
    %v3909 = vmul.f32 1.0, %v3908
    %v3910 = vrcp.pop %v3897
    %v3911 = vmul.f32 1.0, %v3910
    %v3912 = vrcp.pop %v3898
    %v3913 = vmul.f32 1.0, %v3912
    %v3914 = vrcp.pop %v3899
    %v3915 = vmul.f32 1.0, %v3914
    %v3916 = vtanh.pop %v3786
    %v3917 = vtanh.pop %v3790
    %v3918 = vtanh.pop %v3794
    %v3919 = vtanh.pop %v3798
    %v3920 = vtanh.pop %v3802
    %v3921 = vtanh.pop %v3806
    %v3922 = vtanh.pop %v3810
    %v3923 = vtanh.pop %v3814
    %v3924 = vxor.u32 %v3787, 2147483648
    %v3925 = vxor.u32 %v3791, 2147483648
    %v3926 = vxor.u32 %v3795, 2147483648
    %v3927 = vxor.u32 %v3799, 2147483648
    %v3928 = vxor.u32 %v3803, 2147483648
    %v3929 = vxor.u32 %v3807, 2147483648
    %v3930 = vxor.u32 %v3811, 2147483648
    %v3931 = vxor.u32 %v3815, 2147483648
    %v3932 = vmul.f32 %v3924, 1.442695
    %v3933 = vpow.pop %v3932
    %v3934 = vmul.f32 %v3925, 1.442695
    %v3935 = vpow.pop %v3934
    %v3936 = vmul.f32 %v3926, 1.442695
    %v3937 = vpow.pop %v3936
    %v3938 = vmul.f32 %v3927, 1.442695
    %v3939 = vpow.pop %v3938
    %v3940 = vmul.f32 %v3928, 1.442695
    %v3941 = vpow.pop %v3940
    %v3942 = vmul.f32 %v3929, 1.442695
    %v3943 = vpow.pop %v3942
    %v3944 = vmul.f32 %v3930, 1.442695
    %v3945 = vpow.pop %v3944
    %v3946 = vmul.f32 %v3931, 1.442695
    %v3947 = vpow.pop %v3946
    %v3948 = vadd.f32 %v3933, 1.0
    %v3949 = vadd.f32 %v3935, 1.0
    %v3950 = vadd.f32 %v3937, 1.0
    %v3951 = vadd.f32 %v3939, 1.0
    %v3952 = vadd.f32 %v3941, 1.0
    %v3953 = vadd.f32 %v3943, 1.0
    %v3954 = vadd.f32 %v3945, 1.0
    %v3955 = vadd.f32 %v3947, 1.0
    %v3956 = vrcp.pop %v3948
    %v3957 = vmul.f32 1.0, %v3956
    %v3958 = vrcp.pop %v3949
    %v3959 = vmul.f32 1.0, %v3958
    %v3960 = vrcp.pop %v3950
    %v3961 = vmul.f32 1.0, %v3960
    %v3962 = vrcp.pop %v3951
    %v3963 = vmul.f32 1.0, %v3962
    %v3964 = vrcp.pop %v3952
    %v3965 = vmul.f32 1.0, %v3964
    %v3966 = vrcp.pop %v3953
    %v3967 = vmul.f32 1.0, %v3966
    %v3968 = vrcp.pop %v3954
    %v3969 = vmul.f32 1.0, %v3968
    %v3970 = vrcp.pop %v3955
    %v3971 = vmul.f32 1.0, %v3970
    %v3980 = vrot.slane %v3357, 7
    %v3981 = vrot.slane %v3358, 7
    %v3982 = vrot.slane %v3359, 7
    %v3983 = vrot.slane %v3360, 7
    %v3984 = vrot.slane %v3361, 7
    %v3985 = vrot.slane %v3362, 7
    %v3986 = vrot.slane %v3363, 7
    %v3987 = vrot.slane %v3364, 7
    %v3996 = vmul.f32 %v3901, %v3980
    %v3997 = vmul.f32 %v3903, %v3981
    %v3998 = vmul.f32 %v3905, %v3982
    %v3999 = vmul.f32 %v3907, %v3983
    %v4000 = vmul.f32 %v3909, %v3984
    %v4001 = vmul.f32 %v3911, %v3985
    %v4002 = vmul.f32 %v3913, %v3986
    %v4003 = vmul.f32 %v3915, %v3987
    %v4004 = vmul.f32 %v3853, %v3916
    %v4005 = vmul.f32 %v3855, %v3917
    %v4006 = vmul.f32 %v3857, %v3918
    %v4007 = vmul.f32 %v3859, %v3919
    %v4008 = vmul.f32 %v3861, %v3920
    %v4009 = vmul.f32 %v3863, %v3921
    %v4010 = vmul.f32 %v3865, %v3922
    %v4011 = vmul.f32 %v3867, %v3923
    %v4012 = vadd.f32 %v3996, %v4004
    %v4013 = vadd.f32 %v3997, %v4005
    %v4014 = vadd.f32 %v3998, %v4006
    %v4015 = vadd.f32 %v3999, %v4007
    %v4016 = vadd.f32 %v4000, %v4008
    %v4017 = vadd.f32 %v4001, %v4009
    %v4018 = vadd.f32 %v4002, %v4010
    %v4019 = vadd.f32 %v4003, %v4011
    %v4020 = vtanh.pop %v4012
    %v4021 = vtanh.pop %v4013
    %v4022 = vtanh.pop %v4014
    %v4023 = vtanh.pop %v4015
    %v4024 = vtanh.pop %v4016
    %v4025 = vtanh.pop %v4017
    %v4026 = vtanh.pop %v4018
    %v4027 = vtanh.pop %v4019
    %v4028 = vmul.f32 %v3957, %v4020
    %v4029 = vmul.f32 %v3959, %v4021
    %v4030 = vmul.f32 %v3961, %v4022
    %v4031 = vmul.f32 %v3963, %v4023
    %v4032 = vmul.f32 %v3965, %v4024
    %v4033 = vmul.f32 %v3967, %v4025
    %v4034 = vmul.f32 %v3969, %v4026
    %v4035 = vmul.f32 %v3971, %v4027
    %v4036 = vxor.u32 %v3816, 2147483648
    %v4037 = vmul.f32 %v4036, 1.442695
    %v4038 = vpow.pop %v4037
    %v4039 = vadd.f32 %v4038, 1.0
    %v4040 = vrcp.pop %v4039
    %v4041 = vmul.f32 1.0, %v4040
    %v4042 = vxor.u32 %v3817, 2147483648
    %v4043 = vmul.f32 %v4042, 1.442695
    %v4044 = vpow.pop %v4043
    %v4045 = vadd.f32 %v4044, 1.0
    %v4046 = vrcp.pop %v4045
    %v4047 = vmul.f32 1.0, %v4046
    %v4048 = vtanh.pop %v3818
    %v4049 = vxor.u32 %v3819, 2147483648
    %v4050 = vmul.f32 %v4049, 1.442695
    %v4051 = vpow.pop %v4050
    %v4052 = vadd.f32 %v4051, 1.0
    %v4053 = vrcp.pop %v4052
    %v4054 = vmul.f32 1.0, %v4053
    %v4055 = vmul.f32 %v4047, %v3402
    %v4056 = vmul.f32 %v4041, %v4048
    %v4057 = vadd.f32 %v4055, %v4056
    %v4058 = vtanh.pop %v4057
    %v4059 = vmul.f32 %v4054, %v4058
    %v4068 = vrot.slane %v4029, 7
    %v4069 = vsel %vm789, %v4068, %v4028
    %v4070 = vrot.slane %v4030, 6
    %v4071 = vsel %vm792, %v4070, %v4069
    %v4072 = vrot.slane %v4031, 5
    %v4073 = vrot.slane %v4032, 4
    %v4074 = vsel %vm774, %v4073, %v4072
    %v4075 = vrot.slane %v4033, 3
    %v4076 = vsel %vm777, %v4075, %v4074
    %v4077 = vrot.slane %v4034, 2
    %v4078 = vsel %vm780, %v4077, %v4076
    %v4079 = vrot.slane %v4035, 1
    %v4080 = vsel %vm783, %v4079, %v4078
    %v4082 = vrot.slane %v4059, 3
    %vm4083 = vcmask 1042432
    %v4084 = vrot.slane %v4071, 5
    %v4085 = vrot.slane %v4080, 5
    %v4086 = vsel %vm4083, %v4084, %v4085
    %v4087 = vrot.slane %v4082, 5
    %v4088 = vsel %vm4083, %v4087, %v4087
    %4091 = vmatprep.subr.mxu0 %v317
    %4092 = vmatpush1.msra.mxu0 %v316
    %4093 = vmatprep.subr.mxu0 %v325
    %4094 = vmatpush1.msra.mxu0 %v324
    %4095 = vmatprep.subr.mxu0 %v333
    %4096 = vmatpush1.msra.mxu0 %v332
    %4097 = vmatprep.subr.mxu0 %v341
    %4098 = vmatpush1.msra.mxu0 %v340
    %4099 = vmatprep.subr.mxu0 %v349
    %4100 = vmatpush1.msra.mxu0 %v348
    %4101 = vmatprep.subr.mxu0 %v357
    %4102 = vmatpush1.msra.mxu0 %v356
    %4103 = vmatprep.subr.mxu0 %v365
    %4104 = vmatpush1.msra.mxu0 %v364
    %4105 = vmatprep.subr.mxu0 %v373
    %4106 = vmatpush1.msra.mxu0 %v372
    %4107 = vmatprep.subr.mxu0 %v381
    %4108 = vmatpush1.msra.mxu0 %v380
    %4109 = vmatprep.subr.mxu0 %v389
    %4110 = vmatpush1.msra.mxu0 %v388
    %4111 = vmatprep.subr.mxu0 %v397
    %4112 = vmatpush1.msra.mxu0 %v396
    %4113 = vmatprep.subr.mxu0 %v405
    %4114 = vmatpush1.msra.mxu0 %v404
    %4115 = vmatprep.subr.mxu0 %v413
    %4116 = vmatpush1.msra.mxu0 %v412
    %4117 = vmatprep.subr.mxu0 %v421
    %4118 = vmatpush1.msra.mxu0 %v420
    %4119 = vmatprep.subr.mxu0 %v429
    %4120 = vmatpush1.msra.mxu0 %v428
    %4121 = vmatprep.subr.mxu0 %v437
    %4122 = vmatpush1.msra.mxu0 %v436
    %4123 = vmatprep.subr.mxu0 %v445
    %4124 = vmatpush1.msra.mxu0 %v444
    %4125 = vmatprep.subr.mxu0 %v453
    %4126 = vmatpush1.msra.mxu0 %v452
    %4127 = vmatprep.subr.mxu0 %v461
    %4128 = vmatpush1.msra.mxu0 %v460
    %4129 = vmatprep.subr.mxu0 %v469
    %4130 = vmatpush1.msra.mxu0 %v468
    %4131 = vmatprep.subr.mxu0 %v477
    %4132 = vmatpush1.msra.mxu0 %v476
    %4133 = vmatprep.subr.mxu0 %v485
    %4134 = vmatpush1.msra.mxu0 %v484
    %4135 = vmatprep.subr.mxu0 %v493
    %4136 = vmatpush1.msra.mxu0 %v492
    %4137 = vmatprep.subr.mxu0 %v501
    %4138 = vmatpush1.msra.mxu0 %v500
    %4139 = vmatprep.subr.mxu0 %v509
    %4140 = vmatpush1.msra.mxu0 %v508
    %4141 = vmatprep.subr.mxu0 %v517
    %4142 = vmatpush1.msra.mxu0 %v516
    %4143 = vmatprep.subr.mxu0 %v525
    %4144 = vmatpush1.msra.mxu0 %v524
    %4145 = vmatprep.subr.mxu0 %v533
    %4146 = vmatpush1.msra.mxu0 %v532
    %4147 = vmatprep.subr.mxu0 %v541
    %4148 = vmatpush1.msra.mxu0 %v540
    %4149 = vmatprep.subr.mxu0 %v549
    %4150 = vmatpush1.msra.mxu0 %v548
    %4151 = vmatprep.subr.mxu0 %v557
    %4152 = vmatpush1.msra.mxu0 %v556
    %4153 = vmatprep.subr.mxu0 %v565
    %4154 = vmatpush1.msra.mxu0 %v564
    %4155 = vmatprep.mubr.f32.mxu0 %v4088
    %4156 = vmatmul.mubr.f32.gmra.mrb[0].mxu0 %v4086
    %v4157 = vpop.f32.mrb[0].mxu0
    %v4158 = vadd.f32 0.0, %v4157
    %v4159 = vpop.f32.mrb[0].mxu0
    %v4160 = vadd.f32 0.0, %v4159
    %4161 = vdwg.mxu0
    %4162 = vmatprep.subr.mxu0 %v319
    %4163 = vmatpush1.msra.mxu0 %v318
    %4164 = vmatprep.subr.mxu0 %v327
    %4165 = vmatpush1.msra.mxu0 %v326
    %4166 = vmatprep.subr.mxu0 %v335
    %4167 = vmatpush1.msra.mxu0 %v334
    %4168 = vmatprep.subr.mxu0 %v343
    %4169 = vmatpush1.msra.mxu0 %v342
    %4170 = vmatprep.subr.mxu0 %v351
    %4171 = vmatpush1.msra.mxu0 %v350
    %4172 = vmatprep.subr.mxu0 %v359
    %4173 = vmatpush1.msra.mxu0 %v358
    %4174 = vmatprep.subr.mxu0 %v367
    %4175 = vmatpush1.msra.mxu0 %v366
    %4176 = vmatprep.subr.mxu0 %v375
    %4177 = vmatpush1.msra.mxu0 %v374
    %4178 = vmatprep.subr.mxu0 %v383
    %4179 = vmatpush1.msra.mxu0 %v382
    %4180 = vmatprep.subr.mxu0 %v391
    %4181 = vmatpush1.msra.mxu0 %v390
    %4182 = vmatprep.subr.mxu0 %v399
    %4183 = vmatpush1.msra.mxu0 %v398
    %4184 = vmatprep.subr.mxu0 %v407
    %4185 = vmatpush1.msra.mxu0 %v406
    %4186 = vmatprep.subr.mxu0 %v415
    %4187 = vmatpush1.msra.mxu0 %v414
    %4188 = vmatprep.subr.mxu0 %v423
    %4189 = vmatpush1.msra.mxu0 %v422
    %4190 = vmatprep.subr.mxu0 %v431
    %4191 = vmatpush1.msra.mxu0 %v430
    %4192 = vmatprep.subr.mxu0 %v439
    %4193 = vmatpush1.msra.mxu0 %v438
    %4194 = vmatprep.subr.mxu0 %v447
    %4195 = vmatpush1.msra.mxu0 %v446
    %4196 = vmatprep.subr.mxu0 %v455
    %4197 = vmatpush1.msra.mxu0 %v454
    %4198 = vmatprep.subr.mxu0 %v463
    %4199 = vmatpush1.msra.mxu0 %v462
    %4200 = vmatprep.subr.mxu0 %v471
    %4201 = vmatpush1.msra.mxu0 %v470
    %4202 = vmatprep.subr.mxu0 %v479
    %4203 = vmatpush1.msra.mxu0 %v478
    %4204 = vmatprep.subr.mxu0 %v487
    %4205 = vmatpush1.msra.mxu0 %v486
    %4206 = vmatprep.subr.mxu0 %v495
    %4207 = vmatpush1.msra.mxu0 %v494
    %4208 = vmatprep.subr.mxu0 %v503
    %4209 = vmatpush1.msra.mxu0 %v502
    %4210 = vmatprep.subr.mxu0 %v511
    %4211 = vmatpush1.msra.mxu0 %v510
    %4212 = vmatprep.subr.mxu0 %v519
    %4213 = vmatpush1.msra.mxu0 %v518
    %4214 = vmatprep.subr.mxu0 %v527
    %4215 = vmatpush1.msra.mxu0 %v526
    %4216 = vmatprep.subr.mxu0 %v535
    %4217 = vmatpush1.msra.mxu0 %v534
    %4218 = vmatprep.subr.mxu0 %v543
    %4219 = vmatpush1.msra.mxu0 %v542
    %4220 = vmatprep.subr.mxu0 %v551
    %4221 = vmatpush1.msra.mxu0 %v550
    %4222 = vmatprep.subr.mxu0 %v559
    %4223 = vmatpush1.msra.mxu0 %v558
    %4224 = vmatprep.subr.mxu0 %v567
    %4225 = vmatpush1.msra.mxu0 %v566
    %4226 = vmatprep.mubr.f32.mxu0 %v4088
    %4227 = vmatmul.mubr.f32.gmra.mrb[0].mxu0 %v4086
    %v4228 = vpop.f32.mrb[0].mxu0
    %v4229 = vadd.f32 0.0, %v4228
    %v4230 = vpop.f32.mrb[0].mxu0
    %v4231 = vadd.f32 0.0, %v4230
    %4232 = vdwg.mxu0
    %4233 = vmatprep.subr.mxu0 %v321
    %4234 = vmatpush1.msra.mxu0 %v320
    %4235 = vmatprep.subr.mxu0 %v329
    %4236 = vmatpush1.msra.mxu0 %v328
    %4237 = vmatprep.subr.mxu0 %v337
    %4238 = vmatpush1.msra.mxu0 %v336
    %4239 = vmatprep.subr.mxu0 %v345
    %4240 = vmatpush1.msra.mxu0 %v344
    %4241 = vmatprep.subr.mxu0 %v353
    %4242 = vmatpush1.msra.mxu0 %v352
    %4243 = vmatprep.subr.mxu0 %v361
    %4244 = vmatpush1.msra.mxu0 %v360
    %4245 = vmatprep.subr.mxu0 %v369
    %4246 = vmatpush1.msra.mxu0 %v368
    %4247 = vmatprep.subr.mxu0 %v377
    %4248 = vmatpush1.msra.mxu0 %v376
    %4249 = vmatprep.subr.mxu0 %v385
    %4250 = vmatpush1.msra.mxu0 %v384
    %4251 = vmatprep.subr.mxu0 %v393
    %4252 = vmatpush1.msra.mxu0 %v392
    %4253 = vmatprep.subr.mxu0 %v401
    %4254 = vmatpush1.msra.mxu0 %v400
    %4255 = vmatprep.subr.mxu0 %v409
    %4256 = vmatpush1.msra.mxu0 %v408
    %4257 = vmatprep.subr.mxu0 %v417
    %4258 = vmatpush1.msra.mxu0 %v416
    %4259 = vmatprep.subr.mxu0 %v425
    %4260 = vmatpush1.msra.mxu0 %v424
    %4261 = vmatprep.subr.mxu0 %v433
    %4262 = vmatpush1.msra.mxu0 %v432
    %4263 = vmatprep.subr.mxu0 %v441
    %4264 = vmatpush1.msra.mxu0 %v440
    %4265 = vmatprep.subr.mxu0 %v449
    %4266 = vmatpush1.msra.mxu0 %v448
    %4267 = vmatprep.subr.mxu0 %v457
    %4268 = vmatpush1.msra.mxu0 %v456
    %4269 = vmatprep.subr.mxu0 %v465
    %4270 = vmatpush1.msra.mxu0 %v464
    %4271 = vmatprep.subr.mxu0 %v473
    %4272 = vmatpush1.msra.mxu0 %v472
    %4273 = vmatprep.subr.mxu0 %v481
    %4274 = vmatpush1.msra.mxu0 %v480
    %4275 = vmatprep.subr.mxu0 %v489
    %4276 = vmatpush1.msra.mxu0 %v488
    %4277 = vmatprep.subr.mxu0 %v497
    %4278 = vmatpush1.msra.mxu0 %v496
    %4279 = vmatprep.subr.mxu0 %v505
    %4280 = vmatpush1.msra.mxu0 %v504
    %4281 = vmatprep.subr.mxu0 %v513
    %4282 = vmatpush1.msra.mxu0 %v512
    %4283 = vmatprep.subr.mxu0 %v521
    %4284 = vmatpush1.msra.mxu0 %v520
    %4285 = vmatprep.subr.mxu0 %v529
    %4286 = vmatpush1.msra.mxu0 %v528
    %4287 = vmatprep.subr.mxu0 %v537
    %4288 = vmatpush1.msra.mxu0 %v536
    %4289 = vmatprep.subr.mxu0 %v545
    %4290 = vmatpush1.msra.mxu0 %v544
    %4291 = vmatprep.subr.mxu0 %v553
    %4292 = vmatpush1.msra.mxu0 %v552
    %4293 = vmatprep.subr.mxu0 %v561
    %4294 = vmatpush1.msra.mxu0 %v560
    %4295 = vmatprep.subr.mxu0 %v569
    %4296 = vmatpush1.msra.mxu0 %v568
    %4297 = vmatprep.mubr.f32.mxu0 %v4088
    %4298 = vmatmul.mubr.f32.gmra.mrb[0].mxu0 %v4086
    %v4299 = vpop.f32.mrb[0].mxu0
    %v4300 = vadd.f32 0.0, %v4299
    %v4301 = vpop.f32.mrb[0].mxu0
    %v4302 = vadd.f32 0.0, %v4301
    %4303 = vdwg.mxu0
    %4304 = vmatprep.subr.mxu0 %v323
    %4305 = vmatpush1.msra.mxu0 %v322
    %4306 = vmatprep.subr.mxu0 %v331
    %4307 = vmatpush1.msra.mxu0 %v330
    %4308 = vmatprep.subr.mxu0 %v339
    %4309 = vmatpush1.msra.mxu0 %v338
    %4310 = vmatprep.subr.mxu0 %v347
    %4311 = vmatpush1.msra.mxu0 %v346
    %4312 = vmatprep.subr.mxu0 %v355
    %4313 = vmatpush1.msra.mxu0 %v354
    %4314 = vmatprep.subr.mxu0 %v363
    %4315 = vmatpush1.msra.mxu0 %v362
    %4316 = vmatprep.subr.mxu0 %v371
    %4317 = vmatpush1.msra.mxu0 %v370
    %4318 = vmatprep.subr.mxu0 %v379
    %4319 = vmatpush1.msra.mxu0 %v378
    %4320 = vmatprep.subr.mxu0 %v387
    %4321 = vmatpush1.msra.mxu0 %v386
    %4322 = vmatprep.subr.mxu0 %v395
    %4323 = vmatpush1.msra.mxu0 %v394
    %4324 = vmatprep.subr.mxu0 %v403
    %4325 = vmatpush1.msra.mxu0 %v402
    %4326 = vmatprep.subr.mxu0 %v411
    %4327 = vmatpush1.msra.mxu0 %v410
    %4328 = vmatprep.subr.mxu0 %v419
    %4329 = vmatpush1.msra.mxu0 %v418
    %4330 = vmatprep.subr.mxu0 %v427
    %4331 = vmatpush1.msra.mxu0 %v426
    %4332 = vmatprep.subr.mxu0 %v435
    %4333 = vmatpush1.msra.mxu0 %v434
    %4334 = vmatprep.subr.mxu0 %v443
    %4335 = vmatpush1.msra.mxu0 %v442
    %4336 = vmatprep.subr.mxu0 %v451
    %4337 = vmatpush1.msra.mxu0 %v450
    %4338 = vmatprep.subr.mxu0 %v459
    %4339 = vmatpush1.msra.mxu0 %v458
    %4340 = vmatprep.subr.mxu0 %v467
    %4341 = vmatpush1.msra.mxu0 %v466
    %4342 = vmatprep.subr.mxu0 %v475
    %4343 = vmatpush1.msra.mxu0 %v474
    %4344 = vmatprep.subr.mxu0 %v483
    %4345 = vmatpush1.msra.mxu0 %v482
    %4346 = vmatprep.subr.mxu0 %v491
    %4347 = vmatpush1.msra.mxu0 %v490
    %4348 = vmatprep.subr.mxu0 %v499
    %4349 = vmatpush1.msra.mxu0 %v498
    %4350 = vmatprep.subr.mxu0 %v507
    %4351 = vmatpush1.msra.mxu0 %v506
    %4352 = vmatprep.subr.mxu0 %v515
    %4353 = vmatpush1.msra.mxu0 %v514
    %4354 = vmatprep.subr.mxu0 %v523
    %4355 = vmatpush1.msra.mxu0 %v522
    %4356 = vmatprep.subr.mxu0 %v531
    %4357 = vmatpush1.msra.mxu0 %v530
    %4358 = vmatprep.subr.mxu0 %v539
    %4359 = vmatpush1.msra.mxu0 %v538
    %4360 = vmatprep.subr.mxu0 %v547
    %4361 = vmatpush1.msra.mxu0 %v546
    %4362 = vmatprep.subr.mxu0 %v555
    %4363 = vmatpush1.msra.mxu0 %v554
    %4364 = vmatprep.subr.mxu0 %v563
    %4365 = vmatpush1.msra.mxu0 %v562
    %4366 = vmatprep.subr.mxu0 %v571
    %4367 = vmatpush1.msra.mxu0 %v570
    %4368 = vmatprep.mubr.f32.mxu0 %v4088
    %4369 = vmatmul.mubr.f32.gmra.mrb[0].mxu0 %v4086
    %v4370 = vpop.f32.mrb[0].mxu0
    %v4371 = vadd.f32 0.0, %v4370
    %v4372 = vpop.f32.mrb[0].mxu0
    %v4373 = vadd.f32 0.0, %v4372
    %4374 = vdwg.mxu0
    %v4379 = vrot.slane %v4158, 2
    %v4380 = vrot.slane %v4160, 2
    %v4381 = vrot.slane %v4229, 2
    %v4382 = vrot.slane %v4231, 2
    %v4383 = vrot.slane %v4158, 3
    %v4384 = vrot.slane %v4160, 3
    %v4385 = vrot.slane %v4229, 3
    %v4386 = vrot.slane %v4231, 3
    %v4387 = vrot.slane %v4158, 4
    %v4388 = vrot.slane %v4160, 4
    %v4389 = vrot.slane %v4229, 4
    %v4390 = vrot.slane %v4231, 4
    %v4391 = vrot.slane %v4158, 5
    %v4392 = vrot.slane %v4160, 5
    %v4393 = vrot.slane %v4229, 5
    %v4394 = vrot.slane %v4231, 5
    %v4395 = vrot.slane %v4158, 6
    %v4396 = vrot.slane %v4160, 6
    %v4397 = vrot.slane %v4229, 6
    %v4398 = vrot.slane %v4231, 6
    %v4399 = vrot.slane %v4158, 7
    %v4400 = vrot.slane %v4160, 7
    %v4401 = vrot.slane %v4229, 7
    %v4402 = vrot.slane %v4231, 7
    %v4403 = vrot.slane %v4158, 1
    %v4404 = vrot.slane %v4160, 1
    %v4405 = vrot.slane %v4229, 1
    %v4406 = vrot.slane %v4231, 1
    %v4439 = vadd.f32 %v157, %v4379
    %v4440 = vadd.f32 %v159, %v4380
    %v4441 = vadd.f32 %v270, %v4381
    %v4442 = vadd.f32 %v272, %v4382
    %v4443 = vadd.f32 %v163, %v4383
    %v4444 = vadd.f32 %v165, %v4384
    %v4445 = vadd.f32 %v276, %v4385
    %v4446 = vadd.f32 %v278, %v4386
    %v4447 = vadd.f32 %v169, %v4387
    %v4448 = vadd.f32 %v171, %v4388
    %v4449 = vadd.f32 %v282, %v4389
    %v4450 = vadd.f32 %v284, %v4390
    %v4451 = vadd.f32 %v175, %v4391
    %v4452 = vadd.f32 %v177, %v4392
    %v4453 = vadd.f32 %v288, %v4393
    %v4454 = vadd.f32 %v290, %v4394
    %v4455 = vadd.f32 %v181, %v4395
    %v4456 = vadd.f32 %v183, %v4396
    %v4457 = vadd.f32 %v294, %v4397
    %v4458 = vadd.f32 %v296, %v4398
    %v4459 = vadd.f32 %v187, %v4399
    %v4460 = vadd.f32 %v189, %v4400
    %v4461 = vadd.f32 %v300, %v4401
    %v4462 = vadd.f32 %v302, %v4402
    %v4463 = vadd.f32 %v193, %v4158
    %v4464 = vadd.f32 %v195, %v4160
    %v4465 = vadd.f32 %v306, %v4229
    %v4466 = vadd.f32 %v308, %v4231
    %v4467 = vadd.f32 %v199, %v4403
    %v4468 = vadd.f32 %v201, %v4404
    %v4469 = vadd.f32 %v312, %v4405
    %v4470 = vadd.f32 %v314, %v4406
    %v4471 = vadd.f32 %v4300, %v1179
    %v4472 = vadd.f32 %v4302, %v1183
    %v4473 = vadd.f32 %v4371, %v1187
    %v4474 = vadd.f32 %v4373, %v1191
    %v4475 = vxor.u32 %v4439, 2147483648
    %v4476 = vxor.u32 %v4443, 2147483648
    %v4477 = vxor.u32 %v4447, 2147483648
    %v4478 = vxor.u32 %v4451, 2147483648
    %v4479 = vxor.u32 %v4455, 2147483648
    %v4480 = vxor.u32 %v4459, 2147483648
    %v4481 = vxor.u32 %v4463, 2147483648
    %v4482 = vxor.u32 %v4467, 2147483648
    %v4483 = vmul.f32 %v4475, 1.442695
    %v4484 = vpow.pop %v4483
    %v4485 = vmul.f32 %v4476, 1.442695
    %v4486 = vpow.pop %v4485
    %v4487 = vmul.f32 %v4477, 1.442695
    %v4488 = vpow.pop %v4487
    %v4489 = vmul.f32 %v4478, 1.442695
    %v4490 = vpow.pop %v4489
    %v4491 = vmul.f32 %v4479, 1.442695
    %v4492 = vpow.pop %v4491
    %v4493 = vmul.f32 %v4480, 1.442695
    %v4494 = vpow.pop %v4493
    %v4495 = vmul.f32 %v4481, 1.442695
    %v4496 = vpow.pop %v4495
    %v4497 = vmul.f32 %v4482, 1.442695
    %v4498 = vpow.pop %v4497
    %v4499 = vadd.f32 %v4484, 1.0
    %v4500 = vadd.f32 %v4486, 1.0
    %v4501 = vadd.f32 %v4488, 1.0
    %v4502 = vadd.f32 %v4490, 1.0
    %v4503 = vadd.f32 %v4492, 1.0
    %v4504 = vadd.f32 %v4494, 1.0
    %v4505 = vadd.f32 %v4496, 1.0
    %v4506 = vadd.f32 %v4498, 1.0
    %v4507 = vrcp.pop %v4499
    %v4508 = vmul.f32 1.0, %v4507
    %v4509 = vrcp.pop %v4500
    %v4510 = vmul.f32 1.0, %v4509
    %v4511 = vrcp.pop %v4501
    %v4512 = vmul.f32 1.0, %v4511
    %v4513 = vrcp.pop %v4502
    %v4514 = vmul.f32 1.0, %v4513
    %v4515 = vrcp.pop %v4503
    %v4516 = vmul.f32 1.0, %v4515
    %v4517 = vrcp.pop %v4504
    %v4518 = vmul.f32 1.0, %v4517
    %v4519 = vrcp.pop %v4505
    %v4520 = vmul.f32 1.0, %v4519
    %v4521 = vrcp.pop %v4506
    %v4522 = vmul.f32 1.0, %v4521
    %v4523 = vxor.u32 %v4440, 2147483648
    %v4524 = vxor.u32 %v4444, 2147483648
    %v4525 = vxor.u32 %v4448, 2147483648
    %v4526 = vxor.u32 %v4452, 2147483648
    %v4527 = vxor.u32 %v4456, 2147483648
    %v4528 = vxor.u32 %v4460, 2147483648
    %v4529 = vxor.u32 %v4464, 2147483648
    %v4530 = vxor.u32 %v4468, 2147483648
    %v4531 = vmul.f32 %v4523, 1.442695
    %v4532 = vpow.pop %v4531
    %v4533 = vmul.f32 %v4524, 1.442695
    %v4534 = vpow.pop %v4533
    %v4535 = vmul.f32 %v4525, 1.442695
    %v4536 = vpow.pop %v4535
    %v4537 = vmul.f32 %v4526, 1.442695
    %v4538 = vpow.pop %v4537
    %v4539 = vmul.f32 %v4527, 1.442695
    %v4540 = vpow.pop %v4539
    %v4541 = vmul.f32 %v4528, 1.442695
    %v4542 = vpow.pop %v4541
    %v4543 = vmul.f32 %v4529, 1.442695
    %v4544 = vpow.pop %v4543
    %v4545 = vmul.f32 %v4530, 1.442695
    %v4546 = vpow.pop %v4545
    %v4547 = vadd.f32 %v4532, 1.0
    %v4548 = vadd.f32 %v4534, 1.0
    %v4549 = vadd.f32 %v4536, 1.0
    %v4550 = vadd.f32 %v4538, 1.0
    %v4551 = vadd.f32 %v4540, 1.0
    %v4552 = vadd.f32 %v4542, 1.0
    %v4553 = vadd.f32 %v4544, 1.0
    %v4554 = vadd.f32 %v4546, 1.0
    %v4555 = vrcp.pop %v4547
    %v4556 = vmul.f32 1.0, %v4555
    %v4557 = vrcp.pop %v4548
    %v4558 = vmul.f32 1.0, %v4557
    %v4559 = vrcp.pop %v4549
    %v4560 = vmul.f32 1.0, %v4559
    %v4561 = vrcp.pop %v4550
    %v4562 = vmul.f32 1.0, %v4561
    %v4563 = vrcp.pop %v4551
    %v4564 = vmul.f32 1.0, %v4563
    %v4565 = vrcp.pop %v4552
    %v4566 = vmul.f32 1.0, %v4565
    %v4567 = vrcp.pop %v4553
    %v4568 = vmul.f32 1.0, %v4567
    %v4569 = vrcp.pop %v4554
    %v4570 = vmul.f32 1.0, %v4569
    %v4571 = vtanh.pop %v4441
    %v4572 = vtanh.pop %v4445
    %v4573 = vtanh.pop %v4449
    %v4574 = vtanh.pop %v4453
    %v4575 = vtanh.pop %v4457
    %v4576 = vtanh.pop %v4461
    %v4577 = vtanh.pop %v4465
    %v4578 = vtanh.pop %v4469
    %v4579 = vxor.u32 %v4442, 2147483648
    %v4580 = vxor.u32 %v4446, 2147483648
    %v4581 = vxor.u32 %v4450, 2147483648
    %v4582 = vxor.u32 %v4454, 2147483648
    %v4583 = vxor.u32 %v4458, 2147483648
    %v4584 = vxor.u32 %v4462, 2147483648
    %v4585 = vxor.u32 %v4466, 2147483648
    %v4586 = vxor.u32 %v4470, 2147483648
    %v4587 = vmul.f32 %v4579, 1.442695
    %v4588 = vpow.pop %v4587
    %v4589 = vmul.f32 %v4580, 1.442695
    %v4590 = vpow.pop %v4589
    %v4591 = vmul.f32 %v4581, 1.442695
    %v4592 = vpow.pop %v4591
    %v4593 = vmul.f32 %v4582, 1.442695
    %v4594 = vpow.pop %v4593
    %v4595 = vmul.f32 %v4583, 1.442695
    %v4596 = vpow.pop %v4595
    %v4597 = vmul.f32 %v4584, 1.442695
    %v4598 = vpow.pop %v4597
    %v4599 = vmul.f32 %v4585, 1.442695
    %v4600 = vpow.pop %v4599
    %v4601 = vmul.f32 %v4586, 1.442695
    %v4602 = vpow.pop %v4601
    %v4603 = vadd.f32 %v4588, 1.0
    %v4604 = vadd.f32 %v4590, 1.0
    %v4605 = vadd.f32 %v4592, 1.0
    %v4606 = vadd.f32 %v4594, 1.0
    %v4607 = vadd.f32 %v4596, 1.0
    %v4608 = vadd.f32 %v4598, 1.0
    %v4609 = vadd.f32 %v4600, 1.0
    %v4610 = vadd.f32 %v4602, 1.0
    %v4611 = vrcp.pop %v4603
    %v4612 = vmul.f32 1.0, %v4611
    %v4613 = vrcp.pop %v4604
    %v4614 = vmul.f32 1.0, %v4613
    %v4615 = vrcp.pop %v4605
    %v4616 = vmul.f32 1.0, %v4615
    %v4617 = vrcp.pop %v4606
    %v4618 = vmul.f32 1.0, %v4617
    %v4619 = vrcp.pop %v4607
    %v4620 = vmul.f32 1.0, %v4619
    %v4621 = vrcp.pop %v4608
    %v4622 = vmul.f32 1.0, %v4621
    %v4623 = vrcp.pop %v4609
    %v4624 = vmul.f32 1.0, %v4623
    %v4625 = vrcp.pop %v4610
    %v4626 = vmul.f32 1.0, %v4625
    %v4635 = vrot.slane %v4012, 7
    %v4636 = vrot.slane %v4013, 7
    %v4637 = vrot.slane %v4014, 7
    %v4638 = vrot.slane %v4015, 7
    %v4639 = vrot.slane %v4016, 7
    %v4640 = vrot.slane %v4017, 7
    %v4641 = vrot.slane %v4018, 7
    %v4642 = vrot.slane %v4019, 7
    %v4651 = vmul.f32 %v4556, %v4635
    %v4652 = vmul.f32 %v4558, %v4636
    %v4653 = vmul.f32 %v4560, %v4637
    %v4654 = vmul.f32 %v4562, %v4638
    %v4655 = vmul.f32 %v4564, %v4639
    %v4656 = vmul.f32 %v4566, %v4640
    %v4657 = vmul.f32 %v4568, %v4641
    %v4658 = vmul.f32 %v4570, %v4642
    %v4659 = vmul.f32 %v4508, %v4571
    %v4660 = vmul.f32 %v4510, %v4572
    %v4661 = vmul.f32 %v4512, %v4573
    %v4662 = vmul.f32 %v4514, %v4574
    %v4663 = vmul.f32 %v4516, %v4575
    %v4664 = vmul.f32 %v4518, %v4576
    %v4665 = vmul.f32 %v4520, %v4577
    %v4666 = vmul.f32 %v4522, %v4578
    %v4667 = vadd.f32 %v4651, %v4659
    %v4668 = vadd.f32 %v4652, %v4660
    %v4669 = vadd.f32 %v4653, %v4661
    %v4670 = vadd.f32 %v4654, %v4662
    %v4671 = vadd.f32 %v4655, %v4663
    %v4672 = vadd.f32 %v4656, %v4664
    %v4673 = vadd.f32 %v4657, %v4665
    %v4674 = vadd.f32 %v4658, %v4666
    %v4675 = vtanh.pop %v4667
    %v4676 = vtanh.pop %v4668
    %v4677 = vtanh.pop %v4669
    %v4678 = vtanh.pop %v4670
    %v4679 = vtanh.pop %v4671
    %v4680 = vtanh.pop %v4672
    %v4681 = vtanh.pop %v4673
    %v4682 = vtanh.pop %v4674
    %v4683 = vmul.f32 %v4612, %v4675
    %v4684 = vmul.f32 %v4614, %v4676
    %v4685 = vmul.f32 %v4616, %v4677
    %v4686 = vmul.f32 %v4618, %v4678
    %v4687 = vmul.f32 %v4620, %v4679
    %v4688 = vmul.f32 %v4622, %v4680
    %v4689 = vmul.f32 %v4624, %v4681
    %v4690 = vmul.f32 %v4626, %v4682
    %v4691 = vxor.u32 %v4471, 2147483648
    %v4692 = vmul.f32 %v4691, 1.442695
    %v4693 = vpow.pop %v4692
    %v4694 = vadd.f32 %v4693, 1.0
    %v4695 = vrcp.pop %v4694
    %v4696 = vmul.f32 1.0, %v4695
    %v4697 = vxor.u32 %v4472, 2147483648
    %v4698 = vmul.f32 %v4697, 1.442695
    %v4699 = vpow.pop %v4698
    %v4700 = vadd.f32 %v4699, 1.0
    %v4701 = vrcp.pop %v4700
    %v4702 = vmul.f32 1.0, %v4701
    %v4703 = vtanh.pop %v4473
    %v4704 = vxor.u32 %v4474, 2147483648
    %v4705 = vmul.f32 %v4704, 1.442695
    %v4706 = vpow.pop %v4705
    %v4707 = vadd.f32 %v4706, 1.0
    %v4708 = vrcp.pop %v4707
    %v4709 = vmul.f32 1.0, %v4708
    %v4710 = vmul.f32 %v4702, %v4057
    %v4711 = vmul.f32 %v4696, %v4703
    %v4712 = vadd.f32 %v4710, %v4711
    %v4713 = vtanh.pop %v4712
    %v4714 = vmul.f32 %v4709, %v4713
    %v4723 = vrot.slane %v4684, 7
    %v4724 = vsel %vm792, %v4723, %v4683
    %v4725 = vrot.slane %v4685, 6
    %v4726 = vrot.slane %v4686, 5
    %v4727 = vsel %vm774, %v4726, %v4725
    %v4728 = vrot.slane %v4687, 4
    %v4729 = vsel %vm777, %v4728, %v4727
    %v4730 = vrot.slane %v4688, 3
    %v4731 = vsel %vm780, %v4730, %v4729
    %v4732 = vrot.slane %v4689, 2
    %v4733 = vsel %vm783, %v4732, %v4731
    %v4734 = vrot.slane %v4690, 1
    %v4735 = vsel %vm786, %v4734, %v4733
    %v4737 = vrot.slane %v4714, 2
    %vm4738 = vcmask 1041408
    %v4739 = vrot.slane %v4724, 6
    %v4740 = vrot.slane %v4735, 6
    %v4741 = vsel %vm4738, %v4739, %v4740
    %v4742 = vrot.slane %v4737, 6
    %v4743 = vsel %vm4738, %v4742, %v4742
    %4746 = vmatprep.subr.mxu0 %v317
    %4747 = vmatpush1.msra.mxu0 %v316
    %4748 = vmatprep.subr.mxu0 %v325
    %4749 = vmatpush1.msra.mxu0 %v324
    %4750 = vmatprep.subr.mxu0 %v333
    %4751 = vmatpush1.msra.mxu0 %v332
    %4752 = vmatprep.subr.mxu0 %v341
    %4753 = vmatpush1.msra.mxu0 %v340
    %4754 = vmatprep.subr.mxu0 %v349
    %4755 = vmatpush1.msra.mxu0 %v348
    %4756 = vmatprep.subr.mxu0 %v357
    %4757 = vmatpush1.msra.mxu0 %v356
    %4758 = vmatprep.subr.mxu0 %v365
    %4759 = vmatpush1.msra.mxu0 %v364
    %4760 = vmatprep.subr.mxu0 %v373
    %4761 = vmatpush1.msra.mxu0 %v372
    %4762 = vmatprep.subr.mxu0 %v381
    %4763 = vmatpush1.msra.mxu0 %v380
    %4764 = vmatprep.subr.mxu0 %v389
    %4765 = vmatpush1.msra.mxu0 %v388
    %4766 = vmatprep.subr.mxu0 %v397
    %4767 = vmatpush1.msra.mxu0 %v396
    %4768 = vmatprep.subr.mxu0 %v405
    %4769 = vmatpush1.msra.mxu0 %v404
    %4770 = vmatprep.subr.mxu0 %v413
    %4771 = vmatpush1.msra.mxu0 %v412
    %4772 = vmatprep.subr.mxu0 %v421
    %4773 = vmatpush1.msra.mxu0 %v420
    %4774 = vmatprep.subr.mxu0 %v429
    %4775 = vmatpush1.msra.mxu0 %v428
    %4776 = vmatprep.subr.mxu0 %v437
    %4777 = vmatpush1.msra.mxu0 %v436
    %4778 = vmatprep.subr.mxu0 %v445
    %4779 = vmatpush1.msra.mxu0 %v444
    %4780 = vmatprep.subr.mxu0 %v453
    %4781 = vmatpush1.msra.mxu0 %v452
    %4782 = vmatprep.subr.mxu0 %v461
    %4783 = vmatpush1.msra.mxu0 %v460
    %4784 = vmatprep.subr.mxu0 %v469
    %4785 = vmatpush1.msra.mxu0 %v468
    %4786 = vmatprep.subr.mxu0 %v477
    %4787 = vmatpush1.msra.mxu0 %v476
    %4788 = vmatprep.subr.mxu0 %v485
    %4789 = vmatpush1.msra.mxu0 %v484
    %4790 = vmatprep.subr.mxu0 %v493
    %4791 = vmatpush1.msra.mxu0 %v492
    %4792 = vmatprep.subr.mxu0 %v501
    %4793 = vmatpush1.msra.mxu0 %v500
    %4794 = vmatprep.subr.mxu0 %v509
    %4795 = vmatpush1.msra.mxu0 %v508
    %4796 = vmatprep.subr.mxu0 %v517
    %4797 = vmatpush1.msra.mxu0 %v516
    %4798 = vmatprep.subr.mxu0 %v525
    %4799 = vmatpush1.msra.mxu0 %v524
    %4800 = vmatprep.subr.mxu0 %v533
    %4801 = vmatpush1.msra.mxu0 %v532
    %4802 = vmatprep.subr.mxu0 %v541
    %4803 = vmatpush1.msra.mxu0 %v540
    %4804 = vmatprep.subr.mxu0 %v549
    %4805 = vmatpush1.msra.mxu0 %v548
    %4806 = vmatprep.subr.mxu0 %v557
    %4807 = vmatpush1.msra.mxu0 %v556
    %4808 = vmatprep.subr.mxu0 %v565
    %4809 = vmatpush1.msra.mxu0 %v564
    %4810 = vmatprep.mubr.f32.mxu0 %v4743
    %4811 = vmatmul.mubr.f32.gmra.mrb[0].mxu0 %v4741
    %v4812 = vpop.f32.mrb[0].mxu0
    %v4813 = vadd.f32 0.0, %v4812
    %v4814 = vpop.f32.mrb[0].mxu0
    %v4815 = vadd.f32 0.0, %v4814
    %4816 = vdwg.mxu0
    %4817 = vmatprep.subr.mxu0 %v319
    %4818 = vmatpush1.msra.mxu0 %v318
    %4819 = vmatprep.subr.mxu0 %v327
    %4820 = vmatpush1.msra.mxu0 %v326
    %4821 = vmatprep.subr.mxu0 %v335
    %4822 = vmatpush1.msra.mxu0 %v334
    %4823 = vmatprep.subr.mxu0 %v343
    %4824 = vmatpush1.msra.mxu0 %v342
    %4825 = vmatprep.subr.mxu0 %v351
    %4826 = vmatpush1.msra.mxu0 %v350
    %4827 = vmatprep.subr.mxu0 %v359
    %4828 = vmatpush1.msra.mxu0 %v358
    %4829 = vmatprep.subr.mxu0 %v367
    %4830 = vmatpush1.msra.mxu0 %v366
    %4831 = vmatprep.subr.mxu0 %v375
    %4832 = vmatpush1.msra.mxu0 %v374
    %4833 = vmatprep.subr.mxu0 %v383
    %4834 = vmatpush1.msra.mxu0 %v382
    %4835 = vmatprep.subr.mxu0 %v391
    %4836 = vmatpush1.msra.mxu0 %v390
    %4837 = vmatprep.subr.mxu0 %v399
    %4838 = vmatpush1.msra.mxu0 %v398
    %4839 = vmatprep.subr.mxu0 %v407
    %4840 = vmatpush1.msra.mxu0 %v406
    %4841 = vmatprep.subr.mxu0 %v415
    %4842 = vmatpush1.msra.mxu0 %v414
    %4843 = vmatprep.subr.mxu0 %v423
    %4844 = vmatpush1.msra.mxu0 %v422
    %4845 = vmatprep.subr.mxu0 %v431
    %4846 = vmatpush1.msra.mxu0 %v430
    %4847 = vmatprep.subr.mxu0 %v439
    %4848 = vmatpush1.msra.mxu0 %v438
    %4849 = vmatprep.subr.mxu0 %v447
    %4850 = vmatpush1.msra.mxu0 %v446
    %4851 = vmatprep.subr.mxu0 %v455
    %4852 = vmatpush1.msra.mxu0 %v454
    %4853 = vmatprep.subr.mxu0 %v463
    %4854 = vmatpush1.msra.mxu0 %v462
    %4855 = vmatprep.subr.mxu0 %v471
    %4856 = vmatpush1.msra.mxu0 %v470
    %4857 = vmatprep.subr.mxu0 %v479
    %4858 = vmatpush1.msra.mxu0 %v478
    %4859 = vmatprep.subr.mxu0 %v487
    %4860 = vmatpush1.msra.mxu0 %v486
    %4861 = vmatprep.subr.mxu0 %v495
    %4862 = vmatpush1.msra.mxu0 %v494
    %4863 = vmatprep.subr.mxu0 %v503
    %4864 = vmatpush1.msra.mxu0 %v502
    %4865 = vmatprep.subr.mxu0 %v511
    %4866 = vmatpush1.msra.mxu0 %v510
    %4867 = vmatprep.subr.mxu0 %v519
    %4868 = vmatpush1.msra.mxu0 %v518
    %4869 = vmatprep.subr.mxu0 %v527
    %4870 = vmatpush1.msra.mxu0 %v526
    %4871 = vmatprep.subr.mxu0 %v535
    %4872 = vmatpush1.msra.mxu0 %v534
    %4873 = vmatprep.subr.mxu0 %v543
    %4874 = vmatpush1.msra.mxu0 %v542
    %4875 = vmatprep.subr.mxu0 %v551
    %4876 = vmatpush1.msra.mxu0 %v550
    %4877 = vmatprep.subr.mxu0 %v559
    %4878 = vmatpush1.msra.mxu0 %v558
    %4879 = vmatprep.subr.mxu0 %v567
    %4880 = vmatpush1.msra.mxu0 %v566
    %4881 = vmatprep.mubr.f32.mxu0 %v4743
    %4882 = vmatmul.mubr.f32.gmra.mrb[0].mxu0 %v4741
    %v4883 = vpop.f32.mrb[0].mxu0
    %v4884 = vadd.f32 0.0, %v4883
    %v4885 = vpop.f32.mrb[0].mxu0
    %v4886 = vadd.f32 0.0, %v4885
    %4887 = vdwg.mxu0
    %4888 = vmatprep.subr.mxu0 %v321
    %4889 = vmatpush1.msra.mxu0 %v320
    %4890 = vmatprep.subr.mxu0 %v329
    %4891 = vmatpush1.msra.mxu0 %v328
    %4892 = vmatprep.subr.mxu0 %v337
    %4893 = vmatpush1.msra.mxu0 %v336
    %4894 = vmatprep.subr.mxu0 %v345
    %4895 = vmatpush1.msra.mxu0 %v344
    %4896 = vmatprep.subr.mxu0 %v353
    %4897 = vmatpush1.msra.mxu0 %v352
    %4898 = vmatprep.subr.mxu0 %v361
    %4899 = vmatpush1.msra.mxu0 %v360
    %4900 = vmatprep.subr.mxu0 %v369
    %4901 = vmatpush1.msra.mxu0 %v368
    %4902 = vmatprep.subr.mxu0 %v377
    %4903 = vmatpush1.msra.mxu0 %v376
    %4904 = vmatprep.subr.mxu0 %v385
    %4905 = vmatpush1.msra.mxu0 %v384
    %4906 = vmatprep.subr.mxu0 %v393
    %4907 = vmatpush1.msra.mxu0 %v392
    %4908 = vmatprep.subr.mxu0 %v401
    %4909 = vmatpush1.msra.mxu0 %v400
    %4910 = vmatprep.subr.mxu0 %v409
    %4911 = vmatpush1.msra.mxu0 %v408
    %4912 = vmatprep.subr.mxu0 %v417
    %4913 = vmatpush1.msra.mxu0 %v416
    %4914 = vmatprep.subr.mxu0 %v425
    %4915 = vmatpush1.msra.mxu0 %v424
    %4916 = vmatprep.subr.mxu0 %v433
    %4917 = vmatpush1.msra.mxu0 %v432
    %4918 = vmatprep.subr.mxu0 %v441
    %4919 = vmatpush1.msra.mxu0 %v440
    %4920 = vmatprep.subr.mxu0 %v449
    %4921 = vmatpush1.msra.mxu0 %v448
    %4922 = vmatprep.subr.mxu0 %v457
    %4923 = vmatpush1.msra.mxu0 %v456
    %4924 = vmatprep.subr.mxu0 %v465
    %4925 = vmatpush1.msra.mxu0 %v464
    %4926 = vmatprep.subr.mxu0 %v473
    %4927 = vmatpush1.msra.mxu0 %v472
    %4928 = vmatprep.subr.mxu0 %v481
    %4929 = vmatpush1.msra.mxu0 %v480
    %4930 = vmatprep.subr.mxu0 %v489
    %4931 = vmatpush1.msra.mxu0 %v488
    %4932 = vmatprep.subr.mxu0 %v497
    %4933 = vmatpush1.msra.mxu0 %v496
    %4934 = vmatprep.subr.mxu0 %v505
    %4935 = vmatpush1.msra.mxu0 %v504
    %4936 = vmatprep.subr.mxu0 %v513
    %4937 = vmatpush1.msra.mxu0 %v512
    %4938 = vmatprep.subr.mxu0 %v521
    %4939 = vmatpush1.msra.mxu0 %v520
    %4940 = vmatprep.subr.mxu0 %v529
    %4941 = vmatpush1.msra.mxu0 %v528
    %4942 = vmatprep.subr.mxu0 %v537
    %4943 = vmatpush1.msra.mxu0 %v536
    %4944 = vmatprep.subr.mxu0 %v545
    %4945 = vmatpush1.msra.mxu0 %v544
    %4946 = vmatprep.subr.mxu0 %v553
    %4947 = vmatpush1.msra.mxu0 %v552
    %4948 = vmatprep.subr.mxu0 %v561
    %4949 = vmatpush1.msra.mxu0 %v560
    %4950 = vmatprep.subr.mxu0 %v569
    %4951 = vmatpush1.msra.mxu0 %v568
    %4952 = vmatprep.mubr.f32.mxu0 %v4743
    %4953 = vmatmul.mubr.f32.gmra.mrb[0].mxu0 %v4741
    %v4954 = vpop.f32.mrb[0].mxu0
    %v4955 = vadd.f32 0.0, %v4954
    %v4956 = vpop.f32.mrb[0].mxu0
    %v4957 = vadd.f32 0.0, %v4956
    %4958 = vdwg.mxu0
    %4959 = vmatprep.subr.mxu0 %v323
    %4960 = vmatpush1.msra.mxu0 %v322
    %4961 = vmatprep.subr.mxu0 %v331
    %4962 = vmatpush1.msra.mxu0 %v330
    %4963 = vmatprep.subr.mxu0 %v339
    %4964 = vmatpush1.msra.mxu0 %v338
    %4965 = vmatprep.subr.mxu0 %v347
    %4966 = vmatpush1.msra.mxu0 %v346
    %4967 = vmatprep.subr.mxu0 %v355
    %4968 = vmatpush1.msra.mxu0 %v354
    %4969 = vmatprep.subr.mxu0 %v363
    %4970 = vmatpush1.msra.mxu0 %v362
    %4971 = vmatprep.subr.mxu0 %v371
    %4972 = vmatpush1.msra.mxu0 %v370
    %4973 = vmatprep.subr.mxu0 %v379
    %4974 = vmatpush1.msra.mxu0 %v378
    %4975 = vmatprep.subr.mxu0 %v387
    %4976 = vmatpush1.msra.mxu0 %v386
    %4977 = vmatprep.subr.mxu0 %v395
    %4978 = vmatpush1.msra.mxu0 %v394
    %4979 = vmatprep.subr.mxu0 %v403
    %4980 = vmatpush1.msra.mxu0 %v402
    %4981 = vmatprep.subr.mxu0 %v411
    %4982 = vmatpush1.msra.mxu0 %v410
    %4983 = vmatprep.subr.mxu0 %v419
    %4984 = vmatpush1.msra.mxu0 %v418
    %4985 = vmatprep.subr.mxu0 %v427
    %4986 = vmatpush1.msra.mxu0 %v426
    %4987 = vmatprep.subr.mxu0 %v435
    %4988 = vmatpush1.msra.mxu0 %v434
    %4989 = vmatprep.subr.mxu0 %v443
    %4990 = vmatpush1.msra.mxu0 %v442
    %4991 = vmatprep.subr.mxu0 %v451
    %4992 = vmatpush1.msra.mxu0 %v450
    %4993 = vmatprep.subr.mxu0 %v459
    %4994 = vmatpush1.msra.mxu0 %v458
    %4995 = vmatprep.subr.mxu0 %v467
    %4996 = vmatpush1.msra.mxu0 %v466
    %4997 = vmatprep.subr.mxu0 %v475
    %4998 = vmatpush1.msra.mxu0 %v474
    %4999 = vmatprep.subr.mxu0 %v483
    %5000 = vmatpush1.msra.mxu0 %v482
    %5001 = vmatprep.subr.mxu0 %v491
    %5002 = vmatpush1.msra.mxu0 %v490
    %5003 = vmatprep.subr.mxu0 %v499
    %5004 = vmatpush1.msra.mxu0 %v498
    %5005 = vmatprep.subr.mxu0 %v507
    %5006 = vmatpush1.msra.mxu0 %v506
    %5007 = vmatprep.subr.mxu0 %v515
    %5008 = vmatpush1.msra.mxu0 %v514
    %5009 = vmatprep.subr.mxu0 %v523
    %5010 = vmatpush1.msra.mxu0 %v522
    %5011 = vmatprep.subr.mxu0 %v531
    %5012 = vmatpush1.msra.mxu0 %v530
    %5013 = vmatprep.subr.mxu0 %v539
    %5014 = vmatpush1.msra.mxu0 %v538
    %5015 = vmatprep.subr.mxu0 %v547
    %5016 = vmatpush1.msra.mxu0 %v546
    %5017 = vmatprep.subr.mxu0 %v555
    %5018 = vmatpush1.msra.mxu0 %v554
    %5019 = vmatprep.subr.mxu0 %v563
    %5020 = vmatpush1.msra.mxu0 %v562
    %5021 = vmatprep.subr.mxu0 %v571
    %5022 = vmatpush1.msra.mxu0 %v570
    %5023 = vmatprep.mubr.f32.mxu0 %v4743
    %5024 = vmatmul.mubr.f32.gmra.mrb[0].mxu0 %v4741
    %v5025 = vpop.f32.mrb[0].mxu0
    %v5026 = vadd.f32 0.0, %v5025
    %v5027 = vpop.f32.mrb[0].mxu0
    %v5028 = vadd.f32 0.0, %v5027
    %5029 = vdwg.mxu0
    %v5034 = vrot.slane %v4813, 1
    %v5035 = vrot.slane %v4815, 1
    %v5036 = vrot.slane %v4884, 1
    %v5037 = vrot.slane %v4886, 1
    %v5038 = vrot.slane %v4813, 2
    %v5039 = vrot.slane %v4815, 2
    %v5040 = vrot.slane %v4884, 2
    %v5041 = vrot.slane %v4886, 2
    %v5042 = vrot.slane %v4813, 3
    %v5043 = vrot.slane %v4815, 3
    %v5044 = vrot.slane %v4884, 3
    %v5045 = vrot.slane %v4886, 3
    %v5046 = vrot.slane %v4813, 4
    %v5047 = vrot.slane %v4815, 4
    %v5048 = vrot.slane %v4884, 4
    %v5049 = vrot.slane %v4886, 4
    %v5050 = vrot.slane %v4813, 5
    %v5051 = vrot.slane %v4815, 5
    %v5052 = vrot.slane %v4884, 5
    %v5053 = vrot.slane %v4886, 5
    %v5054 = vrot.slane %v4813, 6
    %v5055 = vrot.slane %v4815, 6
    %v5056 = vrot.slane %v4884, 6
    %v5057 = vrot.slane %v4886, 6
    %v5058 = vrot.slane %v4813, 7
    %v5059 = vrot.slane %v4815, 7
    %v5060 = vrot.slane %v4884, 7
    %v5061 = vrot.slane %v4886, 7
    %v5094 = vadd.f32 %v157, %v5034
    %v5095 = vadd.f32 %v159, %v5035
    %v5096 = vadd.f32 %v270, %v5036
    %v5097 = vadd.f32 %v272, %v5037
    %v5098 = vadd.f32 %v163, %v5038
    %v5099 = vadd.f32 %v165, %v5039
    %v5100 = vadd.f32 %v276, %v5040
    %v5101 = vadd.f32 %v278, %v5041
    %v5102 = vadd.f32 %v169, %v5042
    %v5103 = vadd.f32 %v171, %v5043
    %v5104 = vadd.f32 %v282, %v5044
    %v5105 = vadd.f32 %v284, %v5045
    %v5106 = vadd.f32 %v175, %v5046
    %v5107 = vadd.f32 %v177, %v5047
    %v5108 = vadd.f32 %v288, %v5048
    %v5109 = vadd.f32 %v290, %v5049
    %v5110 = vadd.f32 %v181, %v5050
    %v5111 = vadd.f32 %v183, %v5051
    %v5112 = vadd.f32 %v294, %v5052
    %v5113 = vadd.f32 %v296, %v5053
    %v5114 = vadd.f32 %v187, %v5054
    %v5115 = vadd.f32 %v189, %v5055
    %v5116 = vadd.f32 %v300, %v5056
    %v5117 = vadd.f32 %v302, %v5057
    %v5118 = vadd.f32 %v193, %v5058
    %v5119 = vadd.f32 %v195, %v5059
    %v5120 = vadd.f32 %v306, %v5060
    %v5121 = vadd.f32 %v308, %v5061
    %v5122 = vadd.f32 %v199, %v4813
    %v5123 = vadd.f32 %v201, %v4815
    %v5124 = vadd.f32 %v312, %v4884
    %v5125 = vadd.f32 %v314, %v4886
    %v5126 = vadd.f32 %v4955, %v1179
    %v5127 = vadd.f32 %v4957, %v1183
    %v5128 = vadd.f32 %v5026, %v1187
    %v5129 = vadd.f32 %v5028, %v1191
    %v5130 = vxor.u32 %v5094, 2147483648
    %v5131 = vxor.u32 %v5098, 2147483648
    %v5132 = vxor.u32 %v5102, 2147483648
    %v5133 = vxor.u32 %v5106, 2147483648
    %v5134 = vxor.u32 %v5110, 2147483648
    %v5135 = vxor.u32 %v5114, 2147483648
    %v5136 = vxor.u32 %v5118, 2147483648
    %v5137 = vxor.u32 %v5122, 2147483648
    %v5138 = vmul.f32 %v5130, 1.442695
    %v5139 = vpow.pop %v5138
    %v5140 = vmul.f32 %v5131, 1.442695
    %v5141 = vpow.pop %v5140
    %v5142 = vmul.f32 %v5132, 1.442695
    %v5143 = vpow.pop %v5142
    %v5144 = vmul.f32 %v5133, 1.442695
    %v5145 = vpow.pop %v5144
    %v5146 = vmul.f32 %v5134, 1.442695
    %v5147 = vpow.pop %v5146
    %v5148 = vmul.f32 %v5135, 1.442695
    %v5149 = vpow.pop %v5148
    %v5150 = vmul.f32 %v5136, 1.442695
    %v5151 = vpow.pop %v5150
    %v5152 = vmul.f32 %v5137, 1.442695
    %v5153 = vpow.pop %v5152
    %v5154 = vadd.f32 %v5139, 1.0
    %v5155 = vadd.f32 %v5141, 1.0
    %v5156 = vadd.f32 %v5143, 1.0
    %v5157 = vadd.f32 %v5145, 1.0
    %v5158 = vadd.f32 %v5147, 1.0
    %v5159 = vadd.f32 %v5149, 1.0
    %v5160 = vadd.f32 %v5151, 1.0
    %v5161 = vadd.f32 %v5153, 1.0
    %v5162 = vrcp.pop %v5154
    %v5163 = vmul.f32 1.0, %v5162
    %v5164 = vrcp.pop %v5155
    %v5165 = vmul.f32 1.0, %v5164
    %v5166 = vrcp.pop %v5156
    %v5167 = vmul.f32 1.0, %v5166
    %v5168 = vrcp.pop %v5157
    %v5169 = vmul.f32 1.0, %v5168
    %v5170 = vrcp.pop %v5158
    %v5171 = vmul.f32 1.0, %v5170
    %v5172 = vrcp.pop %v5159
    %v5173 = vmul.f32 1.0, %v5172
    %v5174 = vrcp.pop %v5160
    %v5175 = vmul.f32 1.0, %v5174
    %v5176 = vrcp.pop %v5161
    %v5177 = vmul.f32 1.0, %v5176
    %v5178 = vxor.u32 %v5095, 2147483648
    %v5179 = vxor.u32 %v5099, 2147483648
    %v5180 = vxor.u32 %v5103, 2147483648
    %v5181 = vxor.u32 %v5107, 2147483648
    %v5182 = vxor.u32 %v5111, 2147483648
    %v5183 = vxor.u32 %v5115, 2147483648
    %v5184 = vxor.u32 %v5119, 2147483648
    %v5185 = vxor.u32 %v5123, 2147483648
    %v5186 = vmul.f32 %v5178, 1.442695
    %v5187 = vpow.pop %v5186
    %v5188 = vmul.f32 %v5179, 1.442695
    %v5189 = vpow.pop %v5188
    %v5190 = vmul.f32 %v5180, 1.442695
    %v5191 = vpow.pop %v5190
    %v5192 = vmul.f32 %v5181, 1.442695
    %v5193 = vpow.pop %v5192
    %v5194 = vmul.f32 %v5182, 1.442695
    %v5195 = vpow.pop %v5194
    %v5196 = vmul.f32 %v5183, 1.442695
    %v5197 = vpow.pop %v5196
    %v5198 = vmul.f32 %v5184, 1.442695
    %v5199 = vpow.pop %v5198
    %v5200 = vmul.f32 %v5185, 1.442695
    %v5201 = vpow.pop %v5200
    %v5202 = vadd.f32 %v5187, 1.0
    %v5203 = vadd.f32 %v5189, 1.0
    %v5204 = vadd.f32 %v5191, 1.0
    %v5205 = vadd.f32 %v5193, 1.0
    %v5206 = vadd.f32 %v5195, 1.0
    %v5207 = vadd.f32 %v5197, 1.0
    %v5208 = vadd.f32 %v5199, 1.0
    %v5209 = vadd.f32 %v5201, 1.0
    %v5210 = vrcp.pop %v5202
    %v5211 = vmul.f32 1.0, %v5210
    %v5212 = vrcp.pop %v5203
    %v5213 = vmul.f32 1.0, %v5212
    %v5214 = vrcp.pop %v5204
    %v5215 = vmul.f32 1.0, %v5214
    %v5216 = vrcp.pop %v5205
    %v5217 = vmul.f32 1.0, %v5216
    %v5218 = vrcp.pop %v5206
    %v5219 = vmul.f32 1.0, %v5218
    %v5220 = vrcp.pop %v5207
    %v5221 = vmul.f32 1.0, %v5220
    %v5222 = vrcp.pop %v5208
    %v5223 = vmul.f32 1.0, %v5222
    %v5224 = vrcp.pop %v5209
    %v5225 = vmul.f32 1.0, %v5224
    %v5226 = vtanh.pop %v5096
    %v5227 = vtanh.pop %v5100
    %v5228 = vtanh.pop %v5104
    %v5229 = vtanh.pop %v5108
    %v5230 = vtanh.pop %v5112
    %v5231 = vtanh.pop %v5116
    %v5232 = vtanh.pop %v5120
    %v5233 = vtanh.pop %v5124
    %v5234 = vxor.u32 %v5097, 2147483648
    %v5235 = vxor.u32 %v5101, 2147483648
    %v5236 = vxor.u32 %v5105, 2147483648
    %v5237 = vxor.u32 %v5109, 2147483648
    %v5238 = vxor.u32 %v5113, 2147483648
    %v5239 = vxor.u32 %v5117, 2147483648
    %v5240 = vxor.u32 %v5121, 2147483648
    %v5241 = vxor.u32 %v5125, 2147483648
    %v5242 = vmul.f32 %v5234, 1.442695
    %v5243 = vpow.pop %v5242
    %v5244 = vmul.f32 %v5235, 1.442695
    %v5245 = vpow.pop %v5244
    %v5246 = vmul.f32 %v5236, 1.442695
    %v5247 = vpow.pop %v5246
    %v5248 = vmul.f32 %v5237, 1.442695
    %v5249 = vpow.pop %v5248
    %v5250 = vmul.f32 %v5238, 1.442695
    %v5251 = vpow.pop %v5250
    %v5252 = vmul.f32 %v5239, 1.442695
    %v5253 = vpow.pop %v5252
    %v5254 = vmul.f32 %v5240, 1.442695
    %v5255 = vpow.pop %v5254
    %v5256 = vmul.f32 %v5241, 1.442695
    %v5257 = vpow.pop %v5256
    %v5258 = vadd.f32 %v5243, 1.0
    %v5259 = vadd.f32 %v5245, 1.0
    %v5260 = vadd.f32 %v5247, 1.0
    %v5261 = vadd.f32 %v5249, 1.0
    %v5262 = vadd.f32 %v5251, 1.0
    %v5263 = vadd.f32 %v5253, 1.0
    %v5264 = vadd.f32 %v5255, 1.0
    %v5265 = vadd.f32 %v5257, 1.0
    %v5266 = vrcp.pop %v5258
    %v5267 = vmul.f32 1.0, %v5266
    %v5268 = vrcp.pop %v5259
    %v5269 = vmul.f32 1.0, %v5268
    %v5270 = vrcp.pop %v5260
    %v5271 = vmul.f32 1.0, %v5270
    %v5272 = vrcp.pop %v5261
    %v5273 = vmul.f32 1.0, %v5272
    %v5274 = vrcp.pop %v5262
    %v5275 = vmul.f32 1.0, %v5274
    %v5276 = vrcp.pop %v5263
    %v5277 = vmul.f32 1.0, %v5276
    %v5278 = vrcp.pop %v5264
    %v5279 = vmul.f32 1.0, %v5278
    %v5280 = vrcp.pop %v5265
    %v5281 = vmul.f32 1.0, %v5280
    %v5290 = vrot.slane %v4667, 7
    %v5291 = vrot.slane %v4668, 7
    %v5292 = vrot.slane %v4669, 7
    %v5293 = vrot.slane %v4670, 7
    %v5294 = vrot.slane %v4671, 7
    %v5295 = vrot.slane %v4672, 7
    %v5296 = vrot.slane %v4673, 7
    %v5297 = vrot.slane %v4674, 7
    %v5306 = vmul.f32 %v5211, %v5290
    %v5307 = vmul.f32 %v5213, %v5291
    %v5308 = vmul.f32 %v5215, %v5292
    %v5309 = vmul.f32 %v5217, %v5293
    %v5310 = vmul.f32 %v5219, %v5294
    %v5311 = vmul.f32 %v5221, %v5295
    %v5312 = vmul.f32 %v5223, %v5296
    %v5313 = vmul.f32 %v5225, %v5297
    %v5314 = vmul.f32 %v5163, %v5226
    %v5315 = vmul.f32 %v5165, %v5227
    %v5316 = vmul.f32 %v5167, %v5228
    %v5317 = vmul.f32 %v5169, %v5229
    %v5318 = vmul.f32 %v5171, %v5230
    %v5319 = vmul.f32 %v5173, %v5231
    %v5320 = vmul.f32 %v5175, %v5232
    %v5321 = vmul.f32 %v5177, %v5233
    %v5322 = vadd.f32 %v5306, %v5314
    %v5323 = vadd.f32 %v5307, %v5315
    %v5324 = vadd.f32 %v5308, %v5316
    %v5325 = vadd.f32 %v5309, %v5317
    %v5326 = vadd.f32 %v5310, %v5318
    %v5327 = vadd.f32 %v5311, %v5319
    %v5328 = vadd.f32 %v5312, %v5320
    %v5329 = vadd.f32 %v5313, %v5321
    %v5330 = vtanh.pop %v5322
    %v5331 = vtanh.pop %v5323
    %v5332 = vtanh.pop %v5324
    %v5333 = vtanh.pop %v5325
    %v5334 = vtanh.pop %v5326
    %v5335 = vtanh.pop %v5327
    %v5336 = vtanh.pop %v5328
    %v5337 = vtanh.pop %v5329
    %v5338 = vmul.f32 %v5267, %v5330
    %v5339 = vmul.f32 %v5269, %v5331
    %v5340 = vmul.f32 %v5271, %v5332
    %v5341 = vmul.f32 %v5273, %v5333
    %v5342 = vmul.f32 %v5275, %v5334
    %v5343 = vmul.f32 %v5277, %v5335
    %v5344 = vmul.f32 %v5279, %v5336
    %v5345 = vmul.f32 %v5281, %v5337
    %v5346 = vxor.u32 %v5126, 2147483648
    %v5347 = vmul.f32 %v5346, 1.442695
    %v5348 = vpow.pop %v5347
    %v5349 = vadd.f32 %v5348, 1.0
    %v5350 = vrcp.pop %v5349
    %v5351 = vmul.f32 1.0, %v5350
    %v5352 = vxor.u32 %v5127, 2147483648
    %v5353 = vmul.f32 %v5352, 1.442695
    %v5354 = vpow.pop %v5353
    %v5355 = vadd.f32 %v5354, 1.0
    %v5356 = vrcp.pop %v5355
    %v5357 = vmul.f32 1.0, %v5356
    %v5358 = vtanh.pop %v5128
    %v5359 = vxor.u32 %v5129, 2147483648
    %v5360 = vmul.f32 %v5359, 1.442695
    %v5361 = vpow.pop %v5360
    %v5362 = vadd.f32 %v5361, 1.0
    %v5363 = vrcp.pop %v5362
    %v5364 = vmul.f32 1.0, %v5363
    %v5365 = vmul.f32 %v5357, %v4712
    %v5366 = vmul.f32 %v5351, %v5358
    %v5367 = vadd.f32 %v5365, %v5366
    %v5368 = vtanh.pop %v5367
    %v5369 = vmul.f32 %v5364, %v5368
    %v5378 = vrot.slane %v5339, 7
    %v5379 = vrot.slane %v5340, 6
    %v5380 = vsel %vm774, %v5379, %v5378
    %v5381 = vrot.slane %v5341, 5
    %v5382 = vsel %vm777, %v5381, %v5380
    %v5383 = vrot.slane %v5342, 4
    %v5384 = vsel %vm780, %v5383, %v5382
    %v5385 = vrot.slane %v5343, 3
    %v5386 = vsel %vm783, %v5385, %v5384
    %v5387 = vrot.slane %v5344, 2
    %v5388 = vsel %vm786, %v5387, %v5386
    %v5389 = vrot.slane %v5345, 1
    %v5390 = vsel %vm789, %v5389, %v5388
    %v5392 = vrot.slane %v5369, 1
    %vm5393 = vcmask 1040384
    %v5394 = vrot.slane %v5338, 7
    %v5395 = vrot.slane %v5390, 7
    %v5396 = vsel %vm5393, %v5394, %v5395
    %v5397 = vrot.slane %v5392, 7
    %v5398 = vsel %vm5393, %v5397, %v5397
    %5401 = vmatprep.subr.mxu0 %v321
    %5402 = vmatpush1.msra.mxu0 %v320
    %5403 = vmatprep.subr.mxu0 %v329
    %5404 = vmatpush1.msra.mxu0 %v328
    %5405 = vmatprep.subr.mxu0 %v337
    %5406 = vmatpush1.msra.mxu0 %v336
    %5407 = vmatprep.subr.mxu0 %v345
    %5408 = vmatpush1.msra.mxu0 %v344
    %5409 = vmatprep.subr.mxu0 %v353
    %5410 = vmatpush1.msra.mxu0 %v352
    %5411 = vmatprep.subr.mxu0 %v361
    %5412 = vmatpush1.msra.mxu0 %v360
    %5413 = vmatprep.subr.mxu0 %v369
    %5414 = vmatpush1.msra.mxu0 %v368
    %5415 = vmatprep.subr.mxu0 %v377
    %5416 = vmatpush1.msra.mxu0 %v376
    %5417 = vmatprep.subr.mxu0 %v385
    %5418 = vmatpush1.msra.mxu0 %v384
    %5419 = vmatprep.subr.mxu0 %v393
    %5420 = vmatpush1.msra.mxu0 %v392
    %5421 = vmatprep.subr.mxu0 %v401
    %5422 = vmatpush1.msra.mxu0 %v400
    %5423 = vmatprep.subr.mxu0 %v409
    %5424 = vmatpush1.msra.mxu0 %v408
    %5425 = vmatprep.subr.mxu0 %v417
    %5426 = vmatpush1.msra.mxu0 %v416
    %5427 = vmatprep.subr.mxu0 %v425
    %5428 = vmatpush1.msra.mxu0 %v424
    %5429 = vmatprep.subr.mxu0 %v433
    %5430 = vmatpush1.msra.mxu0 %v432
    %5431 = vmatprep.subr.mxu0 %v441
    %5432 = vmatpush1.msra.mxu0 %v440
    %5433 = vmatprep.subr.mxu0 %v449
    %5434 = vmatpush1.msra.mxu0 %v448
    %5435 = vmatprep.subr.mxu0 %v457
    %5436 = vmatpush1.msra.mxu0 %v456
    %5437 = vmatprep.subr.mxu0 %v465
    %5438 = vmatpush1.msra.mxu0 %v464
    %5439 = vmatprep.subr.mxu0 %v473
    %5440 = vmatpush1.msra.mxu0 %v472
    %5441 = vmatprep.subr.mxu0 %v481
    %5442 = vmatpush1.msra.mxu0 %v480
    %5443 = vmatprep.subr.mxu0 %v489
    %5444 = vmatpush1.msra.mxu0 %v488
    %5445 = vmatprep.subr.mxu0 %v497
    %5446 = vmatpush1.msra.mxu0 %v496
    %5447 = vmatprep.subr.mxu0 %v505
    %5448 = vmatpush1.msra.mxu0 %v504
    %5449 = vmatprep.subr.mxu0 %v513
    %5450 = vmatpush1.msra.mxu0 %v512
    %5451 = vmatprep.subr.mxu0 %v521
    %5452 = vmatpush1.msra.mxu0 %v520
    %5453 = vmatprep.subr.mxu0 %v529
    %5454 = vmatpush1.msra.mxu0 %v528
    %5455 = vmatprep.subr.mxu0 %v537
    %5456 = vmatpush1.msra.mxu0 %v536
    %5457 = vmatprep.subr.mxu0 %v545
    %5458 = vmatpush1.msra.mxu0 %v544
    %5459 = vmatprep.subr.mxu0 %v553
    %5460 = vmatpush1.msra.mxu0 %v552
    %5461 = vmatprep.subr.mxu0 %v561
    %5462 = vmatpush1.msra.mxu0 %v560
    %5463 = vmatprep.subr.mxu0 %v569
    %5464 = vmatpush1.msra.mxu0 %v568
    %5465 = vmatprep.mubr.f32.mxu0 %v5398
    %5466 = vmatmul.mubr.f32.gmra.mrb[0].mxu0 %v5396
    %v5467 = vpop.f32.mrb[0].mxu0
    %v5468 = vadd.f32 %v1179, %v5467
    %v5469 = vpop.f32.mrb[0].mxu0
    %v5470 = vadd.f32 %v1183, %v5469
    %5471 = vdwg.mxu0
    %5472 = vmatprep.subr.mxu0 %v323
    %5473 = vmatpush1.msra.mxu0 %v322
    %5474 = vmatprep.subr.mxu0 %v331
    %5475 = vmatpush1.msra.mxu0 %v330
    %5476 = vmatprep.subr.mxu0 %v339
    %5477 = vmatpush1.msra.mxu0 %v338
    %5478 = vmatprep.subr.mxu0 %v347
    %5479 = vmatpush1.msra.mxu0 %v346
    %5480 = vmatprep.subr.mxu0 %v355
    %5481 = vmatpush1.msra.mxu0 %v354
    %5482 = vmatprep.subr.mxu0 %v363
    %5483 = vmatpush1.msra.mxu0 %v362
    %5484 = vmatprep.subr.mxu0 %v371
    %5485 = vmatpush1.msra.mxu0 %v370
    %5486 = vmatprep.subr.mxu0 %v379
    %5487 = vmatpush1.msra.mxu0 %v378
    %5488 = vmatprep.subr.mxu0 %v387
    %5489 = vmatpush1.msra.mxu0 %v386
    %5490 = vmatprep.subr.mxu0 %v395
    %5491 = vmatpush1.msra.mxu0 %v394
    %5492 = vmatprep.subr.mxu0 %v403
    %5493 = vmatpush1.msra.mxu0 %v402
    %5494 = vmatprep.subr.mxu0 %v411
    %5495 = vmatpush1.msra.mxu0 %v410
    %5496 = vmatprep.subr.mxu0 %v419
    %5497 = vmatpush1.msra.mxu0 %v418
    %5498 = vmatprep.subr.mxu0 %v427
    %5499 = vmatpush1.msra.mxu0 %v426
    %5500 = vmatprep.subr.mxu0 %v435
    %5501 = vmatpush1.msra.mxu0 %v434
    %5502 = vmatprep.subr.mxu0 %v443
    %5503 = vmatpush1.msra.mxu0 %v442
    %5504 = vmatprep.subr.mxu0 %v451
    %5505 = vmatpush1.msra.mxu0 %v450
    %5506 = vmatprep.subr.mxu0 %v459
    %5507 = vmatpush1.msra.mxu0 %v458
    %5508 = vmatprep.subr.mxu0 %v467
    %5509 = vmatpush1.msra.mxu0 %v466
    %5510 = vmatprep.subr.mxu0 %v475
    %5511 = vmatpush1.msra.mxu0 %v474
    %5512 = vmatprep.subr.mxu0 %v483
    %5513 = vmatpush1.msra.mxu0 %v482
    %5514 = vmatprep.subr.mxu0 %v491
    %5515 = vmatpush1.msra.mxu0 %v490
    %5516 = vmatprep.subr.mxu0 %v499
    %5517 = vmatpush1.msra.mxu0 %v498
    %5518 = vmatprep.subr.mxu0 %v507
    %5519 = vmatpush1.msra.mxu0 %v506
    %5520 = vmatprep.subr.mxu0 %v515
    %5521 = vmatpush1.msra.mxu0 %v514
    %5522 = vmatprep.subr.mxu0 %v523
    %5523 = vmatpush1.msra.mxu0 %v522
    %5524 = vmatprep.subr.mxu0 %v531
    %5525 = vmatpush1.msra.mxu0 %v530
    %5526 = vmatprep.subr.mxu0 %v539
    %5527 = vmatpush1.msra.mxu0 %v538
    %5528 = vmatprep.subr.mxu0 %v547
    %5529 = vmatpush1.msra.mxu0 %v546
    %5530 = vmatprep.subr.mxu0 %v555
    %5531 = vmatpush1.msra.mxu0 %v554
    %5532 = vmatprep.subr.mxu0 %v563
    %5533 = vmatpush1.msra.mxu0 %v562
    %5534 = vmatprep.subr.mxu0 %v571
    %5535 = vmatpush1.msra.mxu0 %v570
    %5536 = vmatprep.mubr.f32.mxu0 %v5398
    %5537 = vmatmul.mubr.f32.gmra.mrb[0].mxu0 %v5396
    %v5538 = vpop.f32.mrb[0].mxu0
    %v5539 = vadd.f32 %v1187, %v5538
    %v5540 = vpop.f32.mrb[0].mxu0
    %v5541 = vadd.f32 %v1191, %v5540
    %5542 = vdwg.mxu0
    %v5543 = vxor.u32 %v5468, 2147483648
    %v5544 = vmul.f32 %v5543, 1.442695
    %v5545 = vpow.pop %v5544
    %v5546 = vadd.f32 %v5545, 1.0
    %v5547 = vrcp.pop %v5546
    %v5548 = vmul.f32 1.0, %v5547
    %v5549 = vxor.u32 %v5470, 2147483648
    %v5550 = vmul.f32 %v5549, 1.442695
    %v5551 = vpow.pop %v5550
    %v5552 = vadd.f32 %v5551, 1.0
    %v5553 = vrcp.pop %v5552
    %v5554 = vmul.f32 1.0, %v5553
    %v5555 = vtanh.pop %v5539
    %v5556 = vxor.u32 %v5541, 2147483648
    %v5557 = vmul.f32 %v5556, 1.442695
    %v5558 = vpow.pop %v5557
    %v5559 = vadd.f32 %v5558, 1.0
    %v5560 = vrcp.pop %v5559
    %v5561 = vmul.f32 1.0, %v5560
    %v5562 = vmul.f32 %v5554, %v5367
    %v5563 = vmul.f32 %v5548, %v5555
    %v5564 = vadd.f32 %v5562, %v5563
    %v5565 = vtanh.pop %v5564
    %v5566 = vmul.f32 %v5561, %v5565
    %v5567 = vld [vmem:[%s5] sm:$0xff]
    %v5568 = vld [vmem:[%s5 + $0x8] sm:$0xff]
    %v5569 = vld [vmem:[%s5 + $0x10] sm:$0xff]
    %v5570 = vld [vmem:[%s5 + $0x18] sm:$0xff]
    %v5571 = vld [vmem:[%s5 + $0x20] sm:$0xff]
    %v5572 = vld [vmem:[%s5 + $0x28] sm:$0xff]
    %v5573 = vld [vmem:[%s5 + $0x30] sm:$0xff]
    %v5574 = vld [vmem:[%s5 + $0x38] sm:$0xff]
    %v5575 = vld [vmem:[%s5 + $0x40] sm:$0xff]
    %v5576 = vld [vmem:[%s5 + $0x48] sm:$0xff]
    %v5577 = vld [vmem:[%s5 + $0x50] sm:$0xff]
    %v5578 = vld [vmem:[%s5 + $0x58] sm:$0xff]
    %v5579 = vld [vmem:[%s5 + $0x60] sm:$0xff]
    %v5580 = vld [vmem:[%s5 + $0x68] sm:$0xff]
    %v5581 = vld [vmem:[%s5 + $0x70] sm:$0xff]
    %v5582 = vld [vmem:[%s5 + $0x78] sm:$0xff]
    %v5583 = vld [vmem:[%s6] sm:$0x1]
    %v5585 = vlaneseq
    %v5586 = vshrl.u32 %v5585, 7
    %v5587 = vsub.s32 0, %v5586
    %v5588 = vrot.slane %v5583, %v5587
    %5590 = vmatprep.subr.mxu0 0.0
    %5591 = vmatpush1.msra.mxu0 %v5567
    %5592 = vmatprep.subr.mxu0 0.0
    %5593 = vmatpush1.msra.mxu0 %v5568
    %5594 = vmatprep.subr.mxu0 0.0
    %5595 = vmatpush1.msra.mxu0 %v5569
    %5596 = vmatprep.subr.mxu0 0.0
    %5597 = vmatpush1.msra.mxu0 %v5570
    %5598 = vmatprep.subr.mxu0 0.0
    %5599 = vmatpush1.msra.mxu0 %v5571
    %5600 = vmatprep.subr.mxu0 0.0
    %5601 = vmatpush1.msra.mxu0 %v5572
    %5602 = vmatprep.subr.mxu0 0.0
    %5603 = vmatpush1.msra.mxu0 %v5573
    %5604 = vmatprep.subr.mxu0 0.0
    %5605 = vmatpush1.msra.mxu0 %v5574
    %5606 = vmatprep.subr.mxu0 0.0
    %5607 = vmatpush1.msra.mxu0 %v5575
    %5608 = vmatprep.subr.mxu0 0.0
    %5609 = vmatpush1.msra.mxu0 %v5576
    %5610 = vmatprep.subr.mxu0 0.0
    %5611 = vmatpush1.msra.mxu0 %v5577
    %5612 = vmatprep.subr.mxu0 0.0
    %5613 = vmatpush1.msra.mxu0 %v5578
    %5614 = vmatprep.subr.mxu0 0.0
    %5615 = vmatpush1.msra.mxu0 %v5579
    %5616 = vmatprep.subr.mxu0 0.0
    %5617 = vmatpush1.msra.mxu0 %v5580
    %5618 = vmatprep.subr.mxu0 0.0
    %5619 = vmatpush1.msra.mxu0 %v5581
    %5620 = vmatprep.subr.mxu0 0.0
    %5621 = vmatpush1.msra.mxu0 %v5582
    %5622 = vmatprep.subr.mxu0 0.0
    %5623 = vmatpush1.msra.mxu0 0.0
    %5624 = vmatprep.subr.mxu0 0.0
    %5625 = vmatpush1.msra.mxu0 0.0
    %5626 = vmatprep.subr.mxu0 0.0
    %5627 = vmatpush1.msra.mxu0 0.0
    %5628 = vmatprep.subr.mxu0 0.0
    %5629 = vmatpush1.msra.mxu0 0.0
    %5630 = vmatprep.subr.mxu0 0.0
    %5631 = vmatpush1.msra.mxu0 0.0
    %5632 = vmatprep.subr.mxu0 0.0
    %5633 = vmatpush1.msra.mxu0 0.0
    %5634 = vmatprep.subr.mxu0 0.0
    %5635 = vmatpush1.msra.mxu0 0.0
    %5636 = vmatprep.subr.mxu0 0.0
    %5637 = vmatpush1.msra.mxu0 0.0
    %5638 = vmatprep.subr.mxu0 0.0
    %5639 = vmatpush1.msra.mxu0 0.0
    %5640 = vmatprep.subr.mxu0 0.0
    %5641 = vmatpush1.msra.mxu0 0.0
    %5642 = vmatprep.subr.mxu0 0.0
    %5643 = vmatpush1.msra.mxu0 0.0
    %5644 = vmatprep.subr.mxu0 0.0
    %5645 = vmatpush1.msra.mxu0 0.0
    %5646 = vmatprep.subr.mxu0 0.0
    %5647 = vmatpush1.msra.mxu0 0.0
    %5648 = vmatprep.subr.mxu0 0.0
    %5649 = vmatpush1.msra.mxu0 0.0
    %5650 = vmatprep.subr.mxu0 0.0
    %5651 = vmatpush1.msra.mxu0 0.0
    %5652 = vmatprep.subr.mxu0 0.0
    %5653 = vmatpush1.msra.mxu0 0.0
    %5654 = vmatprep.mubr.f32.mxu0 0.0
    %5655 = vmatmul.mubr.f32.gmra.mrb[0].mxu0 %v5566
    %v5656 = vpop.f32.mrb[0].mxu0
    %v5657 = vadd.f32 %v5588, %v5656
    %v5658 = vpop.f32.mrb[0].mxu0
    %5659 = vdwg.mxu0
    %vm5660 = vcmask 261120
    %5661 = vst.msk [vmem:[#allocation2] sm:$0xff] %vm5660, %v5657
    // Predicated region
    $region30: #{lstm_forward.1} parent=1 // pred_check
      _
    $region31: #{lstm_forward.1} parent=1 // pred_check_branch
      %5663 = sbr.rel (0) target = $region33
    $region32: #{lstm_forward.1} parent=1 // pred_region
      %s5665 = ssub.s32 128, 128
      %5666 = vsyncadd [#allocation3], %s5665
      %s5668 = sshll.u32 [#allocation2], 4
      %s5669 = int_to_ptr.vmem [resolvable:$true] %s5668
      %5671 = dma.vmem_to_hbm [thread:$0]  %s5669, 128, %s7, [#allocation3]
    $region33: #{lstm_forward.1} parent=1 // pred_fallthru
      _
    // Predicated region
    $region34: #{lstm_forward.1} parent=1 // pred_check
      _
    $region35: #{lstm_forward.1} parent=1 // pred_check_branch
      %5673 = sbr.rel (0) target = $region37
    $region36: #{lstm_forward.1} parent=1 // pred_region
      %5674 = dma.done [#allocation3], 128
    $region37: #{lstm_forward.1} parent=1 // pred_fallthru
      _
    %5675 = vsyncpa [#allocation3], 1

</llo_original>
